<compile_context>
chip_gen: v7x
topology: tpu7x:2x2x1
jax: 0.10.0
libtpu: 0.0.40
codegen_flags: <defaults>
</compile_context>

<pallas_src>
import functools

import jax
import jax.numpy as jnp
from jax import lax
from jax.experimental import pallas as pl
from jax.experimental.pallas import tpu as pltpu


def _round_up(v, m):
    return (v + m - 1) // m * m


def _vmem_capacity_bytes():
    """Physical per-core VMEM (64 MiB v7x, 128 MiB v5e/v6e); safe fallback."""
    try:
        info = pltpu.get_tpu_info()
        cap = getattr(info, "vmem_capacity_bytes", None)
        if cap:
            return int(cap)
    except Exception:
        pass
    return 128 * 1024 * 1024


def make_resnet_block_kernel(H, W, Cout, groups, use_film, use_res_conv,
                             compute_dtype, gn_eps=1e-5):
    HW = H * W
    cg = Cout // groups
    inv_n = 1.0 / float(HW * cg)
    cdt = compute_dtype

    def kernel(x_ref, masks_ref, Mg_ref, w1_ref, w2_ref, pp_ref, *rest):
        idx = 0
        if use_film:
            film_ref = rest[idx]; idx += 1
        if use_res_conv:
            wr_ref = rest[idx]; idx += 1
        o_ref = rest[idx]
        xcat_ref = rest[idx + 1]

        x = x_ref[0]                 # (Cin_p, HW); bf16 on the perf path
        Mg = Mg_ref[...]             # (Cout, Cout) f32 group-indicator matrix

        def conv3x3(act, w_ref_, bias):
            """3x3 'same' conv of act (C, HW): rolls + masks for halos, 3
            accumulating per-dy MXU matmuls against the folded weights."""
            C = act.shape[0]
            act32 = act.astype(jnp.float32)           # rolls/selects stay f32
            acc = None
            for dyi, dy in enumerate((-1, 0, 1)):
                for dxi, dx in enumerate((-1, 0, 1)):
                    off = dy * W + dx
                    if off == 0:
                        slab = act32
                    else:
                        tap = (dy + 1) * 3 + (dx + 1)
                        # out[:, p] = act[:, p + off] (cyclic); wrapped lanes are
                        # killed by the precomputed halo-validity mask (select,
                        # not a bf16 multiply -> v5e-native).
                        slab = pltpu.roll(act32, shift=(-off) % HW, axis=1)
                        valid = masks_ref[tap:tap + 1, :] != 0.0
                        slab = jnp.where(valid, slab, 0.0)
                    xcat_ref[dxi * C:(dxi + 1) * C, :] = slab.astype(cdt)
                part = jnp.dot(w_ref_[:, dyi * 3 * C:(dyi + 1) * 3 * C],
                               xcat_ref[0:3 * C, :],
                               preferred_element_type=jnp.float32)
                acc = part if acc is None else acc + part
            return acc + bias                                  # (Cout, HW) f32

        def group_norm(a, gamma, beta):
            """One-pass GroupNorm; the two group-combines are fused into one
            tiny matmul.  var = E[x^2]-E[x]^2 (fine post-conv; use two-pass if
            reused at high dynamic range)."""
            s = jnp.sum(a, axis=1, keepdims=True)              # (Cout, 1)
            s2 = jnp.sum(a * a, axis=1, keepdims=True)         # (Cout, 1)
            stats = jnp.concatenate([s, s2], axis=1)           # (Cout, 2)
            gstats = jnp.dot(Mg, stats, preferred_element_type=jnp.float32)
            mean = gstats[:, 0:1] * inv_n
            var = gstats[:, 1:2] * inv_n - mean * mean
            return (a - mean) * lax.rsqrt(var + gn_eps) * gamma + beta

        # ---- block 1: WS-conv3x3 -> GroupNorm -> FiLM -> SiLU ----
        h = conv3x3(x, w1_ref, pp_ref[:, 0:1])
        h = group_norm(h, pp_ref[:, 1:2], pp_ref[:, 2:3])
        if use_film:
            film = film_ref[0]                                 # (Cout, 2)
            h = h * film[:, 0:1] + film[:, 1:2]                # (scale+1) pre-folded
        h = h * jax.nn.sigmoid(h)

        # ---- block 2: WS-conv3x3 -> GroupNorm -> SiLU ----
        h = conv3x3(h, w2_ref, pp_ref[:, 3:4])
        h = group_norm(h, pp_ref[:, 4:5], pp_ref[:, 5:6])
        h = h * jax.nn.sigmoid(h)

        # ---- residual: 1x1 conv or identity ----
        if use_res_conv:
            res = jnp.dot(wr_ref[...], x.astype(cdt),
                          preferred_element_type=jnp.float32) + pp_ref[:, 6:7]
        else:
            res = x
        o_ref[0] = (h + res).astype(o_ref.dtype)

    return kernel


@functools.partial(jax.jit, static_argnames=("groups", "compute_dtype"))
def resnet_block_forward(x, w1, b1, g1, be1, w2, b2, g2, be2,
                         wres=None, bres=None,
                         time_emb=None, w_mlp=None, b_mlp=None,
                         *, groups=8, compute_dtype=jnp.bfloat16):
    """ResnetBlock forward.  x: (N, Cin, H, W) float32 -> (N, Cout, H, W) f32."""
    N, Cin, H, W = x.shape
    Cout = w1.shape[0]
    HW = H * W
    if Cout % groups != 0:
        raise ValueError("dim_out must be divisible by groups")
    use_res_conv = wres is not None
    use_film = time_emb is not None
    if not use_res_conv and Cin != Cout:
        raise ValueError("identity residual requires dim == dim_out")
    cdt = jnp.dtype(compute_dtype)

    # Pad Cin to a sublane multiple (padded channels/weights are zero).
    Cin_p = _round_up(Cin, 8) if use_res_conv else Cin

    # ---- parameter prep (tiny, plain JAX): weight standardization + tap fold ----
    ws_eps = 1e-5   # x is f32 -> torch WeightStandardizedConv2d uses 1e-5

    def weight_standardize(w):
        mu = jnp.mean(w, axis=(1, 2, 3), keepdims=True)
        var = jnp.mean((w - mu) ** 2, axis=(1, 2, 3), keepdims=True)  # unbiased=False
        return (w - mu) * lax.rsqrt(var + ws_eps)

    def fold_taps(w_std, c_pad):
        co, ci = w_std.shape[0], w_std.shape[1]
        if c_pad != ci:
            w_std = jnp.pad(w_std, ((0, 0), (0, c_pad - ci), (0, 0), (0, 0)))
        # (Cout, C, 3, 3) -> (Cout, ky, kx, C) -> (Cout, 9*C); column = tap*C + c
        return jnp.transpose(w_std, (0, 2, 3, 1)).reshape(co, 9 * c_pad)

    w1m = fold_taps(weight_standardize(w1.astype(jnp.float32)), Cin_p).astype(cdt)
    w2m = fold_taps(weight_standardize(w2.astype(jnp.float32)), Cout).astype(cdt)

    # ---- packed per-channel params: [b1, g1, be1, b2, g2, be2, bres, 0] ----
    bres_v = bres.astype(jnp.float32) if use_res_conv else jnp.zeros((Cout,), jnp.float32)
    pp = jnp.stack([b1, g1, be1, b2, g2, be2, bres_v,
                    jnp.zeros((Cout,), jnp.float32)], axis=1).astype(jnp.float32)

    # ---- time-embedding MLP (SiLU -> Linear); FiLM packed as (scale+1, shift) ----
    if use_film:
        te = jax.nn.silu(time_emb.astype(jnp.float32))
        te = te @ w_mlp.astype(jnp.float32).T + b_mlp.astype(jnp.float32)
        film = jnp.stack([te[:, :Cout] + 1.0, te[:, Cout:]], axis=2)  # (N, Cout, 2)

    # ---- halo-validity masks: tap=(dy+1)*3+(dx+1) valid iff (h+dy, w+dx) in-bounds ----
    pos = jnp.arange(HW, dtype=jnp.int32)
    row, col = pos // W, pos % W
    mrows = []
    for dy in (-1, 0, 1):
        rv = (row + dy >= 0) & (row + dy <= H - 1)
        for dx in (-1, 0, 1):
            cv = (col + dx >= 0) & (col + dx <= W - 1)
            mrows.append((rv & cv).astype(jnp.float32))
    masks = jnp.stack(mrows, axis=0)                            # (9, HW) f32

    # ---- group-indicator matrix for the GroupNorm combine matmul ----
    cg = Cout // groups
    ch = jnp.arange(Cout, dtype=jnp.int32)
    Mg = (ch[:, None] // cg == ch[None, :] // cg).astype(jnp.float32)

    # ---- input layout: NCHW -> (N, C, H*W) free reshape; bf16 on the perf path ----
    x_dt = cdt if use_res_conv else jnp.float32   # identity residual stays f32
    x_flat = x.reshape(N, Cin, HW).astype(x_dt)
    if Cin_p != Cin:
        x_flat = jnp.pad(x_flat, ((0, 0), (0, Cin_p - Cin), (0, 0)))

    const2 = lambda n: (0, 0)
    inputs = [x_flat, masks, Mg, w1m, w2m, pp]
    in_specs = [
        pl.BlockSpec((1, Cin_p, HW), lambda n: (n, 0, 0)),
        pl.BlockSpec((9, HW), const2),
        pl.BlockSpec((Cout, Cout), const2),
        pl.BlockSpec((Cout, 9 * Cin_p), const2),
        pl.BlockSpec((Cout, 9 * Cout), const2),
        pl.BlockSpec((Cout, 8), const2),
    ]
    if use_film:
        inputs.append(film)
        in_specs.append(pl.BlockSpec((1, Cout, 2), lambda n: (n, 0, 0)))
    if use_res_conv:
        wr = wres.reshape(Cout, Cin)
        if Cin_p != Cin:
            wr = jnp.pad(wr, ((0, 0), (0, Cin_p - Cin)))
        inputs.append(wr.astype(cdt))
        in_specs.append(pl.BlockSpec((Cout, Cin_p), const2))

    # ---- VMEM scratch: per-dy folded-tap RHS, reused by both convs ----
    Cmax = max(Cin_p, Cout)
    itemsize = cdt.itemsize
    x_bytes = jnp.dtype(x_dt).itemsize
    scratch_shapes = [pltpu.VMEM((3 * Cmax, HW), cdt)]

    # ---- generation-aware scoped-VMEM budget (no artificial 32 MiB floor) ----
    est = (2 * Cin_p * HW * x_bytes                      # x blocks (double-buffered)
           + 2 * Cout * HW * 4                           # out blocks
           + 2 * 9 * HW * 4 + 2 * Cout * Cout * 4        # masks + Mg
           + 2 * Cout * (9 * Cin_p + 9 * Cout + Cin_p) * itemsize   # folded weights
           + 4 * Cout * 128 * 4                          # lane-padded pp/film blocks
           + 3 * Cmax * HW * itemsize                    # tap-staging scratch
           + 10 * Cmax * HW * 4)                         # live f32 temporaries
    cap = max(_vmem_capacity_bytes() - (16 << 20), 32 << 20)   # ~48 MiB v7x, ~112 MiB v5e/v6e
    vmem_limit = int(min(2 * est + (8 << 20), cap))

    kernel = make_resnet_block_kernel(H, W, Cout, groups, use_film,
                                      use_res_conv, cdt)

    out = pl.pallas_call(
        kernel,
        out_shape=jax.ShapeDtypeStruct((N, Cout, HW), jnp.float32),
        grid=(N,),            # NOTE: on v7x keep N a multiple of 2 (2 TCs/chip)
        in_specs=in_specs,
        out_specs=pl.BlockSpec((1, Cout, HW), lambda n: (n, 0, 0)),
        scratch_shapes=scratch_shapes,
        compiler_params=pltpu.CompilerParams(
            dimension_semantics=("parallel",),
            vmem_limit_bytes=vmem_limit),
    )(*inputs)

    return out.reshape(N, Cout, H, W)


def resnet_block_reference(x, w1, b1, g1, be1, w2, b2, g2, be2,
                           wres=None, bres=None,
                           time_emb=None, w_mlp=None, b_mlp=None, groups=8):
    """Pure-JAX reference mirroring the PyTorch ResnetBlock forward (NCHW)."""
    def ws_conv(inp, w, b):
        mu = jnp.mean(w, axis=(1, 2, 3), keepdims=True)
        var = jnp.mean((w - mu) ** 2, axis=(1, 2, 3), keepdims=True)
        wn = (w - mu) * lax.rsqrt(var + 1e-5)
        y = lax.conv_general_dilated(inp, wn, (1, 1), ((1, 1), (1, 1)),
                                     dimension_numbers=("NCHW", "OIHW", "NCHW"))
        return y + b[None, :, None, None]

    def group_norm(inp, gamma, beta):
        n, c, hh, ww = inp.shape
        g = inp.reshape(n, groups, c // groups, hh, ww)
        mean = jnp.mean(g, axis=(2, 3, 4), keepdims=True)
        var = jnp.mean((g - mean) ** 2, axis=(2, 3, 4), keepdims=True)
        out = ((g - mean) * lax.rsqrt(var + 1e-5)).reshape(n, c, hh, ww)
        return out * gamma[None, :, None, None] + beta[None, :, None, None]

    scale_shift = None
    if time_emb is not None:
        te = jax.nn.silu(time_emb) @ w_mlp.T + b_mlp
        cout = w1.shape[0]
        scale_shift = (te[:, :cout], te[:, cout:])

    h = ws_conv(x, w1, b1)
    h = group_norm(h, g1, be1)
    if scale_shift is not None:
        sc, sh = scale_shift
        h = h * (sc[:, :, None, None] + 1.0) + sh[:, :, None, None]
    h = h * jax.nn.sigmoid(h)

    h = ws_conv(h, w2, b2)
    h = group_norm(h, g2, be2)
    h = h * jax.nn.sigmoid(h)

    if wres is not None:
        res = lax.conv_general_dilated(x, wres, (1, 1), ((0, 0), (0, 0)),
                                       dimension_numbers=("NCHW", "OIHW", "NCHW"))
        res = res + bres[None, :, None, None]
    else:
        res = x
    return h + res


if __name__ == "__main__":
    # ResnetBlock(dim=4, dim_out=32, time_emb_dim=8, groups=8) at small shapes.
    N, Cin, H, W = 2, 4, 16, 16
    Cout, groups, time_dim = 32, 8, 8

    key = jax.random.PRNGKey(0)
    ks = jax.random.split(key, 14)
    x = jax.random.normal(ks[0], (N, Cin, H, W), jnp.float32)
    w1 = jax.random.normal(ks[1], (Cout, Cin, 3, 3), jnp.float32) * 0.2
    b1 = 0.1 * jax.random.normal(ks[2], (Cout,), jnp.float32)
    g1 = 1.0 + 0.1 * jax.random.normal(ks[3], (Cout,), jnp.float32)
    be1 = 0.1 * jax.random.normal(ks[4], (Cout,), jnp.float32)
    w2 = jax.random.normal(ks[5], (Cout, Cout, 3, 3), jnp.float32) * 0.1
    b2 = 0.1 * jax.random.normal(ks[6], (Cout,), jnp.float32)
    g2 = 1.0 + 0.1 * jax.random.normal(ks[7], (Cout,), jnp.float32)
    be2 = 0.1 * jax.random.normal(ks[8], (Cout,), jnp.float32)
    wres = jax.random.normal(ks[9], (Cout, Cin, 1, 1), jnp.float32) * 0.3
    bres = 0.1 * jax.random.normal(ks[10], (Cout,), jnp.float32)
    time_emb = jax.random.normal(ks[11], (N, time_dim), jnp.float32)
    w_mlp = jax.random.normal(ks[12], (2 * Cout, time_dim), jnp.float32) * 0.2
    b_mlp = 0.1 * jax.random.normal(ks[13], (2 * Cout,), jnp.float32)

    ref = resnet_block_reference(x, w1, b1, g1, be1, w2, b2, g2, be2,
                                 wres, bres, time_emb, w_mlp, b_mlp,
                                 groups=groups)

    # f32 validation path (tight tolerance; same kernel code path as bf16).
    out_f32 = jax.block_until_ready(
        resnet_block_forward(x, w1, b1, g1, be1, w2, b2, g2, be2,
                             wres, bres, time_emb, w_mlp, b_mlp,
                             groups=groups, compute_dtype=jnp.float32))
    assert out_f32.shape == (N, Cout, H, W)
    assert jnp.allclose(out_f32, ref, rtol=5e-3, atol=5e-3), (
        "f32 kernel mismatch: max err "
        f"{float(jnp.max(jnp.abs(out_f32 - ref)))}")

    # bf16 MXU path (performance path; looser tolerance per bf16 operands).
    out_bf16 = jax.block_until_ready(
        resnet_block_forward(x, w1, b1, g1, be1, w2, b2, g2, be2,
                             wres, bres, time_emb, w_mlp, b_mlp,
                             groups=groups, compute_dtype=jnp.bfloat16))
    assert jnp.allclose(out_bf16, ref, rtol=5e-2, atol=1e-1), (
        "bf16 kernel mismatch: max err "
        f"{float(jnp.max(jnp.abs(out_bf16 - ref)))}")

    # Identity-residual / no-time-embedding path (dim == dim_out).
    x_id = jax.random.normal(ks[0], (N, Cout, H, W), jnp.float32)
    ref_id = resnet_block_reference(x_id, w2, b2, g1, be1, w2, b2, g2, be2,
                                    groups=groups)
    out_id = jax.block_until_ready(
        resnet_block_forward(x_id, w2, b2, g1, be1, w2, b2, g2, be2,
                             groups=groups, compute_dtype=jnp.float32))
    assert jnp.allclose(out_id, ref_id, rtol=5e-3, atol=5e-3), (
        "identity-path mismatch: max err "
        f"{float(jnp.max(jnp.abs(out_id - ref_id)))}")

    print("KERNEL_OK")
</pallas_src>

<mosaic_0001>
module attributes {stable_mosaic.version = 11 : i64} {
  func.func @kernel(%arg0: i32, %arg1: memref<1x8x256xf32, #tpu.memory_space<vmem>>, %arg2: memref<9x256xf32, #tpu.memory_space<vmem>>, %arg3: memref<32x32xf32, #tpu.memory_space<vmem>>, %arg4: memref<32x72xf32, #tpu.memory_space<vmem>>, %arg5: memref<32x288xf32, #tpu.memory_space<vmem>>, %arg6: memref<32x8xf32, #tpu.memory_space<vmem>>, %arg7: memref<1x32x2xf32, #tpu.memory_space<vmem>>, %arg8: memref<32x8xf32, #tpu.memory_space<vmem>>, %arg9: memref<1x32x256xf32, #tpu.memory_space<vmem>>, %arg10: memref<96x256xf32, #tpu.memory_space<vmem>>) attributes {dimension_semantics = [#tpu.dimension_semantics<parallel>], iteration_bounds = array<i64: 2>, scalar_prefetch = 0 : i64, scratch_operands = 1 : i64, tpu.core_type = #tpu.core_type<tc>, window_params = [{transform_indices = @transform_0, window_bounds = array<i64: 1, 8, 256>}, {pipeline_mode = #tpu.pipeline_mode<synchronous>, transform_indices = @transform_1, window_bounds = array<i64: 9, 256>}, {pipeline_mode = #tpu.pipeline_mode<synchronous>, transform_indices = @transform_2, window_bounds = array<i64: 32, 32>}, {pipeline_mode = #tpu.pipeline_mode<synchronous>, transform_indices = @transform_3, window_bounds = array<i64: 32, 72>}, {pipeline_mode = #tpu.pipeline_mode<synchronous>, transform_indices = @transform_4, window_bounds = array<i64: 32, 288>}, {pipeline_mode = #tpu.pipeline_mode<synchronous>, transform_indices = @transform_5, window_bounds = array<i64: 32, 8>}, {transform_indices = @transform_6, window_bounds = array<i64: 1, 32, 2>}, {pipeline_mode = #tpu.pipeline_mode<synchronous>, transform_indices = @transform_7, window_bounds = array<i64: 32, 8>}, {transform_indices = @transform_8, window_bounds = array<i64: 1, 32, 256>}]} {
    %c0 = arith.constant 0 : index
    %c0_0 = arith.constant 0 : index
    %c0_1 = arith.constant 0 : index
    %0 = vector.load %arg1[%c0, %c0_0, %c0_1] : memref<1x8x256xf32, #tpu.memory_space<vmem>>, vector<1x8x256xf32>
    %1 = vector.shape_cast %0 : vector<1x8x256xf32> to vector<8x256xf32>
    %c0_2 = arith.constant 0 : index
    %c0_3 = arith.constant 0 : index
    %2 = vector.load %arg3[%c0_2, %c0_3] : memref<32x32xf32, #tpu.memory_space<vmem>>, vector<32x32xf32>
    %c0_4 = arith.constant 0 : index
    %c0_5 = arith.constant 0 : index
    %3 = vector.load %arg6[%c0_4, %c0_5] : memref<32x8xf32, #tpu.memory_space<vmem>>, vector<32x1xf32>
    %c17_i32 = arith.constant 17 : i32
    %4 = tpu.dynamic_rotate %1 by %c17_i32 dim 1 : vector<8x256xf32>, i32 -> vector<8x256xf32>
    %c0_6 = arith.constant 0 : index
    %c0_7 = arith.constant 0 : index
    %5 = vector.load %arg2[%c0_6, %c0_7] : memref<9x256xf32, #tpu.memory_space<vmem>>, vector<1x256xf32>
    %cst = arith.constant 0.000000e+00 : f32
    %6 = vector.broadcast %cst : f32 to vector<1x256xf32>
    %7 = arith.cmpf one, %5, %6 : vector<1x256xf32>
    %cst_8 = arith.constant 0.000000e+00 : f32
    %8 = vector.shape_cast %7 : vector<1x256xi1> to vector<1x256xi1>
    %9 = vector.broadcast %8 : vector<1x256xi1> to vector<8x256xi1>
    %10 = vector.broadcast %cst_8 : f32 to vector<8x256xf32>
    %11 = arith.select %9, %4, %10 : vector<8x256xi1>, vector<8x256xf32>
    %c0_9 = arith.constant 0 : index
    %c0_10 = arith.constant 0 : index
    %12 = vector.load %arg10[%c0_9, %c0_10] : memref<96x256xf32, #tpu.memory_space<vmem>>, vector<8x256xf32>
    tpu.vector_store %arg10[%c0_9, %c0_10], %11 {strides = array<i32>} : memref<96x256xf32, #tpu.memory_space<vmem>>, vector<8x256xf32>,
    %c16_i32 = arith.constant 16 : i32
    %13 = tpu.dynamic_rotate %1 by %c16_i32 dim 1 : vector<8x256xf32>, i32 -> vector<8x256xf32>
    %c1 = arith.constant 1 : index
    %c0_11 = arith.constant 0 : index
    %14 = vector.load %arg2[%c1, %c0_11] : memref<9x256xf32, #tpu.memory_space<vmem>>, vector<1x256xf32>
    %cst_12 = arith.constant 0.000000e+00 : f32
    %15 = vector.broadcast %cst_12 : f32 to vector<1x256xf32>
    %16 = arith.cmpf one, %14, %15 : vector<1x256xf32>
    %cst_13 = arith.constant 0.000000e+00 : f32
    %17 = vector.shape_cast %16 : vector<1x256xi1> to vector<1x256xi1>
    %18 = vector.broadcast %17 : vector<1x256xi1> to vector<8x256xi1>
    %19 = vector.broadcast %cst_13 : f32 to vector<8x256xf32>
    %20 = arith.select %18, %13, %19 : vector<8x256xi1>, vector<8x256xf32>
    %c8 = arith.constant 8 : index
    %c0_14 = arith.constant 0 : index
    %21 = vector.load %arg10[%c8, %c0_14] : memref<96x256xf32, #tpu.memory_space<vmem>>, vector<8x256xf32>
    tpu.vector_store %arg10[%c8, %c0_14], %20 {strides = array<i32>} : memref<96x256xf32, #tpu.memory_space<vmem>>, vector<8x256xf32>,
    %c15_i32 = arith.constant 15 : i32
    %22 = tpu.dynamic_rotate %1 by %c15_i32 dim 1 : vector<8x256xf32>, i32 -> vector<8x256xf32>
    %c2 = arith.constant 2 : index
    %c0_15 = arith.constant 0 : index
    %23 = vector.load %arg2[%c2, %c0_15] : memref<9x256xf32, #tpu.memory_space<vmem>>, vector<1x256xf32>
    %cst_16 = arith.constant 0.000000e+00 : f32
    %24 = vector.broadcast %cst_16 : f32 to vector<1x256xf32>
    %25 = arith.cmpf one, %23, %24 : vector<1x256xf32>
    %cst_17 = arith.constant 0.000000e+00 : f32
    %26 = vector.shape_cast %25 : vector<1x256xi1> to vector<1x256xi1>
    %27 = vector.broadcast %26 : vector<1x256xi1> to vector<8x256xi1>
    %28 = vector.broadcast %cst_17 : f32 to vector<8x256xf32>
    %29 = arith.select %27, %22, %28 : vector<8x256xi1>, vector<8x256xf32>
    %c16 = arith.constant 16 : index
    %c0_18 = arith.constant 0 : index
    %30 = vector.load %arg10[%c16, %c0_18] : memref<96x256xf32, #tpu.memory_space<vmem>>, vector<8x256xf32>
    tpu.vector_store %arg10[%c16, %c0_18], %29 {strides = array<i32>} : memref<96x256xf32, #tpu.memory_space<vmem>>, vector<8x256xf32>,
    %c0_19 = arith.constant 0 : index
    %c0_20 = arith.constant 0 : index
    %31 = vector.load %arg4[%c0_19, %c0_20] : memref<32x72xf32, #tpu.memory_space<vmem>>, vector<32x24xf32>
    %c0_21 = arith.constant 0 : index
    %c0_22 = arith.constant 0 : index
    %32 = vector.load %arg10[%c0_21, %c0_22] : memref<96x256xf32, #tpu.memory_space<vmem>>, vector<24x256xf32>
    %cst_23 = arith.constant dense<0.000000e+00> : vector<32x256xf32>
    %33 = tpu.matmul %31, %32, %cst_23 {dimension_numbers = #tpu.dot_dimension_numbers<[1], [0], [0], [1], [0, 0, 1, 1], [], []>} : vector<32x24xf32>, vector<24x256xf32>, vector<32x256xf32> -> vector<32x256xf32>
    %c1_i32 = arith.constant 1 : i32
    %34 = tpu.dynamic_rotate %1 by %c1_i32 dim 1 : vector<8x256xf32>, i32 -> vector<8x256xf32>
    %c3 = arith.constant 3 : index
    %c0_24 = arith.constant 0 : index
    %35 = vector.load %arg2[%c3, %c0_24] : memref<9x256xf32, #tpu.memory_space<vmem>>, vector<1x256xf32>
    %cst_25 = arith.constant 0.000000e+00 : f32
    %36 = vector.broadcast %cst_25 : f32 to vector<1x256xf32>
    %37 = arith.cmpf one, %35, %36 : vector<1x256xf32>
    %cst_26 = arith.constant 0.000000e+00 : f32
    %38 = vector.shape_cast %37 : vector<1x256xi1> to vector<1x256xi1>
    %39 = vector.broadcast %38 : vector<1x256xi1> to vector<8x256xi1>
    %40 = vector.broadcast %cst_26 : f32 to vector<8x256xf32>
    %41 = arith.select %39, %34, %40 : vector<8x256xi1>, vector<8x256xf32>
    %c0_27 = arith.constant 0 : index
    %c0_28 = arith.constant 0 : index
    %42 = vector.load %arg10[%c0_27, %c0_28] : memref<96x256xf32, #tpu.memory_space<vmem>>, vector<8x256xf32>
    tpu.vector_store %arg10[%c0_27, %c0_28], %41 {strides = array<i32>} : memref<96x256xf32, #tpu.memory_space<vmem>>, vector<8x256xf32>,
    %c8_29 = arith.constant 8 : index
    %c0_30 = arith.constant 0 : index
    %43 = vector.load %arg10[%c8_29, %c0_30] : memref<96x256xf32, #tpu.memory_space<vmem>>, vector<8x256xf32>
    tpu.vector_store %arg10[%c8_29, %c0_30], %1 {strides = array<i32>} : memref<96x256xf32, #tpu.memory_space<vmem>>, vector<8x256xf32>,
    %c255_i32 = arith.constant 255 : i32
    %44 = tpu.dynamic_rotate %1 by %c255_i32 dim 1 : vector<8x256xf32>, i32 -> vector<8x256xf32>
    %c5 = arith.constant 5 : index
    %c0_31 = arith.constant 0 : index
    %45 = vector.load %arg2[%c5, %c0_31] : memref<9x256xf32, #tpu.memory_space<vmem>>, vector<1x256xf32>
    %cst_32 = arith.constant 0.000000e+00 : f32
    %46 = vector.broadcast %cst_32 : f32 to vector<1x256xf32>
    %47 = arith.cmpf one, %45, %46 : vector<1x256xf32>
    %cst_33 = arith.constant 0.000000e+00 : f32
    %48 = vector.shape_cast %47 : vector<1x256xi1> to vector<1x256xi1>
    %49 = vector.broadcast %48 : vector<1x256xi1> to vector<8x256xi1>
    %50 = vector.broadcast %cst_33 : f32 to vector<8x256xf32>
    %51 = arith.select %49, %44, %50 : vector<8x256xi1>, vector<8x256xf32>
    %c16_34 = arith.constant 16 : index
    %c0_35 = arith.constant 0 : index
    %52 = vector.load %arg10[%c16_34, %c0_35] : memref<96x256xf32, #tpu.memory_space<vmem>>, vector<8x256xf32>
    tpu.vector_store %arg10[%c16_34, %c0_35], %51 {strides = array<i32>} : memref<96x256xf32, #tpu.memory_space<vmem>>, vector<8x256xf32>,
    %c0_36 = arith.constant 0 : index
    %c24 = arith.constant 24 : index
    %53 = vector.load %arg4[%c0_36, %c24] : memref<32x72xf32, #tpu.memory_space<vmem>>, vector<32x24xf32>
    %c0_37 = arith.constant 0 : index
    %c0_38 = arith.constant 0 : index
    %54 = vector.load %arg10[%c0_37, %c0_38] : memref<96x256xf32, #tpu.memory_space<vmem>>, vector<24x256xf32>
    %cst_39 = arith.constant dense<0.000000e+00> : vector<32x256xf32>
    %55 = tpu.matmul %53, %54, %cst_39 {dimension_numbers = #tpu.dot_dimension_numbers<[1], [0], [0], [1], [0, 0, 1, 1], [], []>} : vector<32x24xf32>, vector<24x256xf32>, vector<32x256xf32> -> vector<32x256xf32>
    %56 = arith.addf %33, %55 : vector<32x256xf32>
    %c241_i32 = arith.constant 241 : i32
    %57 = tpu.dynamic_rotate %1 by %c241_i32 dim 1 : vector<8x256xf32>, i32 -> vector<8x256xf32>
    %c6 = arith.constant 6 : index
    %c0_40 = arith.constant 0 : index
    %58 = vector.load %arg2[%c6, %c0_40] : memref<9x256xf32, #tpu.memory_space<vmem>>, vector<1x256xf32>
    %cst_41 = arith.constant 0.000000e+00 : f32
    %59 = vector.broadcast %cst_41 : f32 to vector<1x256xf32>
    %60 = arith.cmpf one, %58, %59 : vector<1x256xf32>
    %cst_42 = arith.constant 0.000000e+00 : f32
    %61 = vector.shape_cast %60 : vector<1x256xi1> to vector<1x256xi1>
    %62 = vector.broadcast %61 : vector<1x256xi1> to vector<8x256xi1>
    %63 = vector.broadcast %cst_42 : f32 to vector<8x256xf32>
    %64 = arith.select %62, %57, %63 : vector<8x256xi1>, vector<8x256xf32>
    %c0_43 = arith.constant 0 : index
    %c0_44 = arith.constant 0 : index
    %65 = vector.load %arg10[%c0_43, %c0_44] : memref<96x256xf32, #tpu.memory_space<vmem>>, vector<8x256xf32>
    tpu.vector_store %arg10[%c0_43, %c0_44], %64 {strides = array<i32>} : memref<96x256xf32, #tpu.memory_space<vmem>>, vector<8x256xf32>,
    %c240_i32 = arith.constant 240 : i32
    %66 = tpu.dynamic_rotate %1 by %c240_i32 dim 1 : vector<8x256xf32>, i32 -> vector<8x256xf32>
    %c7 = arith.constant 7 : index
    %c0_45 = arith.constant 0 : index
    %67 = vector.load %arg2[%c7, %c0_45] : memref<9x256xf32, #tpu.memory_space<vmem>>, vector<1x256xf32>
    %cst_46 = arith.constant 0.000000e+00 : f32
    %68 = vector.broadcast %cst_46 : f32 to vector<1x256xf32>
    %69 = arith.cmpf one, %67, %68 : vector<1x256xf32>
    %cst_47 = arith.constant 0.000000e+00 : f32
    %70 = vector.shape_cast %69 : vector<1x256xi1> to vector<1x256xi1>
    %71 = vector.broadcast %70 : vector<1x256xi1> to vector<8x256xi1>
    %72 = vector.broadcast %cst_47 : f32 to vector<8x256xf32>
    %73 = arith.select %71, %66, %72 : vector<8x256xi1>, vector<8x256xf32>
    %c8_48 = arith.constant 8 : index
    %c0_49 = arith.constant 0 : index
    %74 = vector.load %arg10[%c8_48, %c0_49] : memref<96x256xf32, #tpu.memory_space<vmem>>, vector<8x256xf32>
    tpu.vector_store %arg10[%c8_48, %c0_49], %73 {strides = array<i32>} : memref<96x256xf32, #tpu.memory_space<vmem>>, vector<8x256xf32>,
    %c239_i32 = arith.constant 239 : i32
    %75 = tpu.dynamic_rotate %1 by %c239_i32 dim 1 : vector<8x256xf32>, i32 -> vector<8x256xf32>
    %c8_50 = arith.constant 8 : index
    %c0_51 = arith.constant 0 : index
    %76 = vector.load %arg2[%c8_50, %c0_51] : memref<9x256xf32, #tpu.memory_space<vmem>>, vector<1x256xf32>
    %cst_52 = arith.constant 0.000000e+00 : f32
    %77 = vector.broadcast %cst_52 : f32 to vector<1x256xf32>
    %78 = arith.cmpf one, %76, %77 : vector<1x256xf32>
    %cst_53 = arith.constant 0.000000e+00 : f32
    %79 = vector.shape_cast %78 : vector<1x256xi1> to vector<1x256xi1>
    %80 = vector.broadcast %79 : vector<1x256xi1> to vector<8x256xi1>
    %81 = vector.broadcast %cst_53 : f32 to vector<8x256xf32>
    %82 = arith.select %80, %75, %81 : vector<8x256xi1>, vector<8x256xf32>
    %c16_54 = arith.constant 16 : index
    %c0_55 = arith.constant 0 : index
    %83 = vector.load %arg10[%c16_54, %c0_55] : memref<96x256xf32, #tpu.memory_space<vmem>>, vector<8x256xf32>
    tpu.vector_store %arg10[%c16_54, %c0_55], %82 {strides = array<i32>} : memref<96x256xf32, #tpu.memory_space<vmem>>, vector<8x256xf32>,
    %c0_56 = arith.constant 0 : index
    %c48 = arith.constant 48 : index
    %84 = vector.load %arg4[%c0_56, %c48] : memref<32x72xf32, #tpu.memory_space<vmem>>, vector<32x24xf32>
    %c0_57 = arith.constant 0 : index
    %c0_58 = arith.constant 0 : index
    %85 = vector.load %arg10[%c0_57, %c0_58] : memref<96x256xf32, #tpu.memory_space<vmem>>, vector<24x256xf32>
    %cst_59 = arith.constant dense<0.000000e+00> : vector<32x256xf32>
    %86 = tpu.matmul %84, %85, %cst_59 {dimension_numbers = #tpu.dot_dimension_numbers<[1], [0], [0], [1], [0, 0, 1, 1], [], []>} : vector<32x24xf32>, vector<24x256xf32>, vector<32x256xf32> -> vector<32x256xf32>
    %87 = arith.addf %56, %86 : vector<32x256xf32>
    %88 = vector.broadcast %3 : vector<32x1xf32> to vector<32x256xf32>
    %89 = arith.addf %87, %88 : vector<32x256xf32>
    %c0_60 = arith.constant 0 : index
    %c1_61 = arith.constant 1 : index
    %90 = vector.load %arg6[%c0_60, %c1_61] : memref<32x8xf32, #tpu.memory_space<vmem>>, vector<32x1xf32>
    %c0_62 = arith.constant 0 : index
    %c2_63 = arith.constant 2 : index
    %91 = vector.load %arg6[%c0_62, %c2_63] : memref<32x8xf32, #tpu.memory_space<vmem>>, vector<32x1xf32>
    %cst_64 = arith.constant dense<0.000000e+00> : vector<32xf32>
    %92 = vector.multi_reduction <add>, %89, %cst_64 [1] : vector<32x256xf32> to vector<32xf32>
    %93 = vector.shape_cast %92 : vector<32xf32> to vector<32x1xf32>
    %94 = arith.mulf %89, %89 : vector<32x256xf32>
    %cst_65 = arith.constant dense<0.000000e+00> : vector<32xf32>
    %95 = vector.multi_reduction <add>, %94, %cst_65 [1] : vector<32x256xf32> to vector<32xf32>
    %96 = vector.shape_cast %95 : vector<32xf32> to vector<32x1xf32>
    %97 = tpu.concatenate %93, %96 in 1 : vector<32x1xf32>, vector<32x1xf32> -> vector<32x2xf32>
    %cst_66 = arith.constant dense<0.000000e+00> : vector<32x2xf32>
    %98 = tpu.matmul %2, %97, %cst_66 {dimension_numbers = #tpu.dot_dimension_numbers<[1], [0], [0], [1], [0, 0, 1, 1], [], []>} : vector<32x32xf32>, vector<32x2xf32>, vector<32x2xf32> -> vector<32x2xf32>
    %99 = vector.extract_strided_slice %98 {offsets = [0, 0], sizes = [32, 1], strides = [1, 1]} : vector<32x2xf32> to vector<32x1xf32>
    %cst_67 = arith.constant 9.765625E-4 : f32
    %100 = vector.broadcast %cst_67 : f32 to vector<32x1xf32>
    %101 = arith.mulf %99, %100 : vector<32x1xf32>
    %102 = vector.extract_strided_slice %98 {offsets = [0, 1], sizes = [32, 1], strides = [1, 1]} : vector<32x2xf32> to vector<32x1xf32>
    %cst_68 = arith.constant 9.765625E-4 : f32
    %103 = vector.broadcast %cst_68 : f32 to vector<32x1xf32>
    %104 = arith.mulf %102, %103 : vector<32x1xf32>
    %105 = arith.mulf %101, %101 : vector<32x1xf32>
    %106 = arith.subf %104, %105 : vector<32x1xf32>
    %107 = vector.broadcast %101 : vector<32x1xf32> to vector<32x256xf32>
    %108 = arith.subf %89, %107 : vector<32x256xf32>
    %cst_69 = arith.constant 9.99999974E-6 : f32
    %109 = vector.broadcast %cst_69 : f32 to vector<32x1xf32>
    %110 = arith.addf %106, %109 : vector<32x1xf32>
    %111 = math.rsqrt %110 : vector<32x1xf32>
    %112 = vector.broadcast %111 : vector<32x1xf32> to vector<32x256xf32>
    %113 = arith.mulf %108, %112 : vector<32x256xf32>
    %114 = vector.broadcast %90 : vector<32x1xf32> to vector<32x256xf32>
    %115 = arith.mulf %113, %114 : vector<32x256xf32>
    %116 = vector.broadcast %91 : vector<32x1xf32> to vector<32x256xf32>
    %117 = arith.addf %115, %116 : vector<32x256xf32>
    %c0_70 = arith.constant 0 : index
    %c0_71 = arith.constant 0 : index
    %c0_72 = arith.constant 0 : index
    %118 = vector.load %arg7[%c0_70, %c0_71, %c0_72] : memref<1x32x2xf32, #tpu.memory_space<vmem>>, vector<1x32x2xf32>
    %119 = vector.shape_cast %118 : vector<1x32x2xf32> to vector<32x2xf32>
    %120 = vector.extract_strided_slice %119 {offsets = [0, 0], sizes = [32, 1], strides = [1, 1]} : vector<32x2xf32> to vector<32x1xf32>
    %121 = vector.broadcast %120 : vector<32x1xf32> to vector<32x256xf32>
    %122 = arith.mulf %117, %121 : vector<32x256xf32>
    %123 = vector.extract_strided_slice %119 {offsets = [0, 1], sizes = [32, 1], strides = [1, 1]} : vector<32x2xf32> to vector<32x1xf32>
    %124 = vector.broadcast %123 : vector<32x1xf32> to vector<32x256xf32>
    %125 = arith.addf %122, %124 : vector<32x256xf32>
    %126 = arith.negf %125 : vector<32x256xf32>
    %127 = math.exp %126 : vector<32x256xf32>
    %cst_73 = arith.constant 1.000000e+00 : f32
    %128 = vector.broadcast %cst_73 : f32 to vector<32x256xf32>
    %129 = arith.addf %128, %127 : vector<32x256xf32>
    %130 = arith.divf %128, %129 : vector<32x256xf32>
    %131 = arith.mulf %125, %130 : vector<32x256xf32>
    %c0_74 = arith.constant 0 : index
    %c3_75 = arith.constant 3 : index
    %132 = vector.load %arg6[%c0_74, %c3_75] : memref<32x8xf32, #tpu.memory_space<vmem>>, vector<32x1xf32>
    %c17_i32_76 = arith.constant 17 : i32
    %133 = tpu.dynamic_rotate %131 by %c17_i32_76 dim 1 : vector<32x256xf32>, i32 -> vector<32x256xf32>
    %c0_77 = arith.constant 0 : index
    %c0_78 = arith.constant 0 : index
    %134 = vector.load %arg2[%c0_77, %c0_78] : memref<9x256xf32, #tpu.memory_space<vmem>>, vector<1x256xf32>
    %cst_79 = arith.constant 0.000000e+00 : f32
    %135 = vector.broadcast %cst_79 : f32 to vector<1x256xf32>
    %136 = arith.cmpf one, %134, %135 : vector<1x256xf32>
    %cst_80 = arith.constant 0.000000e+00 : f32
    %137 = vector.shape_cast %136 : vector<1x256xi1> to vector<1x256xi1>
    %138 = vector.broadcast %137 : vector<1x256xi1> to vector<32x256xi1>
    %139 = vector.broadcast %cst_80 : f32 to vector<32x256xf32>
    %140 = arith.select %138, %133, %139 : vector<32x256xi1>, vector<32x256xf32>
    %c0_81 = arith.constant 0 : index
    %c0_82 = arith.constant 0 : index
    %141 = vector.load %arg10[%c0_81, %c0_82] : memref<96x256xf32, #tpu.memory_space<vmem>>, vector<32x256xf32>
    tpu.vector_store %arg10[%c0_81, %c0_82], %140 {strides = array<i32>} : memref<96x256xf32, #tpu.memory_space<vmem>>, vector<32x256xf32>,
    %c16_i32_83 = arith.constant 16 : i32
    %142 = tpu.dynamic_rotate %131 by %c16_i32_83 dim 1 : vector<32x256xf32>, i32 -> vector<32x256xf32>
    %c1_84 = arith.constant 1 : index
    %c0_85 = arith.constant 0 : index
    %143 = vector.load %arg2[%c1_84, %c0_85] : memref<9x256xf32, #tpu.memory_space<vmem>>, vector<1x256xf32>
    %cst_86 = arith.constant 0.000000e+00 : f32
    %144 = vector.broadcast %cst_86 : f32 to vector<1x256xf32>
    %145 = arith.cmpf one, %143, %144 : vector<1x256xf32>
    %cst_87 = arith.constant 0.000000e+00 : f32
    %146 = vector.shape_cast %145 : vector<1x256xi1> to vector<1x256xi1>
    %147 = vector.broadcast %146 : vector<1x256xi1> to vector<32x256xi1>
    %148 = vector.broadcast %cst_87 : f32 to vector<32x256xf32>
    %149 = arith.select %147, %142, %148 : vector<32x256xi1>, vector<32x256xf32>
    %c32 = arith.constant 32 : index
    %c0_88 = arith.constant 0 : index
    %150 = vector.load %arg10[%c32, %c0_88] : memref<96x256xf32, #tpu.memory_space<vmem>>, vector<32x256xf32>
    tpu.vector_store %arg10[%c32, %c0_88], %149 {strides = array<i32>} : memref<96x256xf32, #tpu.memory_space<vmem>>, vector<32x256xf32>,
    %c15_i32_89 = arith.constant 15 : i32
    %151 = tpu.dynamic_rotate %131 by %c15_i32_89 dim 1 : vector<32x256xf32>, i32 -> vector<32x256xf32>
    %c2_90 = arith.constant 2 : index
    %c0_91 = arith.constant 0 : index
    %152 = vector.load %arg2[%c2_90, %c0_91] : memref<9x256xf32, #tpu.memory_space<vmem>>, vector<1x256xf32>
    %cst_92 = arith.constant 0.000000e+00 : f32
    %153 = vector.broadcast %cst_92 : f32 to vector<1x256xf32>
    %154 = arith.cmpf one, %152, %153 : vector<1x256xf32>
    %cst_93 = arith.constant 0.000000e+00 : f32
    %155 = vector.shape_cast %154 : vector<1x256xi1> to vector<1x256xi1>
    %156 = vector.broadcast %155 : vector<1x256xi1> to vector<32x256xi1>
    %157 = vector.broadcast %cst_93 : f32 to vector<32x256xf32>
    %158 = arith.select %156, %151, %157 : vector<32x256xi1>, vector<32x256xf32>
    %c64 = arith.constant 64 : index
    %c0_94 = arith.constant 0 : index
    %159 = vector.load %arg10[%c64, %c0_94] : memref<96x256xf32, #tpu.memory_space<vmem>>, vector<32x256xf32>
    tpu.vector_store %arg10[%c64, %c0_94], %158 {strides = array<i32>} : memref<96x256xf32, #tpu.memory_space<vmem>>, vector<32x256xf32>,
    %c0_95 = arith.constant 0 : index
    %c0_96 = arith.constant 0 : index
    %160 = vector.load %arg5[%c0_95, %c0_96] : memref<32x288xf32, #tpu.memory_space<vmem>>, vector<32x96xf32>
    %c0_97 = arith.constant 0 : index
    %c0_98 = arith.constant 0 : index
    %161 = vector.load %arg10[%c0_97, %c0_98] : memref<96x256xf32, #tpu.memory_space<vmem>>, vector<96x256xf32>
    %cst_99 = arith.constant dense<0.000000e+00> : vector<32x256xf32>
    %162 = tpu.matmul %160, %161, %cst_99 {dimension_numbers = #tpu.dot_dimension_numbers<[1], [0], [0], [1], [0, 0, 1, 1], [], []>} : vector<32x96xf32>, vector<96x256xf32>, vector<32x256xf32> -> vector<32x256xf32>
    %c1_i32_100 = arith.constant 1 : i32
    %163 = tpu.dynamic_rotate %131 by %c1_i32_100 dim 1 : vector<32x256xf32>, i32 -> vector<32x256xf32>
    %c3_101 = arith.constant 3 : index
    %c0_102 = arith.constant 0 : index
    %164 = vector.load %arg2[%c3_101, %c0_102] : memref<9x256xf32, #tpu.memory_space<vmem>>, vector<1x256xf32>
    %cst_103 = arith.constant 0.000000e+00 : f32
    %165 = vector.broadcast %cst_103 : f32 to vector<1x256xf32>
    %166 = arith.cmpf one, %164, %165 : vector<1x256xf32>
    %cst_104 = arith.constant 0.000000e+00 : f32
    %167 = vector.shape_cast %166 : vector<1x256xi1> to vector<1x256xi1>
    %168 = vector.broadcast %167 : vector<1x256xi1> to vector<32x256xi1>
    %169 = vector.broadcast %cst_104 : f32 to vector<32x256xf32>
    %170 = arith.select %168, %163, %169 : vector<32x256xi1>, vector<32x256xf32>
    %c0_105 = arith.constant 0 : index
    %c0_106 = arith.constant 0 : index
    %171 = vector.load %arg10[%c0_105, %c0_106] : memref<96x256xf32, #tpu.memory_space<vmem>>, vector<32x256xf32>
    tpu.vector_store %arg10[%c0_105, %c0_106], %170 {strides = array<i32>} : memref<96x256xf32, #tpu.memory_space<vmem>>, vector<32x256xf32>,
    %c32_107 = arith.constant 32 : index
    %c0_108 = arith.constant 0 : index
    %172 = vector.load %arg10[%c32_107, %c0_108] : memref<96x256xf32, #tpu.memory_space<vmem>>, vector<32x256xf32>
    tpu.vector_store %arg10[%c32_107, %c0_108], %131 {strides = array<i32>} : memref<96x256xf32, #tpu.memory_space<vmem>>, vector<32x256xf32>,
    %c255_i32_109 = arith.constant 255 : i32
    %173 = tpu.dynamic_rotate %131 by %c255_i32_109 dim 1 : vector<32x256xf32>, i32 -> vector<32x256xf32>
    %c5_110 = arith.constant 5 : index
    %c0_111 = arith.constant 0 : index
    %174 = vector.load %arg2[%c5_110, %c0_111] : memref<9x256xf32, #tpu.memory_space<vmem>>, vector<1x256xf32>
    %cst_112 = arith.constant 0.000000e+00 : f32
    %175 = vector.broadcast %cst_112 : f32 to vector<1x256xf32>
    %176 = arith.cmpf one, %174, %175 : vector<1x256xf32>
    %cst_113 = arith.constant 0.000000e+00 : f32
    %177 = vector.shape_cast %176 : vector<1x256xi1> to vector<1x256xi1>
    %178 = vector.broadcast %177 : vector<1x256xi1> to vector<32x256xi1>
    %179 = vector.broadcast %cst_113 : f32 to vector<32x256xf32>
    %180 = arith.select %178, %173, %179 : vector<32x256xi1>, vector<32x256xf32>
    %c64_114 = arith.constant 64 : index
    %c0_115 = arith.constant 0 : index
    %181 = vector.load %arg10[%c64_114, %c0_115] : memref<96x256xf32, #tpu.memory_space<vmem>>, vector<32x256xf32>
    tpu.vector_store %arg10[%c64_114, %c0_115], %180 {strides = array<i32>} : memref<96x256xf32, #tpu.memory_space<vmem>>, vector<32x256xf32>,
    %c0_116 = arith.constant 0 : index
    %c96 = arith.constant 96 : index
    %182 = vector.load %arg5[%c0_116, %c96] : memref<32x288xf32, #tpu.memory_space<vmem>>, vector<32x96xf32>
    %c0_117 = arith.constant 0 : index
    %c0_118 = arith.constant 0 : index
    %183 = vector.load %arg10[%c0_117, %c0_118] : memref<96x256xf32, #tpu.memory_space<vmem>>, vector<96x256xf32>
    %cst_119 = arith.constant dense<0.000000e+00> : vector<32x256xf32>
    %184 = tpu.matmul %182, %183, %cst_119 {dimension_numbers = #tpu.dot_dimension_numbers<[1], [0], [0], [1], [0, 0, 1, 1], [], []>} : vector<32x96xf32>, vector<96x256xf32>, vector<32x256xf32> -> vector<32x256xf32>
    %185 = arith.addf %162, %184 : vector<32x256xf32>
    %c241_i32_120 = arith.constant 241 : i32
    %186 = tpu.dynamic_rotate %131 by %c241_i32_120 dim 1 : vector<32x256xf32>, i32 -> vector<32x256xf32>
    %c6_121 = arith.constant 6 : index
    %c0_122 = arith.constant 0 : index
    %187 = vector.load %arg2[%c6_121, %c0_122] : memref<9x256xf32, #tpu.memory_space<vmem>>, vector<1x256xf32>
    %cst_123 = arith.constant 0.000000e+00 : f32
    %188 = vector.broadcast %cst_123 : f32 to vector<1x256xf32>
    %189 = arith.cmpf one, %187, %188 : vector<1x256xf32>
    %cst_124 = arith.constant 0.000000e+00 : f32
    %190 = vector.shape_cast %189 : vector<1x256xi1> to vector<1x256xi1>
    %191 = vector.broadcast %190 : vector<1x256xi1> to vector<32x256xi1>
    %192 = vector.broadcast %cst_124 : f32 to vector<32x256xf32>
    %193 = arith.select %191, %186, %192 : vector<32x256xi1>, vector<32x256xf32>
    %c0_125 = arith.constant 0 : index
    %c0_126 = arith.constant 0 : index
    %194 = vector.load %arg10[%c0_125, %c0_126] : memref<96x256xf32, #tpu.memory_space<vmem>>, vector<32x256xf32>
    tpu.vector_store %arg10[%c0_125, %c0_126], %193 {strides = array<i32>} : memref<96x256xf32, #tpu.memory_space<vmem>>, vector<32x256xf32>,
    %c240_i32_127 = arith.constant 240 : i32
    %195 = tpu.dynamic_rotate %131 by %c240_i32_127 dim 1 : vector<32x256xf32>, i32 -> vector<32x256xf32>
    %c7_128 = arith.constant 7 : index
    %c0_129 = arith.constant 0 : index
    %196 = vector.load %arg2[%c7_128, %c0_129] : memref<9x256xf32, #tpu.memory_space<vmem>>, vector<1x256xf32>
    %cst_130 = arith.constant 0.000000e+00 : f32
    %197 = vector.broadcast %cst_130 : f32 to vector<1x256xf32>
    %198 = arith.cmpf one, %196, %197 : vector<1x256xf32>
    %cst_131 = arith.constant 0.000000e+00 : f32
    %199 = vector.shape_cast %198 : vector<1x256xi1> to vector<1x256xi1>
    %200 = vector.broadcast %199 : vector<1x256xi1> to vector<32x256xi1>
    %201 = vector.broadcast %cst_131 : f32 to vector<32x256xf32>
    %202 = arith.select %200, %195, %201 : vector<32x256xi1>, vector<32x256xf32>
    %c32_132 = arith.constant 32 : index
    %c0_133 = arith.constant 0 : index
    %203 = vector.load %arg10[%c32_132, %c0_133] : memref<96x256xf32, #tpu.memory_space<vmem>>, vector<32x256xf32>
    tpu.vector_store %arg10[%c32_132, %c0_133], %202 {strides = array<i32>} : memref<96x256xf32, #tpu.memory_space<vmem>>, vector<32x256xf32>,
    %c239_i32_134 = arith.constant 239 : i32
    %204 = tpu.dynamic_rotate %131 by %c239_i32_134 dim 1 : vector<32x256xf32>, i32 -> vector<32x256xf32>
    %c8_135 = arith.constant 8 : index
    %c0_136 = arith.constant 0 : index
    %205 = vector.load %arg2[%c8_135, %c0_136] : memref<9x256xf32, #tpu.memory_space<vmem>>, vector<1x256xf32>
    %cst_137 = arith.constant 0.000000e+00 : f32
    %206 = vector.broadcast %cst_137 : f32 to vector<1x256xf32>
    %207 = arith.cmpf one, %205, %206 : vector<1x256xf32>
    %cst_138 = arith.constant 0.000000e+00 : f32
    %208 = vector.shape_cast %207 : vector<1x256xi1> to vector<1x256xi1>
    %209 = vector.broadcast %208 : vector<1x256xi1> to vector<32x256xi1>
    %210 = vector.broadcast %cst_138 : f32 to vector<32x256xf32>
    %211 = arith.select %209, %204, %210 : vector<32x256xi1>, vector<32x256xf32>
    %c64_139 = arith.constant 64 : index
    %c0_140 = arith.constant 0 : index
    %212 = vector.load %arg10[%c64_139, %c0_140] : memref<96x256xf32, #tpu.memory_space<vmem>>, vector<32x256xf32>
    tpu.vector_store %arg10[%c64_139, %c0_140], %211 {strides = array<i32>} : memref<96x256xf32, #tpu.memory_space<vmem>>, vector<32x256xf32>,
    %c0_141 = arith.constant 0 : index
    %c192 = arith.constant 192 : index
    %213 = vector.load %arg5[%c0_141, %c192] : memref<32x288xf32, #tpu.memory_space<vmem>>, vector<32x96xf32>
    %c0_142 = arith.constant 0 : index
    %c0_143 = arith.constant 0 : index
    %214 = vector.load %arg10[%c0_142, %c0_143] : memref<96x256xf32, #tpu.memory_space<vmem>>, vector<96x256xf32>
    %cst_144 = arith.constant dense<0.000000e+00> : vector<32x256xf32>
    %215 = tpu.matmul %213, %214, %cst_144 {dimension_numbers = #tpu.dot_dimension_numbers<[1], [0], [0], [1], [0, 0, 1, 1], [], []>} : vector<32x96xf32>, vector<96x256xf32>, vector<32x256xf32> -> vector<32x256xf32>
    %216 = arith.addf %185, %215 : vector<32x256xf32>
    %217 = vector.broadcast %132 : vector<32x1xf32> to vector<32x256xf32>
    %218 = arith.addf %216, %217 : vector<32x256xf32>
    %c0_145 = arith.constant 0 : index
    %c4 = arith.constant 4 : index
    %219 = vector.load %arg6[%c0_145, %c4] : memref<32x8xf32, #tpu.memory_space<vmem>>, vector<32x1xf32>
    %c0_146 = arith.constant 0 : index
    %c5_147 = arith.constant 5 : index
    %220 = vector.load %arg6[%c0_146, %c5_147] : memref<32x8xf32, #tpu.memory_space<vmem>>, vector<32x1xf32>
    %cst_148 = arith.constant dense<0.000000e+00> : vector<32xf32>
    %221 = vector.multi_reduction <add>, %218, %cst_148 [1] : vector<32x256xf32> to vector<32xf32>
    %222 = vector.shape_cast %221 : vector<32xf32> to vector<32x1xf32>
    %223 = arith.mulf %218, %218 : vector<32x256xf32>
    %cst_149 = arith.constant dense<0.000000e+00> : vector<32xf32>
    %224 = vector.multi_reduction <add>, %223, %cst_149 [1] : vector<32x256xf32> to vector<32xf32>
    %225 = vector.shape_cast %224 : vector<32xf32> to vector<32x1xf32>
    %226 = tpu.concatenate %222, %225 in 1 : vector<32x1xf32>, vector<32x1xf32> -> vector<32x2xf32>
    %cst_150 = arith.constant dense<0.000000e+00> : vector<32x2xf32>
    %227 = tpu.matmul %2, %226, %cst_150 {dimension_numbers = #tpu.dot_dimension_numbers<[1], [0], [0], [1], [0, 0, 1, 1], [], []>} : vector<32x32xf32>, vector<32x2xf32>, vector<32x2xf32> -> vector<32x2xf32>
    %228 = vector.extract_strided_slice %227 {offsets = [0, 0], sizes = [32, 1], strides = [1, 1]} : vector<32x2xf32> to vector<32x1xf32>
    %cst_151 = arith.constant 9.765625E-4 : f32
    %229 = vector.broadcast %cst_151 : f32 to vector<32x1xf32>
    %230 = arith.mulf %228, %229 : vector<32x1xf32>
    %231 = vector.extract_strided_slice %227 {offsets = [0, 1], sizes = [32, 1], strides = [1, 1]} : vector<32x2xf32> to vector<32x1xf32>
    %cst_152 = arith.constant 9.765625E-4 : f32
    %232 = vector.broadcast %cst_152 : f32 to vector<32x1xf32>
    %233 = arith.mulf %231, %232 : vector<32x1xf32>
    %234 = arith.mulf %230, %230 : vector<32x1xf32>
    %235 = arith.subf %233, %234 : vector<32x1xf32>
    %236 = vector.broadcast %230 : vector<32x1xf32> to vector<32x256xf32>
    %237 = arith.subf %218, %236 : vector<32x256xf32>
    %cst_153 = arith.constant 9.99999974E-6 : f32
    %238 = vector.broadcast %cst_153 : f32 to vector<32x1xf32>
    %239 = arith.addf %235, %238 : vector<32x1xf32>
    %240 = math.rsqrt %239 : vector<32x1xf32>
    %241 = vector.broadcast %240 : vector<32x1xf32> to vector<32x256xf32>
    %242 = arith.mulf %237, %241 : vector<32x256xf32>
    %243 = vector.broadcast %219 : vector<32x1xf32> to vector<32x256xf32>
    %244 = arith.mulf %242, %243 : vector<32x256xf32>
    %245 = vector.broadcast %220 : vector<32x1xf32> to vector<32x256xf32>
    %246 = arith.addf %244, %245 : vector<32x256xf32>
    %247 = arith.negf %246 : vector<32x256xf32>
    %248 = math.exp %247 : vector<32x256xf32>
    %cst_154 = arith.constant 1.000000e+00 : f32
    %249 = vector.broadcast %cst_154 : f32 to vector<32x256xf32>
    %250 = arith.addf %249, %248 : vector<32x256xf32>
    %251 = arith.divf %249, %250 : vector<32x256xf32>
    %252 = arith.mulf %246, %251 : vector<32x256xf32>
    %c0_155 = arith.constant 0 : index
    %c0_156 = arith.constant 0 : index
    %253 = vector.load %arg8[%c0_155, %c0_156] : memref<32x8xf32, #tpu.memory_space<vmem>>, vector<32x8xf32>
    %cst_157 = arith.constant dense<0.000000e+00> : vector<32x256xf32>
    %254 = tpu.matmul %253, %1, %cst_157 {dimension_numbers = #tpu.dot_dimension_numbers<[1], [0], [0], [1], [0, 0, 1, 1], [], []>} : vector<32x8xf32>, vector<8x256xf32>, vector<32x256xf32> -> vector<32x256xf32>
    %c0_158 = arith.constant 0 : index
    %c6_159 = arith.constant 6 : index
    %255 = vector.load %arg6[%c0_158, %c6_159] : memref<32x8xf32, #tpu.memory_space<vmem>>, vector<32x1xf32>
    %256 = vector.broadcast %255 : vector<32x1xf32> to vector<32x256xf32>
    %257 = arith.addf %254, %256 : vector<32x256xf32>
    %258 = arith.addf %252, %257 : vector<32x256xf32>
    %c0_160 = arith.constant 0 : index
    %c0_161 = arith.constant 0 : index
    %c0_162 = arith.constant 0 : index
    %259 = vector.load %arg9[%c0_160, %c0_161, %c0_162] : memref<1x32x256xf32, #tpu.memory_space<vmem>>, vector<1x32x256xf32>
    %260 = vector.shape_cast %259 : vector<1x32x256xf32> to vector<32x256xf32>
    %261 = vector.shape_cast %258 : vector<32x256xf32> to vector<1x32x256xf32>
    tpu.vector_store %arg9[%c0_160, %c0_161, %c0_162], %261 {strides = array<i32>} : memref<1x32x256xf32, #tpu.memory_space<vmem>>, vector<1x32x256xf32>,
    return
  }
  func.func @transform_0(%arg0: i32) -> (i32, i32, i32) {
    %c0_i32 = arith.constant 0 : i32
    %c0_i32_0 = arith.constant 0 : i32
    %c0_i32_1 = arith.constant 0 : i32
    return %arg0, %c0_i32, %c0_i32_0 : i32, i32, i32
  }
  func.func @transform_1(%arg0: i32) -> (i32, i32) {
    %c0_i32 = arith.constant 0 : i32
    %c0_i32_0 = arith.constant 0 : i32
    %c0_i32_1 = arith.constant 0 : i32
    return %c0_i32, %c0_i32_0 : i32, i32
  }
  func.func @transform_2(%arg0: i32) -> (i32, i32) {
    %c0_i32 = arith.constant 0 : i32
    %c0_i32_0 = arith.constant 0 : i32
    %c0_i32_1 = arith.constant 0 : i32
    return %c0_i32, %c0_i32_0 : i32, i32
  }
  func.func @transform_3(%arg0: i32) -> (i32, i32) {
    %c0_i32 = arith.constant 0 : i32
    %c0_i32_0 = arith.constant 0 : i32
    %c0_i32_1 = arith.constant 0 : i32
    return %c0_i32, %c0_i32_0 : i32, i32
  }
  func.func @transform_4(%arg0: i32) -> (i32, i32) {
    %c0_i32 = arith.constant 0 : i32
    %c0_i32_0 = arith.constant 0 : i32
    %c0_i32_1 = arith.constant 0 : i32
    return %c0_i32, %c0_i32_0 : i32, i32
  }
  func.func @transform_5(%arg0: i32) -> (i32, i32) {
    %c0_i32 = arith.constant 0 : i32
    %c0_i32_0 = arith.constant 0 : i32
    %c0_i32_1 = arith.constant 0 : i32
    return %c0_i32, %c0_i32_0 : i32, i32
  }
  func.func @transform_6(%arg0: i32) -> (i32, i32, i32) {
    %c0_i32 = arith.constant 0 : i32
    %c0_i32_0 = arith.constant 0 : i32
    %c0_i32_1 = arith.constant 0 : i32
    return %arg0, %c0_i32, %c0_i32_0 : i32, i32, i32
  }
  func.func @transform_7(%arg0: i32) -> (i32, i32) {
    %c0_i32 = arith.constant 0 : i32
    %c0_i32_0 = arith.constant 0 : i32
    %c0_i32_1 = arith.constant 0 : i32
    return %c0_i32, %c0_i32_0 : i32, i32
  }
  func.func @transform_8(%arg0: i32) -> (i32, i32, i32) {
    %c0_i32 = arith.constant 0 : i32
    %c0_i32_0 = arith.constant 0 : i32
    %c0_i32_1 = arith.constant 0 : i32
    return %arg0, %c0_i32, %c0_i32_0 : i32, i32, i32
  }
}

</mosaic_0001>

<llo_original>
// kernel: resnet_block_forward.1
$region0: #{resnet_block_forward.1}
  #allocation0 [shape = 'u32[]', space=smem, size = 0x4, offset = 0x4, fixed_abs, tag = 'smem constant byte address 0x4 - core index']
  #allocation1 [shape = 'u32[144,128]{1,0:T(1,128)}', space=vmem, size = 0x12000, scoped, tag = 'internal scratch']
  #allocation2 [shape = 'f32[96,256]{1,0:T(8,128)}', space=vmem, size = 0x18000, scoped, tag = 'scratch operand']
  %s0 = inlined_call_operand.vmem [shape: f32[2,8,256], index: 0, kind: input, shape index: {}]
  %s1 = inlined_call_operand.vmem [shape: f32[9,256], index: 1, kind: input, shape index: {}]
  %s2 = inlined_call_operand.vmem [shape: f32[32,32], index: 2, kind: input, shape index: {}]
  %s3 = inlined_call_operand.vmem [shape: f32[32,72], index: 3, kind: input, shape index: {}]
  %s4 = inlined_call_operand.vmem [shape: f32[32,288], index: 4, kind: input, shape index: {}]
  %s5 = inlined_call_operand.vmem [shape: f32[32,8], index: 5, kind: input, shape index: {}]
  %s6 = inlined_call_operand.vmem [shape: f32[2,32,2], index: 6, kind: input, shape index: {}]
  %s7 = inlined_call_operand.vmem [shape: f32[32,8], index: 7, kind: input, shape index: {}]
  %s8 = inlined_call_operand.vmem [shape: f32[2,32,256], index: 8, kind: output, shape index: {}]
  %s9 = sld [smem:[#allocation0]]
  $region65: #{resnet_block_forward.1} parent=0
    _
  %s11 = ssub.s32 1, %s9
  %s12 = scalar_select 0, %s11, %s9
  loop: start=0, step=1, limit=4
  $region2: #{resnet_block_forward.1} parent=0 // loop_pre_header
    _
  $region3: #{resnet_block_forward.1} parent=0 // loop_header
    %s14 = sphi 0, %s18
    %p15 = scmp.ge.s32.totalorder %s14, 4
    %s24 = sphi 0, %s26
    %s27 = sphi 0, %s24
    %s28 = sphi 0, %s27
    %s44 = sphi 0, %s28
    %s48 = sphi 0, %s48
    %s50 = sphi 0, %s48
    %s51 = sphi 0, %s50
    %s65 = sphi 0, %s51
    %s69 = sphi 0, %s69
    %s71 = sphi 0, %s69
    %s72 = sphi 0, %s71
    %s86 = sphi 0, %s72
    %s90 = sphi 0, %s90
    %s92 = sphi 0, %s90
    %s93 = sphi 0, %s92
    %s107 = sphi 0, %s93
    %s111 = sphi 0, %s111
    %s113 = sphi 0, %s111
    %s114 = sphi 0, %s113
    %s128 = sphi 0, %s114
    %s132 = sphi 0, %s132
    %s134 = sphi 0, %s132
    %s135 = sphi 0, %s134
    %s149 = sphi 0, %s135
    %s155 = sphi 0, %s157
    %s158 = sphi 0, %s155
    %s159 = sphi 0, %s158
    %s175 = sphi 0, %s159
    %s179 = sphi 0, %s179
    %s181 = sphi 0, %s179
    %s182 = sphi 0, %s181
    %s196 = sphi 0, %s182
    %s202 = sphi 0, %s204
    %s205 = sphi 0, %s202
    %s206 = sphi 0, %s205
    %s222 = sphi 0, %s206
  $region4: #{resnet_block_forward.1} parent=0 // loop_header_branch
    %17 = sbr.rel (%p15) target = $region8
  $region5: #{resnet_block_forward.1} parent=0 // loop_body
    %s19 = ssub.s32 %s14, 1
    %s20 = ssub.s32 %s14, 2
    %s21 = sadd.s32 %s14, 1
    %s22 = ssub.s32 %s14, %s21
    %p23 = scmp.eq.s32.totalorder %s22, 0
    %s25 = sadd.s32 %s24, 1
    %s26 = scalar_select %p23, %s24, %s25
    %p29 = pneg %p23
    %p30 = scmp.eq.s32.totalorder %s14, 1
    %p31 = por %p29, %p30
    %p32 = scmp.ne.s32.totalorder %s24, %s27
    %p33 = scmp.eq.s32.totalorder %s14, 0
    %p34 = por %p32, %p33
    %p35 = scmp.ne.s32.totalorder %s24, %s27
    %p36 = scmp.eq.s32.totalorder %s19, 1
    %p37 = por %p35, %p36
    %p38 = scmp.ne.s32.totalorder %s27, %s28
    %p39 = scmp.eq.s32.totalorder %s19, 0
    %p40 = por %p38, %p39
    %p41 = scmp.ne.s32.totalorder %s27, %s28
    %p42 = scmp.eq.s32.totalorder %s20, 1
    %p43 = por %p41, %p42
    %p45 = scmp.ne.s32.totalorder %s28, %s44
    %p46 = scmp.eq.s32.totalorder %s20, 0
    %p47 = por %p45, %p46
    %s49 = sadd.s32 %s48, 1
    %p52 = scmp.eq.s32.totalorder %s14, 1
    %p53 = scmp.ne.s32.totalorder %s48, %s50
    %p54 = scmp.eq.s32.totalorder %s14, 0
    %p55 = por %p53, %p54
    %p56 = scmp.ne.s32.totalorder %s48, %s50
    %p57 = scmp.eq.s32.totalorder %s19, 1
    %p58 = por %p56, %p57
    %p59 = scmp.ne.s32.totalorder %s50, %s51
    %p60 = scmp.eq.s32.totalorder %s19, 0
    %p61 = por %p59, %p60
    %p62 = scmp.ne.s32.totalorder %s50, %s51
    %p63 = scmp.eq.s32.totalorder %s20, 1
    %p64 = por %p62, %p63
    %p66 = scmp.ne.s32.totalorder %s51, %s65
    %p67 = scmp.eq.s32.totalorder %s20, 0
    %p68 = por %p66, %p67
    %s70 = sadd.s32 %s69, 1
    %p73 = scmp.eq.s32.totalorder %s14, 1
    %p74 = scmp.ne.s32.totalorder %s69, %s71
    %p75 = scmp.eq.s32.totalorder %s14, 0
    %p76 = por %p74, %p75
    %p77 = scmp.ne.s32.totalorder %s69, %s71
    %p78 = scmp.eq.s32.totalorder %s19, 1
    %p79 = por %p77, %p78
    %p80 = scmp.ne.s32.totalorder %s71, %s72
    %p81 = scmp.eq.s32.totalorder %s19, 0
    %p82 = por %p80, %p81
    %p83 = scmp.ne.s32.totalorder %s71, %s72
    %p84 = scmp.eq.s32.totalorder %s20, 1
    %p85 = por %p83, %p84
    %p87 = scmp.ne.s32.totalorder %s72, %s86
    %p88 = scmp.eq.s32.totalorder %s20, 0
    %p89 = por %p87, %p88
    %s91 = sadd.s32 %s90, 1
    %p94 = scmp.eq.s32.totalorder %s14, 1
    %p95 = scmp.ne.s32.totalorder %s90, %s92
    %p96 = scmp.eq.s32.totalorder %s14, 0
    %p97 = por %p95, %p96
    %p98 = scmp.ne.s32.totalorder %s90, %s92
    %p99 = scmp.eq.s32.totalorder %s19, 1
    %p100 = por %p98, %p99
    %p101 = scmp.ne.s32.totalorder %s92, %s93
    %p102 = scmp.eq.s32.totalorder %s19, 0
    %p103 = por %p101, %p102
    %p104 = scmp.ne.s32.totalorder %s92, %s93
    %p105 = scmp.eq.s32.totalorder %s20, 1
    %p106 = por %p104, %p105
    %p108 = scmp.ne.s32.totalorder %s93, %s107
    %p109 = scmp.eq.s32.totalorder %s20, 0
    %p110 = por %p108, %p109
    %s112 = sadd.s32 %s111, 1
    %p115 = scmp.eq.s32.totalorder %s14, 1
    %p116 = scmp.ne.s32.totalorder %s111, %s113
    %p117 = scmp.eq.s32.totalorder %s14, 0
    %p118 = por %p116, %p117
    %p119 = scmp.ne.s32.totalorder %s111, %s113
    %p120 = scmp.eq.s32.totalorder %s19, 1
    %p121 = por %p119, %p120
    %p122 = scmp.ne.s32.totalorder %s113, %s114
    %p123 = scmp.eq.s32.totalorder %s19, 0
    %p124 = por %p122, %p123
    %p125 = scmp.ne.s32.totalorder %s113, %s114
    %p126 = scmp.eq.s32.totalorder %s20, 1
    %p127 = por %p125, %p126
    %p129 = scmp.ne.s32.totalorder %s114, %s128
    %p130 = scmp.eq.s32.totalorder %s20, 0
    %p131 = por %p129, %p130
    %s133 = sadd.s32 %s132, 1
    %p136 = scmp.eq.s32.totalorder %s14, 1
    %p137 = scmp.ne.s32.totalorder %s132, %s134
    %p138 = scmp.eq.s32.totalorder %s14, 0
    %p139 = por %p137, %p138
    %p140 = scmp.ne.s32.totalorder %s132, %s134
    %p141 = scmp.eq.s32.totalorder %s19, 1
    %p142 = por %p140, %p141
    %p143 = scmp.ne.s32.totalorder %s134, %s135
    %p144 = scmp.eq.s32.totalorder %s19, 0
    %p145 = por %p143, %p144
    %p146 = scmp.ne.s32.totalorder %s134, %s135
    %p147 = scmp.eq.s32.totalorder %s20, 1
    %p148 = por %p146, %p147
    %p150 = scmp.ne.s32.totalorder %s135, %s149
    %p151 = scmp.eq.s32.totalorder %s20, 0
    %p152 = por %p150, %p151
    %s153 = ssub.s32 %s14, %s21
    %p154 = scmp.eq.s32.totalorder %s153, 0
    %s156 = sadd.s32 %s155, 1
    %s157 = scalar_select %p154, %s155, %s156
    %p160 = pneg %p154
    %p161 = scmp.eq.s32.totalorder %s14, 1
    %p162 = por %p160, %p161
    %p163 = scmp.ne.s32.totalorder %s155, %s158
    %p164 = scmp.eq.s32.totalorder %s14, 0
    %p165 = por %p163, %p164
    %p166 = scmp.ne.s32.totalorder %s155, %s158
    %p167 = scmp.eq.s32.totalorder %s19, 1
    %p168 = por %p166, %p167
    %p169 = scmp.ne.s32.totalorder %s158, %s159
    %p170 = scmp.eq.s32.totalorder %s19, 0
    %p171 = por %p169, %p170
    %p172 = scmp.ne.s32.totalorder %s158, %s159
    %p173 = scmp.eq.s32.totalorder %s20, 1
    %p174 = por %p172, %p173
    %p176 = scmp.ne.s32.totalorder %s159, %s175
    %p177 = scmp.eq.s32.totalorder %s20, 0
    %p178 = por %p176, %p177
    %s180 = sadd.s32 %s179, 1
    %p183 = scmp.eq.s32.totalorder %s14, 1
    %p184 = scmp.ne.s32.totalorder %s179, %s181
    %p185 = scmp.eq.s32.totalorder %s14, 0
    %p186 = por %p184, %p185
    %p187 = scmp.ne.s32.totalorder %s179, %s181
    %p188 = scmp.eq.s32.totalorder %s19, 1
    %p189 = por %p187, %p188
    %p190 = scmp.ne.s32.totalorder %s181, %s182
    %p191 = scmp.eq.s32.totalorder %s19, 0
    %p192 = por %p190, %p191
    %p193 = scmp.ne.s32.totalorder %s181, %s182
    %p194 = scmp.eq.s32.totalorder %s20, 1
    %p195 = por %p193, %p194
    %p197 = scmp.ne.s32.totalorder %s182, %s196
    %p198 = scmp.eq.s32.totalorder %s20, 0
    %p199 = por %p197, %p198
    %s200 = ssub.s32 %s14, %s21
    %p201 = scmp.eq.s32.totalorder %s200, 0
    %s203 = sadd.s32 %s202, 1
    %s204 = scalar_select %p201, %s202, %s203
    %p207 = pneg %p201
    %p208 = scmp.eq.s32.totalorder %s14, 1
    %p209 = por %p207, %p208
    %p210 = scmp.ne.s32.totalorder %s202, %s205
    %p211 = scmp.eq.s32.totalorder %s14, 0
    %p212 = por %p210, %p211
    %p213 = scmp.ne.s32.totalorder %s202, %s205
    %p214 = scmp.eq.s32.totalorder %s19, 1
    %p215 = por %p213, %p214
    %p216 = scmp.ne.s32.totalorder %s205, %s206
    %p217 = scmp.eq.s32.totalorder %s19, 0
    %p218 = por %p216, %p217
    %p219 = scmp.ne.s32.totalorder %s205, %s206
    %p220 = scmp.eq.s32.totalorder %s20, 1
    %p221 = por %p219, %p220
    %p223 = scmp.ne.s32.totalorder %s206, %s222
    %p224 = scmp.eq.s32.totalorder %s20, 0
    %p225 = por %p223, %p224
    %p226 = scmp.le.s32.totalorder 1, %s14
    %p227 = scmp.lt.s32.totalorder %s14, 3
    %p228 = pnand %p226, %p227
    %p229 = pneg %p228
    // Predicated region
    $region9: #{resnet_block_forward.1} parent=5 // pred_check
      _
    $region10: #{resnet_block_forward.1} parent=5 // pred_check_branch
      %231 = sbr.rel (%p228) target = $region12
    $region11: #{resnet_block_forward.1} parent=5 // pred_region
      %s232 = ssub.s32 %s14, 1
      // Predicated region
      $region13: #{resnet_block_forward.1} parent=11 // pred_check
        %p233 = pneg %p61
      $region14: #{resnet_block_forward.1} parent=11 // pred_check_branch
        %235 = sbr.rel (%p233) target = $region16
      $region15: #{resnet_block_forward.1} parent=11 // pred_region
        _
      $region16: #{resnet_block_forward.1} parent=11 // pred_fallthru
        _
      // Predicated region
      $region17: #{resnet_block_forward.1} parent=11 // pred_check
        %p236 = pneg %p82
      $region18: #{resnet_block_forward.1} parent=11 // pred_check_branch
        %238 = sbr.rel (%p236) target = $region20
      $region19: #{resnet_block_forward.1} parent=11 // pred_region
        _
      $region20: #{resnet_block_forward.1} parent=11 // pred_fallthru
        _
      // Predicated region
      $region21: #{resnet_block_forward.1} parent=11 // pred_check
        %p239 = pneg %p103
      $region22: #{resnet_block_forward.1} parent=11 // pred_check_branch
        %241 = sbr.rel (%p239) target = $region24
      $region23: #{resnet_block_forward.1} parent=11 // pred_region
        _
      $region24: #{resnet_block_forward.1} parent=11 // pred_fallthru
        _
      // Predicated region
      $region25: #{resnet_block_forward.1} parent=11 // pred_check
        %p242 = pneg %p124
      $region26: #{resnet_block_forward.1} parent=11 // pred_check_branch
        %244 = sbr.rel (%p242) target = $region28
      $region27: #{resnet_block_forward.1} parent=11 // pred_region
        _
      $region28: #{resnet_block_forward.1} parent=11 // pred_fallthru
        _
      // Predicated region
      $region29: #{resnet_block_forward.1} parent=11 // pred_check
        %p245 = pneg %p145
      $region30: #{resnet_block_forward.1} parent=11 // pred_check_branch
        %247 = sbr.rel (%p245) target = $region32
      $region31: #{resnet_block_forward.1} parent=11 // pred_region
        _
      $region32: #{resnet_block_forward.1} parent=11 // pred_fallthru
        _
      // Predicated region
      $region33: #{resnet_block_forward.1} parent=11 // pred_check
        %p248 = pneg %p192
      $region34: #{resnet_block_forward.1} parent=11 // pred_check_branch
        %250 = sbr.rel (%p248) target = $region36
      $region35: #{resnet_block_forward.1} parent=11 // pred_region
        _
      $region36: #{resnet_block_forward.1} parent=11 // pred_fallthru
        _
    $region12: #{resnet_block_forward.1} parent=5 // pred_fallthru
      _
    %p251 = scmp.lt.s32.totalorder %s14, 2
    // Predicated region
    $region37: #{resnet_block_forward.1} parent=5 // pred_check
      %p252 = pneg %p251
    $region38: #{resnet_block_forward.1} parent=5 // pred_check_branch
      %254 = sbr.rel (%p252) target = $region40
    $region39: #{resnet_block_forward.1} parent=5 // pred_region
      // Predicated region
      $region41: #{resnet_block_forward.1} parent=39 // pred_check
        %p255 = pneg %p34
      $region42: #{resnet_block_forward.1} parent=39 // pred_check_branch
        %257 = sbr.rel (%p255) target = $region44
      $region43: #{resnet_block_forward.1} parent=39 // pred_region
        %p258 = scmp.lt.s32.totalorder %s14, 1
        %s259 = scalar_select %p258, %s14, 1
        %s260 = smul.addr %s259, 2
        %s261 = smul.addr %s260, 8
        %s262 = scalar_lea.vmem %s0, %s261
      $region44: #{resnet_block_forward.1} parent=39 // pred_fallthru
        _
      // Predicated region
      $region45: #{resnet_block_forward.1} parent=39 // pred_check
        %p263 = pneg %p165
      $region46: #{resnet_block_forward.1} parent=39 // pred_check_branch
        %265 = sbr.rel (%p263) target = $region48
      $region47: #{resnet_block_forward.1} parent=39 // pred_region
        %p266 = scmp.lt.s32.totalorder %s14, 1
        %s267 = scalar_select %p266, %s14, 1
        %s268 = smul.addr %s267, 4
        %s269 = smul.addr %s268, 8
        %s270 = scalar_lea.vmem %s6, %s269
      $region48: #{resnet_block_forward.1} parent=39 // pred_fallthru
        _
    $region40: #{resnet_block_forward.1} parent=5 // pred_fallthru
      _
    %p271 = scmp.le.s32.totalorder 1, %s14
    %p272 = scmp.lt.s32.totalorder %s14, 3
    %p273 = pnand %p271, %p272
    %p274 = pneg %p273
    // Predicated region
    $region49: #{resnet_block_forward.1} parent=5 // pred_check
      _
    $region50: #{resnet_block_forward.1} parent=5 // pred_check_branch
      %276 = sbr.rel (%p273) target = $region52
    $region51: #{resnet_block_forward.1} parent=5 // pred_region
      %s277 = ssub.s32 %s14, 1
      %p278 = scmp.lt.s32.totalorder %s19, 1
      %s279 = scalar_select %p278, %s19, 1
      %s280 = smul.addr %s279, 2
      %s281 = smul.addr %s280, 8
      %s282 = scalar_lea.vmem %s0, %s281
      %p283 = pneg %p40
      %p284 = pneg %p37
      %p285 = pneg %p61
      %p286 = pneg %p58
      %p287 = pneg %p82
      %p288 = pneg %p79
      %p289 = pneg %p103
      %p290 = pneg %p100
      %p291 = pneg %p124
      %p292 = pneg %p121
      %p293 = pneg %p145
      %p294 = pneg %p142
      %p295 = scmp.lt.s32.totalorder %s19, 1
      %s296 = scalar_select %p295, %s19, 1
      %s297 = smul.addr %s296, 4
      %s298 = smul.addr %s297, 8
      %s299 = scalar_lea.vmem %s6, %s298
      %p300 = pneg %p171
      %p301 = pneg %p168
      %p302 = pneg %p192
      %p303 = pneg %p189
      %p304 = pneg %p218
      %p305 = pneg %p215
      %p306 = scmp.lt.s32.totalorder %s19, 1
      %s307 = scalar_select %p306, %s19, 1
      %s308 = smul.addr %s307, 8
      %s309 = smul.addr %s308, 8
      %s310 = scalar_lea.vmem %s8, %s309
      %p311 = scmp.lt.s32.totalorder %s19, 1
      %s312 = scalar_select %p311, %s19, 1
      %s313 = smul.addr %s312, 2
      %s314 = smul.addr %s313, 8
      %s315 = scalar_lea.vmem %s0, %s314
      %p316 = scmp.lt.s32.totalorder %s19, 1
      %s317 = scalar_select %p316, %s19, 1
      %s318 = smul.addr %s317, 4
      %s319 = smul.addr %s318, 8
      %s320 = scalar_lea.vmem %s6, %s319
      %p321 = scmp.lt.s32.totalorder %s19, 1
      %s322 = scalar_select %p321, %s19, 1
      %s323 = smul.addr %s322, 8
      %s324 = smul.addr %s323, 8
      %s325 = scalar_lea.vmem %s8, %s324
      %v326 = vld [vmem:[%s315] sm:$0xff]
      %v327 = vld [vmem:[%s315 + $0x8] sm:$0xff]
      %v328 = vld [vmem:[%s2] sm:$0xff]
      %v329 = vld [vmem:[%s2 + $0x8] sm:$0xff]
      %v330 = vld [vmem:[%s2 + $0x10] sm:$0xff]
      %v331 = vld [vmem:[%s2 + $0x18] sm:$0xff]
      %v332 = vld [vmem:[%s5] sm:$0xff]
      %v333 = vld [vmem:[%s5 + $0x8] sm:$0xff]
      %v334 = vld [vmem:[%s5 + $0x10] sm:$0xff]
      %v335 = vld [vmem:[%s5 + $0x18] sm:$0xff]
      %336 = vrot.lane.b32.xlu0 %v326, 17
      %v337 = vpop.permute.xlu0 %336
      %338 = vrot.lane.b32.xlu0 %v327, 17
      %v339 = vpop.permute.xlu0 %338
      %v340 = vlaneseq
      %v341 = vand.u32 %v340, 127
      %vm342 = vcmp.lt.s32.totalorder %v341, 17
      %v343 = vsel %vm342, %v337, %v339
      %v344 = vsel %vm342, %v339, %v337
      %v345 = vld [vmem:[%s1] ss:$8 sm:$0x3]
      %vm346 = vcmp.ne.f32.partialorder %v345, 0.0
      %v347 = vsel %vm346, 1, 0
      %v348 = vlaneseq
      %v349 = vshrl.u32 %v348, 7
      %v350 = vsub.s32 0, %v349
      %v351 = vrot.slane %v347, %v350
      %v352 = vlaneseq
      %v353 = vshrl.u32 %v352, 7
      %v354 = vsub.s32 1, %v353
      %v355 = vrot.slane %v347, %v354
      %vm356 = vcmp.eq.s32.totalorder %v351, 1
      %vm357 = vcmp.eq.s32.totalorder %v355, 1
      %v358 = vsel %vm356, %v344, 0.0
      %v359 = vsel %vm357, %v343, 0.0
      %360 = vst [vmem:[#allocation2] sm:$0xff] %v358
      %361 = vst [vmem:[#allocation2 + $0x8] sm:$0xff] %v359
      %362 = vrot.lane.b32.xlu0 %v326, 16
      %v363 = vpop.permute.xlu0 %362
      %364 = vrot.lane.b32.xlu0 %v327, 16
      %v365 = vpop.permute.xlu0 %364
      %vm366 = vcmp.lt.s32.totalorder %v341, 16
      %v367 = vsel %vm366, %v363, %v365
      %v368 = vsel %vm366, %v365, %v363
      %s369 = scalar_lea.vmem %s1, 1
      %v370 = vld [vmem:[%s369] ss:$8 sm:$0x3]
      %vm371 = vcmp.ne.f32.partialorder %v370, 0.0
      %v372 = vsel %vm371, 1, 0
      %v373 = vlaneseq
      %v374 = vshrl.u32 %v373, 7
      %v375 = vsub.s32 0, %v374
      %v376 = vrot.slane %v372, %v375
      %v377 = vlaneseq
      %v378 = vshrl.u32 %v377, 7
      %v379 = vsub.s32 1, %v378
      %v380 = vrot.slane %v372, %v379
      %vm381 = vcmp.eq.s32.totalorder %v376, 1
      %vm382 = vcmp.eq.s32.totalorder %v380, 1
      %v383 = vsel %vm381, %v368, 0.0
      %v384 = vsel %vm382, %v367, 0.0
      %385 = vst [vmem:[#allocation2 + $0x10] sm:$0xff] %v383
      %386 = vst [vmem:[#allocation2 + $0x18] sm:$0xff] %v384
      %387 = vrot.lane.b32.xlu0 %v326, 15
      %v388 = vpop.permute.xlu0 %387
      %389 = vrot.lane.b32.xlu0 %v327, 15
      %v390 = vpop.permute.xlu0 %389
      %vm391 = vcmp.lt.s32.totalorder %v341, 15
      %v392 = vsel %vm391, %v388, %v390
      %v393 = vsel %vm391, %v390, %v388
      %s394 = scalar_lea.vmem %s1, 2
      %v395 = vld [vmem:[%s394] ss:$8 sm:$0x3]
      %vm396 = vcmp.ne.f32.partialorder %v395, 0.0
      %v397 = vsel %vm396, 1, 0
      %v398 = vlaneseq
      %v399 = vshrl.u32 %v398, 7
      %v400 = vsub.s32 0, %v399
      %v401 = vrot.slane %v397, %v400
      %v402 = vlaneseq
      %v403 = vshrl.u32 %v402, 7
      %v404 = vsub.s32 1, %v403
      %v405 = vrot.slane %v397, %v404
      %vm406 = vcmp.eq.s32.totalorder %v401, 1
      %vm407 = vcmp.eq.s32.totalorder %v405, 1
      %v408 = vsel %vm406, %v393, 0.0
      %v409 = vsel %vm407, %v392, 0.0
      %410 = vst [vmem:[#allocation2 + $0x20] sm:$0xff] %v408
      %411 = vst [vmem:[#allocation2 + $0x28] sm:$0xff] %v409
      %v412 = vld [vmem:[%s3] sm:$0xff]
      %v413 = vld [vmem:[%s3 + $0x8] sm:$0xff]
      %v414 = vld [vmem:[%s3 + $0x10] sm:$0xff]
      %v415 = vld [vmem:[%s3 + $0x18] sm:$0xff]
      %v416 = vld [vmem:[#allocation2] sm:$0xff]
      %v417 = vld [vmem:[#allocation2 + $0x8] sm:$0xff]
      %v418 = vld [vmem:[#allocation2 + $0x10] sm:$0xff]
      %v419 = vld [vmem:[#allocation2 + $0x18] sm:$0xff]
      %v420 = vld [vmem:[#allocation2 + $0x20] sm:$0xff]
      %v421 = vld [vmem:[#allocation2 + $0x28] sm:$0xff]
      %422 = vrot.lane.b32.xlu0 %v326, 1
      %v423 = vpop.permute.xlu0 %422
      %424 = vrot.lane.b32.xlu0 %v327, 1
      %v425 = vpop.permute.xlu0 %424
      %vm426 = vcmp.lt.s32.totalorder %v341, 1
      %v427 = vsel %vm426, %v423, %v425
      %v428 = vsel %vm426, %v425, %v423
      %s429 = scalar_lea.vmem %s1, 3
      %v430 = vld [vmem:[%s429] ss:$8 sm:$0x3]
      %vm431 = vcmp.ne.f32.partialorder %v430, 0.0
      %v432 = vsel %vm431, 1, 0
      %v433 = vlaneseq
      %v434 = vshrl.u32 %v433, 7
      %v435 = vsub.s32 0, %v434
      %v436 = vrot.slane %v432, %v435
      %v437 = vlaneseq
      %v438 = vshrl.u32 %v437, 7
      %v439 = vsub.s32 1, %v438
      %v440 = vrot.slane %v432, %v439
      %vm441 = vcmp.eq.s32.totalorder %v436, 1
      %vm442 = vcmp.eq.s32.totalorder %v440, 1
      %v443 = vsel %vm441, %v428, 0.0
      %v444 = vsel %vm442, %v427, 0.0
      %445 = vst [vmem:[#allocation2] sm:$0xff] %v443
      %446 = vst [vmem:[#allocation2 + $0x8] sm:$0xff] %v444
      %447 = vst [vmem:[#allocation2 + $0x10] sm:$0xff] %v326
      %448 = vst [vmem:[#allocation2 + $0x18] sm:$0xff] %v327
      %449 = vrot.lane.b32.xlu0 %v326, 127
      %v450 = vpop.permute.xlu0 %449
      %451 = vrot.lane.b32.xlu0 %v327, 127
      %v452 = vpop.permute.xlu0 %451
      %vm453 = vcmp.lt.s32.totalorder %v341, 127
      %v454 = vsel %vm453, %v450, %v452
      %v455 = vsel %vm453, %v452, %v450
      %s456 = scalar_lea.vmem %s1, 5
      %v457 = vld [vmem:[%s456] ss:$8 sm:$0x3]
      %vm458 = vcmp.ne.f32.partialorder %v457, 0.0
      %v459 = vsel %vm458, 1, 0
      %v460 = vlaneseq
      %v461 = vshrl.u32 %v460, 7
      %v462 = vsub.s32 0, %v461
      %v463 = vrot.slane %v459, %v462
      %v464 = vlaneseq
      %v465 = vshrl.u32 %v464, 7
      %v466 = vsub.s32 1, %v465
      %v467 = vrot.slane %v459, %v466
      %vm468 = vcmp.eq.s32.totalorder %v463, 1
      %vm469 = vcmp.eq.s32.totalorder %v467, 1
      %v470 = vsel %vm468, %v454, 0.0
      %v471 = vsel %vm469, %v455, 0.0
      %472 = vst [vmem:[#allocation2 + $0x20] sm:$0xff] %v470
      %473 = vst [vmem:[#allocation2 + $0x28] sm:$0xff] %v471
      %v474 = vld [vmem:[%s3] sm:$0xff]
      %v475 = vld [vmem:[%s3 + $0x8] sm:$0xff]
      %v476 = vld [vmem:[%s3 + $0x10] sm:$0xff]
      %v477 = vld [vmem:[%s3 + $0x18] sm:$0xff]
      %v478 = vld [vmem:[#allocation2] sm:$0xff]
      %v479 = vld [vmem:[#allocation2 + $0x8] sm:$0xff]
      %v480 = vld [vmem:[#allocation2 + $0x10] sm:$0xff]
      %v481 = vld [vmem:[#allocation2 + $0x18] sm:$0xff]
      %v482 = vld [vmem:[#allocation2 + $0x20] sm:$0xff]
      %v483 = vld [vmem:[#allocation2 + $0x28] sm:$0xff]
      %488 = vrot.lane.b32.xlu0 %v474, 104
      %v489 = vpop.permute.xlu0 %488
      %490 = vrot.lane.b32.xlu0 %v475, 104
      %v491 = vpop.permute.xlu0 %490
      %492 = vrot.lane.b32.xlu0 %v476, 104
      %v493 = vpop.permute.xlu0 %492
      %494 = vrot.lane.b32.xlu0 %v477, 104
      %v495 = vpop.permute.xlu0 %494
      %vm496 = vcmask 195584
      %v497 = vsel %vm496, %v489, 0
      %v499 = vsel %vm496, %v491, 0
      %v501 = vsel %vm496, %v493, 0
      %v503 = vsel %vm496, %v495, 0
      %505 = vmatprep.subr.mxu0 %v479
      %506 = vmatpush1.msra.mxu0 %v478
      %507 = vmatprep.subr.mxu0 %v481
      %508 = vmatpush1.msra.mxu0 %v480
      %509 = vmatprep.subr.mxu0 %v483
      %510 = vmatpush1.msra.mxu0 %v482
      %511 = vmatprep.subr.mxu0 0.0
      %512 = vmatpush1.msra.mxu0 0.0
      %513 = vmatprep.subr.mxu0 0.0
      %514 = vmatpush1.msra.mxu0 0.0
      %515 = vmatprep.subr.mxu0 0.0
      %516 = vmatpush1.msra.mxu0 0.0
      %517 = vmatprep.subr.mxu0 0.0
      %518 = vmatpush1.msra.mxu0 0.0
      %519 = vmatprep.subr.mxu0 0.0
      %520 = vmatpush1.msra.mxu0 0.0
      %521 = vmatprep.subr.mxu0 0.0
      %522 = vmatpush1.msra.mxu0 0.0
      %523 = vmatprep.subr.mxu0 0.0
      %524 = vmatpush1.msra.mxu0 0.0
      %525 = vmatprep.subr.mxu0 0.0
      %526 = vmatpush1.msra.mxu0 0.0
      %527 = vmatprep.subr.mxu0 0.0
      %528 = vmatpush1.msra.mxu0 0.0
      %529 = vmatprep.subr.mxu0 0.0
      %530 = vmatpush1.msra.mxu0 0.0
      %531 = vmatprep.subr.mxu0 0.0
      %532 = vmatpush1.msra.mxu0 0.0
      %533 = vmatprep.subr.mxu0 0.0
      %534 = vmatpush1.msra.mxu0 0.0
      %535 = vmatprep.subr.mxu0 0.0
      %536 = vmatpush1.msra.mxu0 0.0
      %537 = vmatprep.subr.mxu0 0.0
      %538 = vmatpush1.msra.mxu0 0.0
      %539 = vmatprep.subr.mxu0 0.0
      %540 = vmatpush1.msra.mxu0 0.0
      %541 = vmatprep.subr.mxu0 0.0
      %542 = vmatpush1.msra.mxu0 0.0
      %543 = vmatprep.subr.mxu0 0.0
      %544 = vmatpush1.msra.mxu0 0.0
      %545 = vmatprep.subr.mxu0 0.0
      %546 = vmatpush1.msra.mxu0 0.0
      %547 = vmatprep.subr.mxu0 0.0
      %548 = vmatpush1.msra.mxu0 0.0
      %549 = vmatprep.subr.mxu0 0.0
      %550 = vmatpush1.msra.mxu0 0.0
      %551 = vmatprep.subr.mxu0 0.0
      %552 = vmatpush1.msra.mxu0 0.0
      %553 = vmatprep.subr.mxu0 0.0
      %554 = vmatpush1.msra.mxu0 0.0
      %555 = vmatprep.subr.mxu0 0.0
      %556 = vmatpush1.msra.mxu0 0.0
      %557 = vmatprep.subr.mxu0 0.0
      %558 = vmatpush1.msra.mxu0 0.0
      %559 = vmatprep.subr.mxu0 0.0
      %560 = vmatpush1.msra.mxu0 0.0
      %561 = vmatprep.subr.mxu0 0.0
      %562 = vmatpush1.msra.mxu0 0.0
      %563 = vmatprep.subr.mxu0 0.0
      %564 = vmatpush1.msra.mxu0 0.0
      %565 = vmatprep.subr.mxu0 0.0
      %566 = vmatpush1.msra.mxu0 0.0
      %567 = vmatprep.subr.mxu0 0.0
      %568 = vmatpush1.msra.mxu0 0.0
      %569 = vmatprep.mubr.f32.mxu0 0.0
      %570 = vmatmul.mubr.f32.gmra.mrb[0].mxu0 %v497
      %v571 = vpop.f32.mrb[0].mxu0
      %v572 = vadd.f32 0.0, %v571
      %v573 = vpop.f32.mrb[0].mxu0
      %v574 = vadd.f32 0.0, %v573
      %575 = vmatprep.mubr.f32.mxu0 0.0
      %576 = vmatmul.mubr.f32.gmra.mrb[0].mxu0 %v499
      %v577 = vpop.f32.mrb[0].mxu0
      %v578 = vadd.f32 0.0, %v577
      %v579 = vpop.f32.mrb[0].mxu0
      %v580 = vadd.f32 0.0, %v579
      %581 = vmatprep.mubr.f32.mxu0 0.0
      %582 = vmatmul.mubr.f32.gmra.mrb[0].mxu0 %v501
      %v583 = vpop.f32.mrb[0].mxu0
      %v584 = vadd.f32 0.0, %v583
      %v585 = vpop.f32.mrb[0].mxu0
      %v586 = vadd.f32 0.0, %v585
      %587 = vmatprep.mubr.f32.mxu0 0.0
      %588 = vmatmul.mubr.f32.gmra.mrb[0].mxu0 %v503
      %v589 = vpop.f32.mrb[0].mxu0
      %v590 = vadd.f32 0.0, %v589
      %v591 = vpop.f32.mrb[0].mxu0
      %v592 = vadd.f32 0.0, %v591
      %593 = vdwg.mxu0
      %v595 = vsel %vm496, %v412, 0
      %v598 = vsel %vm496, %v413, 0
      %v601 = vsel %vm496, %v414, 0
      %v604 = vsel %vm496, %v415, 0
      %606 = vmatprep.subr.mxu0 %v417
      %607 = vmatpush1.msra.mxu0 %v416
      %608 = vmatprep.subr.mxu0 %v419
      %609 = vmatpush1.msra.mxu0 %v418
      %610 = vmatprep.subr.mxu0 %v421
      %611 = vmatpush1.msra.mxu0 %v420
      %612 = vmatprep.subr.mxu0 0.0
      %613 = vmatpush1.msra.mxu0 0.0
      %614 = vmatprep.subr.mxu0 0.0
      %615 = vmatpush1.msra.mxu0 0.0
      %616 = vmatprep.subr.mxu0 0.0
      %617 = vmatpush1.msra.mxu0 0.0
      %618 = vmatprep.subr.mxu0 0.0
      %619 = vmatpush1.msra.mxu0 0.0
      %620 = vmatprep.subr.mxu0 0.0
      %621 = vmatpush1.msra.mxu0 0.0
      %622 = vmatprep.subr.mxu0 0.0
      %623 = vmatpush1.msra.mxu0 0.0
      %624 = vmatprep.subr.mxu0 0.0
      %625 = vmatpush1.msra.mxu0 0.0
      %626 = vmatprep.subr.mxu0 0.0
      %627 = vmatpush1.msra.mxu0 0.0
      %628 = vmatprep.subr.mxu0 0.0
      %629 = vmatpush1.msra.mxu0 0.0
      %630 = vmatprep.subr.mxu0 0.0
      %631 = vmatpush1.msra.mxu0 0.0
      %632 = vmatprep.subr.mxu0 0.0
      %633 = vmatpush1.msra.mxu0 0.0
      %634 = vmatprep.subr.mxu0 0.0
      %635 = vmatpush1.msra.mxu0 0.0
      %636 = vmatprep.subr.mxu0 0.0
      %637 = vmatpush1.msra.mxu0 0.0
      %638 = vmatprep.subr.mxu0 0.0
      %639 = vmatpush1.msra.mxu0 0.0
      %640 = vmatprep.subr.mxu0 0.0
      %641 = vmatpush1.msra.mxu0 0.0
      %642 = vmatprep.subr.mxu0 0.0
      %643 = vmatpush1.msra.mxu0 0.0
      %644 = vmatprep.subr.mxu0 0.0
      %645 = vmatpush1.msra.mxu0 0.0
      %646 = vmatprep.subr.mxu0 0.0
      %647 = vmatpush1.msra.mxu0 0.0
      %648 = vmatprep.subr.mxu0 0.0
      %649 = vmatpush1.msra.mxu0 0.0
      %650 = vmatprep.subr.mxu0 0.0
      %651 = vmatpush1.msra.mxu0 0.0
      %652 = vmatprep.subr.mxu0 0.0
      %653 = vmatpush1.msra.mxu0 0.0
      %654 = vmatprep.subr.mxu0 0.0
      %655 = vmatpush1.msra.mxu0 0.0
      %656 = vmatprep.subr.mxu0 0.0
      %657 = vmatpush1.msra.mxu0 0.0
      %658 = vmatprep.subr.mxu0 0.0
      %659 = vmatpush1.msra.mxu0 0.0
      %660 = vmatprep.subr.mxu0 0.0
      %661 = vmatpush1.msra.mxu0 0.0
      %662 = vmatprep.subr.mxu0 0.0
      %663 = vmatpush1.msra.mxu0 0.0
      %664 = vmatprep.subr.mxu0 0.0
      %665 = vmatpush1.msra.mxu0 0.0
      %666 = vmatprep.subr.mxu0 0.0
      %667 = vmatpush1.msra.mxu0 0.0
      %668 = vmatprep.subr.mxu0 0.0
      %669 = vmatpush1.msra.mxu0 0.0
      %670 = vmatprep.mubr.f32.mxu0 0.0
      %671 = vmatmul.mubr.f32.gmra.mrb[0].mxu0 %v595
      %v672 = vpop.f32.mrb[0].mxu0
      %v673 = vadd.f32 %v572, %v672
      %v674 = vpop.f32.mrb[0].mxu0
      %v675 = vadd.f32 %v574, %v674
      %676 = vmatprep.mubr.f32.mxu0 0.0
      %677 = vmatmul.mubr.f32.gmra.mrb[0].mxu0 %v598
      %v678 = vpop.f32.mrb[0].mxu0
      %v679 = vadd.f32 %v578, %v678
      %v680 = vpop.f32.mrb[0].mxu0
      %v681 = vadd.f32 %v580, %v680
      %682 = vmatprep.mubr.f32.mxu0 0.0
      %683 = vmatmul.mubr.f32.gmra.mrb[0].mxu0 %v601
      %v684 = vpop.f32.mrb[0].mxu0
      %v685 = vadd.f32 %v584, %v684
      %v686 = vpop.f32.mrb[0].mxu0
      %v687 = vadd.f32 %v586, %v686
      %688 = vmatprep.mubr.f32.mxu0 0.0
      %689 = vmatmul.mubr.f32.gmra.mrb[0].mxu0 %v604
      %v690 = vpop.f32.mrb[0].mxu0
      %v691 = vadd.f32 %v590, %v690
      %v692 = vpop.f32.mrb[0].mxu0
      %v693 = vadd.f32 %v592, %v692
      %694 = vdwg.mxu0
      %695 = vrot.lane.b32.xlu0 %v326, 113
      %v696 = vpop.permute.xlu0 %695
      %697 = vrot.lane.b32.xlu0 %v327, 113
      %v698 = vpop.permute.xlu0 %697
      %vm699 = vcmp.lt.s32.totalorder %v341, 113
      %v700 = vsel %vm699, %v696, %v698
      %v701 = vsel %vm699, %v698, %v696
      %s702 = scalar_lea.vmem %s1, 6
      %v703 = vld [vmem:[%s702] ss:$8 sm:$0x3]
      %vm704 = vcmp.ne.f32.partialorder %v703, 0.0
      %v705 = vsel %vm704, 1, 0
      %v706 = vlaneseq
      %v707 = vshrl.u32 %v706, 7
      %v708 = vsub.s32 0, %v707
      %v709 = vrot.slane %v705, %v708
      %v710 = vlaneseq
      %v711 = vshrl.u32 %v710, 7
      %v712 = vsub.s32 1, %v711
      %v713 = vrot.slane %v705, %v712
      %vm714 = vcmp.eq.s32.totalorder %v709, 1
      %vm715 = vcmp.eq.s32.totalorder %v713, 1
      %v716 = vsel %vm714, %v700, 0.0
      %v717 = vsel %vm715, %v701, 0.0
      %718 = vst [vmem:[#allocation2] sm:$0xff] %v716
      %719 = vst [vmem:[#allocation2 + $0x8] sm:$0xff] %v717
      %720 = vrot.lane.b32.xlu0 %v326, 112
      %v721 = vpop.permute.xlu0 %720
      %722 = vrot.lane.b32.xlu0 %v327, 112
      %v723 = vpop.permute.xlu0 %722
      %vm724 = vcmp.lt.s32.totalorder %v341, 112
      %v725 = vsel %vm724, %v721, %v723
      %v726 = vsel %vm724, %v723, %v721
      %s727 = scalar_lea.vmem %s1, 7
      %v728 = vld [vmem:[%s727] ss:$8 sm:$0x3]
      %vm729 = vcmp.ne.f32.partialorder %v728, 0.0
      %v730 = vsel %vm729, 1, 0
      %v731 = vlaneseq
      %v732 = vshrl.u32 %v731, 7
      %v733 = vsub.s32 0, %v732
      %v734 = vrot.slane %v730, %v733
      %v735 = vlaneseq
      %v736 = vshrl.u32 %v735, 7
      %v737 = vsub.s32 1, %v736
      %v738 = vrot.slane %v730, %v737
      %vm739 = vcmp.eq.s32.totalorder %v734, 1
      %vm740 = vcmp.eq.s32.totalorder %v738, 1
      %v741 = vsel %vm739, %v725, 0.0
      %v742 = vsel %vm740, %v726, 0.0
      %743 = vst [vmem:[#allocation2 + $0x10] sm:$0xff] %v741
      %744 = vst [vmem:[#allocation2 + $0x18] sm:$0xff] %v742
      %745 = vrot.lane.b32.xlu0 %v326, 111
      %v746 = vpop.permute.xlu0 %745
      %747 = vrot.lane.b32.xlu0 %v327, 111
      %v748 = vpop.permute.xlu0 %747
      %vm749 = vcmp.lt.s32.totalorder %v341, 111
      %v750 = vsel %vm749, %v746, %v748
      %v751 = vsel %vm749, %v748, %v746
      %s752 = scalar_lea.vmem %s1, 16
      %v753 = vld [vmem:[%s752] ss:$8 sm:$0x3]
      %vm754 = vcmp.ne.f32.partialorder %v753, 0.0
      %v755 = vsel %vm754, 1, 0
      %v756 = vlaneseq
      %v757 = vshrl.u32 %v756, 7
      %v758 = vsub.s32 0, %v757
      %v759 = vrot.slane %v755, %v758
      %v760 = vlaneseq
      %v761 = vshrl.u32 %v760, 7
      %v762 = vsub.s32 1, %v761
      %v763 = vrot.slane %v755, %v762
      %vm764 = vcmp.eq.s32.totalorder %v759, 1
      %vm765 = vcmp.eq.s32.totalorder %v763, 1
      %v766 = vsel %vm764, %v750, 0.0
      %v767 = vsel %vm765, %v751, 0.0
      %768 = vst [vmem:[#allocation2 + $0x20] sm:$0xff] %v766
      %769 = vst [vmem:[#allocation2 + $0x28] sm:$0xff] %v767
      %v770 = vld [vmem:[%s3] sm:$0xff]
      %v771 = vld [vmem:[%s3 + $0x8] sm:$0xff]
      %v772 = vld [vmem:[%s3 + $0x10] sm:$0xff]
      %v773 = vld [vmem:[%s3 + $0x18] sm:$0xff]
      %v774 = vld [vmem:[#allocation2] sm:$0xff]
      %v775 = vld [vmem:[#allocation2 + $0x8] sm:$0xff]
      %v776 = vld [vmem:[#allocation2 + $0x10] sm:$0xff]
      %v777 = vld [vmem:[#allocation2 + $0x18] sm:$0xff]
      %v778 = vld [vmem:[#allocation2 + $0x20] sm:$0xff]
      %v779 = vld [vmem:[#allocation2 + $0x28] sm:$0xff]
      %784 = vrot.lane.b32.xlu0 %v770, 80
      %v785 = vpop.permute.xlu0 %784
      %786 = vrot.lane.b32.xlu0 %v771, 80
      %v787 = vpop.permute.xlu0 %786
      %788 = vrot.lane.b32.xlu0 %v772, 80
      %v789 = vpop.permute.xlu0 %788
      %790 = vrot.lane.b32.xlu0 %v773, 80
      %v791 = vpop.permute.xlu0 %790
      %v792 = vsel %vm496, %v785, 0
      %v794 = vsel %vm496, %v787, 0
      %v796 = vsel %vm496, %v789, 0
      %v798 = vsel %vm496, %v791, 0
      %800 = vmatprep.subr.mxu0 %v775
      %801 = vmatpush1.msra.mxu0 %v774
      %802 = vmatprep.subr.mxu0 %v777
      %803 = vmatpush1.msra.mxu0 %v776
      %804 = vmatprep.subr.mxu0 %v779
      %805 = vmatpush1.msra.mxu0 %v778
      %806 = vmatprep.subr.mxu0 0.0
      %807 = vmatpush1.msra.mxu0 0.0
      %808 = vmatprep.subr.mxu0 0.0
      %809 = vmatpush1.msra.mxu0 0.0
      %810 = vmatprep.subr.mxu0 0.0
      %811 = vmatpush1.msra.mxu0 0.0
      %812 = vmatprep.subr.mxu0 0.0
      %813 = vmatpush1.msra.mxu0 0.0
      %814 = vmatprep.subr.mxu0 0.0
      %815 = vmatpush1.msra.mxu0 0.0
      %816 = vmatprep.subr.mxu0 0.0
      %817 = vmatpush1.msra.mxu0 0.0
      %818 = vmatprep.subr.mxu0 0.0
      %819 = vmatpush1.msra.mxu0 0.0
      %820 = vmatprep.subr.mxu0 0.0
      %821 = vmatpush1.msra.mxu0 0.0
      %822 = vmatprep.subr.mxu0 0.0
      %823 = vmatpush1.msra.mxu0 0.0
      %824 = vmatprep.subr.mxu0 0.0
      %825 = vmatpush1.msra.mxu0 0.0
      %826 = vmatprep.subr.mxu0 0.0
      %827 = vmatpush1.msra.mxu0 0.0
      %828 = vmatprep.subr.mxu0 0.0
      %829 = vmatpush1.msra.mxu0 0.0
      %830 = vmatprep.subr.mxu0 0.0
      %831 = vmatpush1.msra.mxu0 0.0
      %832 = vmatprep.subr.mxu0 0.0
      %833 = vmatpush1.msra.mxu0 0.0
      %834 = vmatprep.subr.mxu0 0.0
      %835 = vmatpush1.msra.mxu0 0.0
      %836 = vmatprep.subr.mxu0 0.0
      %837 = vmatpush1.msra.mxu0 0.0
      %838 = vmatprep.subr.mxu0 0.0
      %839 = vmatpush1.msra.mxu0 0.0
      %840 = vmatprep.subr.mxu0 0.0
      %841 = vmatpush1.msra.mxu0 0.0
      %842 = vmatprep.subr.mxu0 0.0
      %843 = vmatpush1.msra.mxu0 0.0
      %844 = vmatprep.subr.mxu0 0.0
      %845 = vmatpush1.msra.mxu0 0.0
      %846 = vmatprep.subr.mxu0 0.0
      %847 = vmatpush1.msra.mxu0 0.0
      %848 = vmatprep.subr.mxu0 0.0
      %849 = vmatpush1.msra.mxu0 0.0
      %850 = vmatprep.subr.mxu0 0.0
      %851 = vmatpush1.msra.mxu0 0.0
      %852 = vmatprep.subr.mxu0 0.0
      %853 = vmatpush1.msra.mxu0 0.0
      %854 = vmatprep.subr.mxu0 0.0
      %855 = vmatpush1.msra.mxu0 0.0
      %856 = vmatprep.subr.mxu0 0.0
      %857 = vmatpush1.msra.mxu0 0.0
      %858 = vmatprep.subr.mxu0 0.0
      %859 = vmatpush1.msra.mxu0 0.0
      %860 = vmatprep.subr.mxu0 0.0
      %861 = vmatpush1.msra.mxu0 0.0
      %862 = vmatprep.subr.mxu0 0.0
      %863 = vmatpush1.msra.mxu0 0.0
      %864 = vmatprep.mubr.f32.mxu0 0.0
      %865 = vmatmul.mubr.f32.gmra.mrb[0].mxu0 %v792
      %v866 = vpop.f32.mrb[0].mxu0
      %v867 = vadd.f32 0.0, %v866
      %v868 = vpop.f32.mrb[0].mxu0
      %v869 = vadd.f32 0.0, %v868
      %870 = vmatprep.mubr.f32.mxu0 0.0
      %871 = vmatmul.mubr.f32.gmra.mrb[0].mxu0 %v794
      %v872 = vpop.f32.mrb[0].mxu0
      %v873 = vadd.f32 0.0, %v872
      %v874 = vpop.f32.mrb[0].mxu0
      %v875 = vadd.f32 0.0, %v874
      %876 = vmatprep.mubr.f32.mxu0 0.0
      %877 = vmatmul.mubr.f32.gmra.mrb[0].mxu0 %v796
      %v878 = vpop.f32.mrb[0].mxu0
      %v879 = vadd.f32 0.0, %v878
      %v880 = vpop.f32.mrb[0].mxu0
      %v881 = vadd.f32 0.0, %v880
      %882 = vmatprep.mubr.f32.mxu0 0.0
      %883 = vmatmul.mubr.f32.gmra.mrb[0].mxu0 %v798
      %v884 = vpop.f32.mrb[0].mxu0
      %v885 = vadd.f32 0.0, %v884
      %v886 = vpop.f32.mrb[0].mxu0
      %v887 = vadd.f32 0.0, %v886
      %888 = vdwg.mxu0
      %v889 = vadd.f32 %v673, %v867
      %v890 = vadd.f32 %v675, %v869
      %v891 = vadd.f32 %v679, %v873
      %v892 = vadd.f32 %v681, %v875
      %v893 = vadd.f32 %v685, %v879
      %v894 = vadd.f32 %v687, %v881
      %v895 = vadd.f32 %v691, %v885
      %v896 = vadd.f32 %v693, %v887
      %898 = vset.pattern.permute.xlu0 0
      %899 = vperm.xlu0 %898, %v332
      %v900 = vpop.permute.xlu0 %899
      %903 = vset.pattern.permute.xlu0 0
      %904 = vperm.xlu0 %903, %v333
      %v905 = vpop.permute.xlu0 %904
      %908 = vset.pattern.permute.xlu0 0
      %909 = vperm.xlu0 %908, %v334
      %v910 = vpop.permute.xlu0 %909
      %913 = vset.pattern.permute.xlu0 0
      %914 = vperm.xlu0 %913, %v335
      %v915 = vpop.permute.xlu0 %914
      %v917 = vadd.f32 %v889, %v900
      %v918 = vadd.f32 %v890, %v900
      %v919 = vadd.f32 %v891, %v905
      %v920 = vadd.f32 %v892, %v905
      %v921 = vadd.f32 %v893, %v910
      %v922 = vadd.f32 %v894, %v910
      %v923 = vadd.f32 %v895, %v915
      %v924 = vadd.f32 %v896, %v915
      %v925 = vld [vmem:[%s5] sm:$0xff]
      %v926 = vld [vmem:[%s5 + $0x8] sm:$0xff]
      %v927 = vld [vmem:[%s5 + $0x10] sm:$0xff]
      %v928 = vld [vmem:[%s5 + $0x18] sm:$0xff]
      %v929 = vadd.f32 %v917, %v918
      %930 = vadd.xlane.f32.xlu0 %v929
      %v931 = vpop.xlane.xlu0 %930
      %v932 = vadd.f32 %v919, %v920
      %933 = vadd.xlane.f32.xlu0 %v932
      %v934 = vpop.xlane.xlu0 %933
      %v935 = vadd.f32 %v921, %v922
      %936 = vadd.xlane.f32.xlu0 %v935
      %v937 = vpop.xlane.xlu0 %936
      %v938 = vadd.f32 %v923, %v924
      %939 = vadd.xlane.f32.xlu0 %v938
      %v940 = vpop.xlane.xlu0 %939
      %v941 = vmul.f32 %v917, %v917
      %v942 = vmul.f32 %v918, %v918
      %v943 = vmul.f32 %v919, %v919
      %v944 = vmul.f32 %v920, %v920
      %v945 = vmul.f32 %v921, %v921
      %v946 = vmul.f32 %v922, %v922
      %v947 = vmul.f32 %v923, %v923
      %v948 = vmul.f32 %v924, %v924
      %v949 = vadd.f32 %v941, %v942
      %950 = vadd.xlane.f32.xlu0 %v949
      %v951 = vpop.xlane.xlu0 %950
      %v952 = vadd.f32 %v943, %v944
      %953 = vadd.xlane.f32.xlu0 %v952
      %v954 = vpop.xlane.xlu0 %953
      %v955 = vadd.f32 %v945, %v946
      %956 = vadd.xlane.f32.xlu0 %v955
      %v957 = vpop.xlane.xlu0 %956
      %v958 = vadd.f32 %v947, %v948
      %959 = vadd.xlane.f32.xlu0 %v958
      %v960 = vpop.xlane.xlu0 %959
      %vm961 = vcmask 7168
      %v962 = vsel %vm961, %v931, %v951
      %v963 = vsel %vm961, %v934, %v954
      %v964 = vsel %vm961, %v937, %v957
      %v965 = vsel %vm961, %v940, %v960
      %vm966 = vcmask 261120
      %v968 = vsel %vm966, %v328, 0
      %v971 = vsel %vm966, %v329, 0
      %v974 = vsel %vm966, %v330, 0
      %v977 = vsel %vm966, %v331, 0
      %979 = vmatprep.subr.mxu0 0.0
      %980 = vmatpush1.msra.mxu0 %v962
      %981 = vmatprep.subr.mxu0 0.0
      %982 = vmatpush1.msra.mxu0 %v963
      %983 = vmatprep.subr.mxu0 0.0
      %984 = vmatpush1.msra.mxu0 %v964
      %985 = vmatprep.subr.mxu0 0.0
      %986 = vmatpush1.msra.mxu0 %v965
      %987 = vmatprep.subr.mxu0 0.0
      %988 = vmatpush1.msra.mxu0 0.0
      %989 = vmatprep.subr.mxu0 0.0
      %990 = vmatpush1.msra.mxu0 0.0
      %991 = vmatprep.subr.mxu0 0.0
      %992 = vmatpush1.msra.mxu0 0.0
      %993 = vmatprep.subr.mxu0 0.0
      %994 = vmatpush1.msra.mxu0 0.0
      %995 = vmatprep.subr.mxu0 0.0
      %996 = vmatpush1.msra.mxu0 0.0
      %997 = vmatprep.subr.mxu0 0.0
      %998 = vmatpush1.msra.mxu0 0.0
      %999 = vmatprep.subr.mxu0 0.0
      %1000 = vmatpush1.msra.mxu0 0.0
      %1001 = vmatprep.subr.mxu0 0.0
      %1002 = vmatpush1.msra.mxu0 0.0
      %1003 = vmatprep.subr.mxu0 0.0
      %1004 = vmatpush1.msra.mxu0 0.0
      %1005 = vmatprep.subr.mxu0 0.0
      %1006 = vmatpush1.msra.mxu0 0.0
      %1007 = vmatprep.subr.mxu0 0.0
      %1008 = vmatpush1.msra.mxu0 0.0
      %1009 = vmatprep.subr.mxu0 0.0
      %1010 = vmatpush1.msra.mxu0 0.0
      %1011 = vmatprep.subr.mxu0 0.0
      %1012 = vmatpush1.msra.mxu0 0.0
      %1013 = vmatprep.subr.mxu0 0.0
      %1014 = vmatpush1.msra.mxu0 0.0
      %1015 = vmatprep.subr.mxu0 0.0
      %1016 = vmatpush1.msra.mxu0 0.0
      %1017 = vmatprep.subr.mxu0 0.0
      %1018 = vmatpush1.msra.mxu0 0.0
      %1019 = vmatprep.subr.mxu0 0.0
      %1020 = vmatpush1.msra.mxu0 0.0
      %1021 = vmatprep.subr.mxu0 0.0
      %1022 = vmatpush1.msra.mxu0 0.0
      %1023 = vmatprep.subr.mxu0 0.0
      %1024 = vmatpush1.msra.mxu0 0.0
      %1025 = vmatprep.subr.mxu0 0.0
      %1026 = vmatpush1.msra.mxu0 0.0
      %1027 = vmatprep.subr.mxu0 0.0
      %1028 = vmatpush1.msra.mxu0 0.0
      %1029 = vmatprep.subr.mxu0 0.0
      %1030 = vmatpush1.msra.mxu0 0.0
      %1031 = vmatprep.subr.mxu0 0.0
      %1032 = vmatpush1.msra.mxu0 0.0
      %1033 = vmatprep.subr.mxu0 0.0
      %1034 = vmatpush1.msra.mxu0 0.0
      %1035 = vmatprep.subr.mxu0 0.0
      %1036 = vmatpush1.msra.mxu0 0.0
      %1037 = vmatprep.subr.mxu0 0.0
      %1038 = vmatpush1.msra.mxu0 0.0
      %1039 = vmatprep.subr.mxu0 0.0
      %1040 = vmatpush1.msra.mxu0 0.0
      %1041 = vmatprep.subr.mxu0 0.0
      %1042 = vmatpush1.msra.mxu0 0.0
      %1043 = vmatprep.mubr.f32.mxu0 0.0
      %1044 = vmatmul.mubr.f32.gmra.mrb[0].mxu0 %v968
      %v1045 = vpop.f32.mrb[0].mxu0
      %v1046 = vadd.f32 0.0, %v1045
      %v1047 = vpop.f32.mrb[0].mxu0
      %1048 = vmatprep.mubr.f32.mxu0 0.0
      %1049 = vmatmul.mubr.f32.gmra.mrb[0].mxu0 %v971
      %v1050 = vpop.f32.mrb[0].mxu0
      %v1051 = vadd.f32 0.0, %v1050
      %v1052 = vpop.f32.mrb[0].mxu0
      %1053 = vmatprep.mubr.f32.mxu0 0.0
      %1054 = vmatmul.mubr.f32.gmra.mrb[0].mxu0 %v974
      %v1055 = vpop.f32.mrb[0].mxu0
      %v1056 = vadd.f32 0.0, %v1055
      %v1057 = vpop.f32.mrb[0].mxu0
      %1058 = vmatprep.mubr.f32.mxu0 0.0
      %1059 = vmatmul.mubr.f32.gmra.mrb[0].mxu0 %v977
      %v1060 = vpop.f32.mrb[0].mxu0
      %v1061 = vadd.f32 0.0, %v1060
      %v1062 = vpop.f32.mrb[0].mxu0
      %1063 = vdwg.mxu0
      %v1064 = vmul.f32 %v1046, 0.0009765625
      %v1065 = vmul.f32 %v1051, 0.0009765625
      %v1066 = vmul.f32 %v1056, 0.0009765625
      %v1067 = vmul.f32 %v1061, 0.0009765625
      %v1068 = vmul.f32 %v1064, %v1064
      %v1069 = vmul.f32 %v1065, %v1065
      %v1070 = vmul.f32 %v1066, %v1066
      %v1071 = vmul.f32 %v1067, %v1067
      %1076 = vrot.lane.b32.xlu0 %v1068, 1
      %v1077 = vpop.permute.xlu0 %1076
      %1078 = vrot.lane.b32.xlu0 %v1069, 1
      %v1079 = vpop.permute.xlu0 %1078
      %1080 = vrot.lane.b32.xlu0 %v1070, 1
      %v1081 = vpop.permute.xlu0 %1080
      %1082 = vrot.lane.b32.xlu0 %v1071, 1
      %v1083 = vpop.permute.xlu0 %1082
      %v1088 = vsub.f32 %v1064, %v1077
      %v1089 = vsub.f32 %v1065, %v1079
      %v1090 = vsub.f32 %v1066, %v1081
      %v1091 = vsub.f32 %v1067, %v1083
      %1093 = vset.pattern.permute.xlu0 0
      %1094 = vperm.xlu0 %1093, %v1064
      %v1095 = vpop.permute.xlu0 %1094
      %1098 = vset.pattern.permute.xlu0 0
      %1099 = vperm.xlu0 %1098, %v1065
      %v1100 = vpop.permute.xlu0 %1099
      %1103 = vset.pattern.permute.xlu0 0
      %1104 = vperm.xlu0 %1103, %v1066
      %v1105 = vpop.permute.xlu0 %1104
      %1108 = vset.pattern.permute.xlu0 0
      %1109 = vperm.xlu0 %1108, %v1067
      %v1110 = vpop.permute.xlu0 %1109
      %v1112 = vsub.f32 %v917, %v1095
      %v1113 = vsub.f32 %v918, %v1095
      %v1114 = vsub.f32 %v919, %v1100
      %v1115 = vsub.f32 %v920, %v1100
      %v1116 = vsub.f32 %v921, %v1105
      %v1117 = vsub.f32 %v922, %v1105
      %v1118 = vsub.f32 %v923, %v1110
      %v1119 = vsub.f32 %v924, %v1110
      %v1120 = vadd.f32 %v1088, 1e-05
      %v1121 = vadd.f32 %v1089, 1e-05
      %v1122 = vadd.f32 %v1090, 1e-05
      %v1123 = vadd.f32 %v1091, 1e-05
      %v1124 = vrsqrt.pop %v1120
      %v1125 = vrsqrt.pop %v1121
      %v1126 = vrsqrt.pop %v1122
      %v1127 = vrsqrt.pop %v1123
      %1129 = vset.pattern.permute.xlu0 1
      %1130 = vperm.xlu0 %1129, %v1124
      %v1131 = vpop.permute.xlu0 %1130
      %1134 = vset.pattern.permute.xlu0 1
      %1135 = vperm.xlu0 %1134, %v1125
      %v1136 = vpop.permute.xlu0 %1135
      %1139 = vset.pattern.permute.xlu0 1
      %1140 = vperm.xlu0 %1139, %v1126
      %v1141 = vpop.permute.xlu0 %1140
      %1144 = vset.pattern.permute.xlu0 1
      %1145 = vperm.xlu0 %1144, %v1127
      %v1146 = vpop.permute.xlu0 %1145
      %v1148 = vmul.f32 %v1112, %v1131
      %v1149 = vmul.f32 %v1113, %v1131
      %v1150 = vmul.f32 %v1114, %v1136
      %v1151 = vmul.f32 %v1115, %v1136
      %v1152 = vmul.f32 %v1116, %v1141
      %v1153 = vmul.f32 %v1117, %v1141
      %v1154 = vmul.f32 %v1118, %v1146
      %v1155 = vmul.f32 %v1119, %v1146
      %1157 = vset.pattern.permute.xlu0 1
      %1158 = vperm.xlu0 %1157, %v925
      %v1159 = vpop.permute.xlu0 %1158
      %1162 = vset.pattern.permute.xlu0 1
      %1163 = vperm.xlu0 %1162, %v926
      %v1164 = vpop.permute.xlu0 %1163
      %1167 = vset.pattern.permute.xlu0 1
      %1168 = vperm.xlu0 %1167, %v927
      %v1169 = vpop.permute.xlu0 %1168
      %1172 = vset.pattern.permute.xlu0 1
      %1173 = vperm.xlu0 %1172, %v928
      %v1174 = vpop.permute.xlu0 %1173
      %v1176 = vmul.f32 %v1148, %v1159
      %v1177 = vmul.f32 %v1149, %v1159
      %v1178 = vmul.f32 %v1150, %v1164
      %v1179 = vmul.f32 %v1151, %v1164
      %v1180 = vmul.f32 %v1152, %v1169
      %v1181 = vmul.f32 %v1153, %v1169
      %v1182 = vmul.f32 %v1154, %v1174
      %v1183 = vmul.f32 %v1155, %v1174
      %1184 = vset.pattern.permute.xlu0 2
      %1185 = vperm.xlu0 %1184, %v925
      %v1186 = vpop.permute.xlu0 %1185
      %1188 = vset.pattern.permute.xlu0 2
      %1189 = vperm.xlu0 %1188, %v926
      %v1190 = vpop.permute.xlu0 %1189
      %1192 = vset.pattern.permute.xlu0 2
      %1193 = vperm.xlu0 %1192, %v927
      %v1194 = vpop.permute.xlu0 %1193
      %1196 = vset.pattern.permute.xlu0 2
      %1197 = vperm.xlu0 %1196, %v928
      %v1198 = vpop.permute.xlu0 %1197
      %v1200 = vadd.f32 %v1176, %v1186
      %v1201 = vadd.f32 %v1177, %v1186
      %v1202 = vadd.f32 %v1178, %v1190
      %v1203 = vadd.f32 %v1179, %v1190
      %v1204 = vadd.f32 %v1180, %v1194
      %v1205 = vadd.f32 %v1181, %v1194
      %v1206 = vadd.f32 %v1182, %v1198
      %v1207 = vadd.f32 %v1183, %v1198
      %v1208 = vld [vmem:[%s320] sm:$0xff]
      %v1209 = vld [vmem:[%s320 + $0x8] sm:$0xff]
      %v1210 = vld [vmem:[%s320 + $0x10] sm:$0xff]
      %v1211 = vld [vmem:[%s320 + $0x18] sm:$0xff]
      %1213 = vset.pattern.permute.xlu0 0
      %1214 = vperm.xlu0 %1213, %v1208
      %v1215 = vpop.permute.xlu0 %1214
      %1218 = vset.pattern.permute.xlu0 0
      %1219 = vperm.xlu0 %1218, %v1209
      %v1220 = vpop.permute.xlu0 %1219
      %1223 = vset.pattern.permute.xlu0 0
      %1224 = vperm.xlu0 %1223, %v1210
      %v1225 = vpop.permute.xlu0 %1224
      %1228 = vset.pattern.permute.xlu0 0
      %1229 = vperm.xlu0 %1228, %v1211
      %v1230 = vpop.permute.xlu0 %1229
      %v1232 = vmul.f32 %v1200, %v1215
      %v1233 = vmul.f32 %v1201, %v1215
      %v1234 = vmul.f32 %v1202, %v1220
      %v1235 = vmul.f32 %v1203, %v1220
      %v1236 = vmul.f32 %v1204, %v1225
      %v1237 = vmul.f32 %v1205, %v1225
      %v1238 = vmul.f32 %v1206, %v1230
      %v1239 = vmul.f32 %v1207, %v1230
      %1240 = vset.pattern.permute.xlu0 1
      %1241 = vperm.xlu0 %1240, %v1208
      %v1242 = vpop.permute.xlu0 %1241
      %1244 = vset.pattern.permute.xlu0 1
      %1245 = vperm.xlu0 %1244, %v1209
      %v1246 = vpop.permute.xlu0 %1245
      %1248 = vset.pattern.permute.xlu0 1
      %1249 = vperm.xlu0 %1248, %v1210
      %v1250 = vpop.permute.xlu0 %1249
      %1252 = vset.pattern.permute.xlu0 1
      %1253 = vperm.xlu0 %1252, %v1211
      %v1254 = vpop.permute.xlu0 %1253
      %v1256 = vadd.f32 %v1232, %v1242
      %v1257 = vadd.f32 %v1233, %v1242
      %v1258 = vadd.f32 %v1234, %v1246
      %v1259 = vadd.f32 %v1235, %v1246
      %v1260 = vadd.f32 %v1236, %v1250
      %v1261 = vadd.f32 %v1237, %v1250
      %v1262 = vadd.f32 %v1238, %v1254
      %v1263 = vadd.f32 %v1239, %v1254
      %v1264 = vxor.u32 %v1256, 2147483648
      %v1265 = vxor.u32 %v1257, 2147483648
      %v1266 = vxor.u32 %v1258, 2147483648
      %v1267 = vxor.u32 %v1259, 2147483648
      %v1268 = vxor.u32 %v1260, 2147483648
      %v1269 = vxor.u32 %v1261, 2147483648
      %v1270 = vxor.u32 %v1262, 2147483648
      %v1271 = vxor.u32 %v1263, 2147483648
      %v1272 = vmul.f32 %v1264, 1.442695
      %v1273 = vpow.pop %v1272
      %v1274 = vmul.f32 %v1265, 1.442695
      %v1275 = vpow.pop %v1274
      %v1276 = vmul.f32 %v1266, 1.442695
      %v1277 = vpow.pop %v1276
      %v1278 = vmul.f32 %v1267, 1.442695
      %v1279 = vpow.pop %v1278
      %v1280 = vmul.f32 %v1268, 1.442695
      %v1281 = vpow.pop %v1280
      %v1282 = vmul.f32 %v1269, 1.442695
      %v1283 = vpow.pop %v1282
      %v1284 = vmul.f32 %v1270, 1.442695
      %v1285 = vpow.pop %v1284
      %v1286 = vmul.f32 %v1271, 1.442695
      %v1287 = vpow.pop %v1286
      %v1288 = vadd.f32 %v1273, 1.0
      %v1289 = vadd.f32 %v1275, 1.0
      %v1290 = vadd.f32 %v1277, 1.0
      %v1291 = vadd.f32 %v1279, 1.0
      %v1292 = vadd.f32 %v1281, 1.0
      %v1293 = vadd.f32 %v1283, 1.0
      %v1294 = vadd.f32 %v1285, 1.0
      %v1295 = vadd.f32 %v1287, 1.0
      %v1296 = vrcp.pop %v1288
      %v1297 = vmul.f32 1.0, %v1296
      %v1298 = vrcp.pop %v1289
      %v1299 = vmul.f32 1.0, %v1298
      %v1300 = vrcp.pop %v1290
      %v1301 = vmul.f32 1.0, %v1300
      %v1302 = vrcp.pop %v1291
      %v1303 = vmul.f32 1.0, %v1302
      %v1304 = vrcp.pop %v1292
      %v1305 = vmul.f32 1.0, %v1304
      %v1306 = vrcp.pop %v1293
      %v1307 = vmul.f32 1.0, %v1306
      %v1308 = vrcp.pop %v1294
      %v1309 = vmul.f32 1.0, %v1308
      %v1310 = vrcp.pop %v1295
      %v1311 = vmul.f32 1.0, %v1310
      %v1312 = vmul.f32 %v1256, %v1297
      %v1313 = vmul.f32 %v1257, %v1299
      %v1314 = vmul.f32 %v1258, %v1301
      %v1315 = vmul.f32 %v1259, %v1303
      %v1316 = vmul.f32 %v1260, %v1305
      %v1317 = vmul.f32 %v1261, %v1307
      %v1318 = vmul.f32 %v1262, %v1309
      %v1319 = vmul.f32 %v1263, %v1311
      %1320 = vrot.lane.b32.xlu0 %v1312, 17
      %v1321 = vpop.permute.xlu0 %1320
      %1322 = vrot.lane.b32.xlu0 %v1314, 17
      %v1323 = vpop.permute.xlu0 %1322
      %1324 = vrot.lane.b32.xlu0 %v1316, 17
      %v1325 = vpop.permute.xlu0 %1324
      %1326 = vrot.lane.b32.xlu0 %v1318, 17
      %v1327 = vpop.permute.xlu0 %1326
      %1328 = vrot.lane.b32.xlu0 %v1313, 17
      %v1329 = vpop.permute.xlu0 %1328
      %1330 = vrot.lane.b32.xlu0 %v1315, 17
      %v1331 = vpop.permute.xlu0 %1330
      %1332 = vrot.lane.b32.xlu0 %v1317, 17
      %v1333 = vpop.permute.xlu0 %1332
      %1334 = vrot.lane.b32.xlu0 %v1319, 17
      %v1335 = vpop.permute.xlu0 %1334
      %v1336 = vsel %vm342, %v1321, %v1329
      %v1337 = vsel %vm342, %v1323, %v1331
      %v1338 = vsel %vm342, %v1325, %v1333
      %v1339 = vsel %vm342, %v1327, %v1335
      %v1340 = vsel %vm342, %v1329, %v1321
      %v1341 = vsel %vm342, %v1331, %v1323
      %v1342 = vsel %vm342, %v1333, %v1325
      %v1343 = vsel %vm342, %v1335, %v1327
      %v1344 = vld [vmem:[%s1] ss:$8 sm:$0x3]
      %vm1345 = vcmp.ne.f32.partialorder %v1344, 0.0
      %v1346 = vsel %vm1345, 1, 0
      %v1347 = vlaneseq
      %v1348 = vshrl.u32 %v1347, 7
      %v1349 = vsub.s32 0, %v1348
      %v1350 = vrot.slane %v1346, %v1349
      %v1351 = vlaneseq
      %v1352 = vshrl.u32 %v1351, 7
      %v1353 = vsub.s32 1, %v1352
      %v1354 = vrot.slane %v1346, %v1353
      %vm1355 = vcmp.eq.s32.totalorder %v1350, 1
      %vm1356 = vcmp.eq.s32.totalorder %v1354, 1
      %v1357 = vsel %vm1355, %v1340, 0.0
      %v1358 = vsel %vm1356, %v1336, 0.0
      %v1359 = vsel %vm1355, %v1341, 0.0
      %v1360 = vsel %vm1356, %v1337, 0.0
      %v1361 = vsel %vm1355, %v1342, 0.0
      %v1362 = vsel %vm1356, %v1338, 0.0
      %v1363 = vsel %vm1355, %v1343, 0.0
      %v1364 = vsel %vm1356, %v1339, 0.0
      %1365 = vst [vmem:[#allocation2] sm:$0xff] %v1357
      %1366 = vst [vmem:[#allocation2 + $0x8] sm:$0xff] %v1358
      %1367 = vst [vmem:[#allocation2 + $0x10] sm:$0xff] %v1359
      %1368 = vst [vmem:[#allocation2 + $0x18] sm:$0xff] %v1360
      %1369 = vst [vmem:[#allocation2 + $0x20] sm:$0xff] %v1361
      %1370 = vst [vmem:[#allocation2 + $0x28] sm:$0xff] %v1362
      %1371 = vst [vmem:[#allocation2 + $0x30] sm:$0xff] %v1363
      %1372 = vst [vmem:[#allocation2 + $0x38] sm:$0xff] %v1364
      %1373 = vrot.lane.b32.xlu0 %v1312, 16
      %v1374 = vpop.permute.xlu0 %1373
      %1375 = vrot.lane.b32.xlu0 %v1314, 16
      %v1376 = vpop.permute.xlu0 %1375
      %1377 = vrot.lane.b32.xlu0 %v1316, 16
      %v1378 = vpop.permute.xlu0 %1377
      %1379 = vrot.lane.b32.xlu0 %v1318, 16
      %v1380 = vpop.permute.xlu0 %1379
      %1381 = vrot.lane.b32.xlu0 %v1313, 16
      %v1382 = vpop.permute.xlu0 %1381
      %1383 = vrot.lane.b32.xlu0 %v1315, 16
      %v1384 = vpop.permute.xlu0 %1383
      %1385 = vrot.lane.b32.xlu0 %v1317, 16
      %v1386 = vpop.permute.xlu0 %1385
      %1387 = vrot.lane.b32.xlu0 %v1319, 16
      %v1388 = vpop.permute.xlu0 %1387
      %v1389 = vsel %vm366, %v1374, %v1382
      %v1390 = vsel %vm366, %v1376, %v1384
      %v1391 = vsel %vm366, %v1378, %v1386
      %v1392 = vsel %vm366, %v1380, %v1388
      %v1393 = vsel %vm366, %v1382, %v1374
      %v1394 = vsel %vm366, %v1384, %v1376
      %v1395 = vsel %vm366, %v1386, %v1378
      %v1396 = vsel %vm366, %v1388, %v1380
      %v1397 = vld [vmem:[%s369] ss:$8 sm:$0x3]
      %vm1398 = vcmp.ne.f32.partialorder %v1397, 0.0
      %v1399 = vsel %vm1398, 1, 0
      %v1400 = vlaneseq
      %v1401 = vshrl.u32 %v1400, 7
      %v1402 = vsub.s32 0, %v1401
      %v1403 = vrot.slane %v1399, %v1402
      %v1404 = vlaneseq
      %v1405 = vshrl.u32 %v1404, 7
      %v1406 = vsub.s32 1, %v1405
      %v1407 = vrot.slane %v1399, %v1406
      %vm1408 = vcmp.eq.s32.totalorder %v1403, 1
      %vm1409 = vcmp.eq.s32.totalorder %v1407, 1
      %v1410 = vsel %vm1408, %v1393, 0.0
      %v1411 = vsel %vm1409, %v1389, 0.0
      %v1412 = vsel %vm1408, %v1394, 0.0
      %v1413 = vsel %vm1409, %v1390, 0.0
      %v1414 = vsel %vm1408, %v1395, 0.0
      %v1415 = vsel %vm1409, %v1391, 0.0
      %v1416 = vsel %vm1408, %v1396, 0.0
      %v1417 = vsel %vm1409, %v1392, 0.0
      %1418 = vst [vmem:[#allocation2 + $0x40] sm:$0xff] %v1410
      %1419 = vst [vmem:[#allocation2 + $0x48] sm:$0xff] %v1411
      %1420 = vst [vmem:[#allocation2 + $0x50] sm:$0xff] %v1412
      %1421 = vst [vmem:[#allocation2 + $0x58] sm:$0xff] %v1413
      %1422 = vst [vmem:[#allocation2 + $0x60] sm:$0xff] %v1414
      %1423 = vst [vmem:[#allocation2 + $0x68] sm:$0xff] %v1415
      %1424 = vst [vmem:[#allocation2 + $0x70] sm:$0xff] %v1416
      %1425 = vst [vmem:[#allocation2 + $0x78] sm:$0xff] %v1417
      %1426 = vrot.lane.b32.xlu0 %v1312, 15
      %v1427 = vpop.permute.xlu0 %1426
      %1428 = vrot.lane.b32.xlu0 %v1314, 15
      %v1429 = vpop.permute.xlu0 %1428
      %1430 = vrot.lane.b32.xlu0 %v1316, 15
      %v1431 = vpop.permute.xlu0 %1430
      %1432 = vrot.lane.b32.xlu0 %v1318, 15
      %v1433 = vpop.permute.xlu0 %1432
      %1434 = vrot.lane.b32.xlu0 %v1313, 15
      %v1435 = vpop.permute.xlu0 %1434
      %1436 = vrot.lane.b32.xlu0 %v1315, 15
      %v1437 = vpop.permute.xlu0 %1436
      %1438 = vrot.lane.b32.xlu0 %v1317, 15
      %v1439 = vpop.permute.xlu0 %1438
      %1440 = vrot.lane.b32.xlu0 %v1319, 15
      %v1441 = vpop.permute.xlu0 %1440
      %v1442 = vsel %vm391, %v1427, %v1435
      %v1443 = vsel %vm391, %v1429, %v1437
      %v1444 = vsel %vm391, %v1431, %v1439
      %v1445 = vsel %vm391, %v1433, %v1441
      %v1446 = vsel %vm391, %v1435, %v1427
      %v1447 = vsel %vm391, %v1437, %v1429
      %v1448 = vsel %vm391, %v1439, %v1431
      %v1449 = vsel %vm391, %v1441, %v1433
      %v1450 = vld [vmem:[%s394] ss:$8 sm:$0x3]
      %vm1451 = vcmp.ne.f32.partialorder %v1450, 0.0
      %v1452 = vsel %vm1451, 1, 0
      %v1453 = vlaneseq
      %v1454 = vshrl.u32 %v1453, 7
      %v1455 = vsub.s32 0, %v1454
      %v1456 = vrot.slane %v1452, %v1455
      %v1457 = vlaneseq
      %v1458 = vshrl.u32 %v1457, 7
      %v1459 = vsub.s32 1, %v1458
      %v1460 = vrot.slane %v1452, %v1459
      %vm1461 = vcmp.eq.s32.totalorder %v1456, 1
      %vm1462 = vcmp.eq.s32.totalorder %v1460, 1
      %v1463 = vsel %vm1461, %v1446, 0.0
      %v1464 = vsel %vm1462, %v1442, 0.0
      %v1465 = vsel %vm1461, %v1447, 0.0
      %v1466 = vsel %vm1462, %v1443, 0.0
      %v1467 = vsel %vm1461, %v1448, 0.0
      %v1468 = vsel %vm1462, %v1444, 0.0
      %v1469 = vsel %vm1461, %v1449, 0.0
      %v1470 = vsel %vm1462, %v1445, 0.0
      %1471 = vst [vmem:[#allocation2 + $0x80] sm:$0xff] %v1463
      %1472 = vst [vmem:[#allocation2 + $0x88] sm:$0xff] %v1464
      %1473 = vst [vmem:[#allocation2 + $0x90] sm:$0xff] %v1465
      %1474 = vst [vmem:[#allocation2 + $0x98] sm:$0xff] %v1466
      %1475 = vst [vmem:[#allocation2 + $0xa0] sm:$0xff] %v1467
      %1476 = vst [vmem:[#allocation2 + $0xa8] sm:$0xff] %v1468
      %1477 = vst [vmem:[#allocation2 + $0xb0] sm:$0xff] %v1469
      %1478 = vst [vmem:[#allocation2 + $0xb8] sm:$0xff] %v1470
      %v1479 = vld [vmem:[%s4] sm:$0xff]
      %v1480 = vld [vmem:[%s4 + $0x18] sm:$0xff]
      %v1481 = vld [vmem:[%s4 + $0x30] sm:$0xff]
      %v1482 = vld [vmem:[%s4 + $0x48] sm:$0xff]
      %v1483 = vld [vmem:[#allocation2] sm:$0xff]
      %v1484 = vld [vmem:[#allocation2 + $0x8] sm:$0xff]
      %v1485 = vld [vmem:[#allocation2 + $0x10] sm:$0xff]
      %v1486 = vld [vmem:[#allocation2 + $0x18] sm:$0xff]
      %v1487 = vld [vmem:[#allocation2 + $0x20] sm:$0xff]
      %v1488 = vld [vmem:[#allocation2 + $0x28] sm:$0xff]
      %v1489 = vld [vmem:[#allocation2 + $0x30] sm:$0xff]
      %v1490 = vld [vmem:[#allocation2 + $0x38] sm:$0xff]
      %v1491 = vld [vmem:[#allocation2 + $0x40] sm:$0xff]
      %v1492 = vld [vmem:[#allocation2 + $0x48] sm:$0xff]
      %v1493 = vld [vmem:[#allocation2 + $0x50] sm:$0xff]
      %v1494 = vld [vmem:[#allocation2 + $0x58] sm:$0xff]
      %v1495 = vld [vmem:[#allocation2 + $0x60] sm:$0xff]
      %v1496 = vld [vmem:[#allocation2 + $0x68] sm:$0xff]
      %v1497 = vld [vmem:[#allocation2 + $0x70] sm:$0xff]
      %v1498 = vld [vmem:[#allocation2 + $0x78] sm:$0xff]
      %v1499 = vld [vmem:[#allocation2 + $0x80] sm:$0xff]
      %v1500 = vld [vmem:[#allocation2 + $0x88] sm:$0xff]
      %v1501 = vld [vmem:[#allocation2 + $0x90] sm:$0xff]
      %v1502 = vld [vmem:[#allocation2 + $0x98] sm:$0xff]
      %v1503 = vld [vmem:[#allocation2 + $0xa0] sm:$0xff]
      %v1504 = vld [vmem:[#allocation2 + $0xa8] sm:$0xff]
      %v1505 = vld [vmem:[#allocation2 + $0xb0] sm:$0xff]
      %v1506 = vld [vmem:[#allocation2 + $0xb8] sm:$0xff]
      %1507 = vrot.lane.b32.xlu0 %v1312, 1
      %v1508 = vpop.permute.xlu0 %1507
      %1509 = vrot.lane.b32.xlu0 %v1314, 1
      %v1510 = vpop.permute.xlu0 %1509
      %1511 = vrot.lane.b32.xlu0 %v1316, 1
      %v1512 = vpop.permute.xlu0 %1511
      %1513 = vrot.lane.b32.xlu0 %v1318, 1
      %v1514 = vpop.permute.xlu0 %1513
      %1515 = vrot.lane.b32.xlu0 %v1313, 1
      %v1516 = vpop.permute.xlu0 %1515
      %1517 = vrot.lane.b32.xlu0 %v1315, 1
      %v1518 = vpop.permute.xlu0 %1517
      %1519 = vrot.lane.b32.xlu0 %v1317, 1
      %v1520 = vpop.permute.xlu0 %1519
      %1521 = vrot.lane.b32.xlu0 %v1319, 1
      %v1522 = vpop.permute.xlu0 %1521
      %v1523 = vsel %vm426, %v1508, %v1516
      %v1524 = vsel %vm426, %v1510, %v1518
      %v1525 = vsel %vm426, %v1512, %v1520
      %v1526 = vsel %vm426, %v1514, %v1522
      %v1527 = vsel %vm426, %v1516, %v1508
      %v1528 = vsel %vm426, %v1518, %v1510
      %v1529 = vsel %vm426, %v1520, %v1512
      %v1530 = vsel %vm426, %v1522, %v1514
      %v1531 = vld [vmem:[%s429] ss:$8 sm:$0x3]
      %vm1532 = vcmp.ne.f32.partialorder %v1531, 0.0
      %v1533 = vsel %vm1532, 1, 0
      %v1534 = vlaneseq
      %v1535 = vshrl.u32 %v1534, 7
      %v1536 = vsub.s32 0, %v1535
      %v1537 = vrot.slane %v1533, %v1536
      %v1538 = vlaneseq
      %v1539 = vshrl.u32 %v1538, 7
      %v1540 = vsub.s32 1, %v1539
      %v1541 = vrot.slane %v1533, %v1540
      %vm1542 = vcmp.eq.s32.totalorder %v1537, 1
      %vm1543 = vcmp.eq.s32.totalorder %v1541, 1
      %v1544 = vsel %vm1542, %v1527, 0.0
      %v1545 = vsel %vm1543, %v1523, 0.0
      %v1546 = vsel %vm1542, %v1528, 0.0
      %v1547 = vsel %vm1543, %v1524, 0.0
      %v1548 = vsel %vm1542, %v1529, 0.0
      %v1549 = vsel %vm1543, %v1525, 0.0
      %v1550 = vsel %vm1542, %v1530, 0.0
      %v1551 = vsel %vm1543, %v1526, 0.0
      %1552 = vst [vmem:[#allocation2] sm:$0xff] %v1544
      %1553 = vst [vmem:[#allocation2 + $0x8] sm:$0xff] %v1545
      %1554 = vst [vmem:[#allocation2 + $0x10] sm:$0xff] %v1546
      %1555 = vst [vmem:[#allocation2 + $0x18] sm:$0xff] %v1547
      %1556 = vst [vmem:[#allocation2 + $0x20] sm:$0xff] %v1548
      %1557 = vst [vmem:[#allocation2 + $0x28] sm:$0xff] %v1549
      %1558 = vst [vmem:[#allocation2 + $0x30] sm:$0xff] %v1550
      %1559 = vst [vmem:[#allocation2 + $0x38] sm:$0xff] %v1551
      %1560 = vst [vmem:[#allocation2 + $0x40] sm:$0xff] %v1312
      %1561 = vst [vmem:[#allocation2 + $0x48] sm:$0xff] %v1313
      %1562 = vst [vmem:[#allocation2 + $0x50] sm:$0xff] %v1314
      %1563 = vst [vmem:[#allocation2 + $0x58] sm:$0xff] %v1315
      %1564 = vst [vmem:[#allocation2 + $0x60] sm:$0xff] %v1316
      %1565 = vst [vmem:[#allocation2 + $0x68] sm:$0xff] %v1317
      %1566 = vst [vmem:[#allocation2 + $0x70] sm:$0xff] %v1318
      %1567 = vst [vmem:[#allocation2 + $0x78] sm:$0xff] %v1319
      %1568 = vrot.lane.b32.xlu0 %v1312, 127
      %v1569 = vpop.permute.xlu0 %1568
      %1570 = vrot.lane.b32.xlu0 %v1314, 127
      %v1571 = vpop.permute.xlu0 %1570
      %1572 = vrot.lane.b32.xlu0 %v1316, 127
      %v1573 = vpop.permute.xlu0 %1572
      %1574 = vrot.lane.b32.xlu0 %v1318, 127
      %v1575 = vpop.permute.xlu0 %1574
      %1576 = vrot.lane.b32.xlu0 %v1313, 127
      %v1577 = vpop.permute.xlu0 %1576
      %1578 = vrot.lane.b32.xlu0 %v1315, 127
      %v1579 = vpop.permute.xlu0 %1578
      %1580 = vrot.lane.b32.xlu0 %v1317, 127
      %v1581 = vpop.permute.xlu0 %1580
      %1582 = vrot.lane.b32.xlu0 %v1319, 127
      %v1583 = vpop.permute.xlu0 %1582
      %v1584 = vsel %vm453, %v1569, %v1577
      %v1585 = vsel %vm453, %v1571, %v1579
      %v1586 = vsel %vm453, %v1573, %v1581
      %v1587 = vsel %vm453, %v1575, %v1583
      %v1588 = vsel %vm453, %v1577, %v1569
      %v1589 = vsel %vm453, %v1579, %v1571
      %v1590 = vsel %vm453, %v1581, %v1573
      %v1591 = vsel %vm453, %v1583, %v1575
      %v1592 = vld [vmem:[%s456] ss:$8 sm:$0x3]
      %vm1593 = vcmp.ne.f32.partialorder %v1592, 0.0
      %v1594 = vsel %vm1593, 1, 0
      %v1595 = vlaneseq
      %v1596 = vshrl.u32 %v1595, 7
      %v1597 = vsub.s32 0, %v1596
      %v1598 = vrot.slane %v1594, %v1597
      %v1599 = vlaneseq
      %v1600 = vshrl.u32 %v1599, 7
      %v1601 = vsub.s32 1, %v1600
      %v1602 = vrot.slane %v1594, %v1601
      %vm1603 = vcmp.eq.s32.totalorder %v1598, 1
      %vm1604 = vcmp.eq.s32.totalorder %v1602, 1
      %v1605 = vsel %vm1603, %v1584, 0.0
      %v1606 = vsel %vm1604, %v1588, 0.0
      %v1607 = vsel %vm1603, %v1585, 0.0
      %v1608 = vsel %vm1604, %v1589, 0.0
      %v1609 = vsel %vm1603, %v1586, 0.0
      %v1610 = vsel %vm1604, %v1590, 0.0
      %v1611 = vsel %vm1603, %v1587, 0.0
      %v1612 = vsel %vm1604, %v1591, 0.0
      %1613 = vst [vmem:[#allocation2 + $0x80] sm:$0xff] %v1605
      %1614 = vst [vmem:[#allocation2 + $0x88] sm:$0xff] %v1606
      %1615 = vst [vmem:[#allocation2 + $0x90] sm:$0xff] %v1607
      %1616 = vst [vmem:[#allocation2 + $0x98] sm:$0xff] %v1608
      %1617 = vst [vmem:[#allocation2 + $0xa0] sm:$0xff] %v1609
      %1618 = vst [vmem:[#allocation2 + $0xa8] sm:$0xff] %v1610
      %1619 = vst [vmem:[#allocation2 + $0xb0] sm:$0xff] %v1611
      %1620 = vst [vmem:[#allocation2 + $0xb8] sm:$0xff] %v1612
      %v1621 = vld [vmem:[%s4] sm:$0xff]
      %v1622 = vld [vmem:[%s4 + $0x8] sm:$0xff]
      %v1623 = vld [vmem:[%s4 + $0x18] sm:$0xff]
      %v1624 = vld [vmem:[%s4 + $0x20] sm:$0xff]
      %v1625 = vld [vmem:[%s4 + $0x30] sm:$0xff]
      %v1626 = vld [vmem:[%s4 + $0x38] sm:$0xff]
      %v1627 = vld [vmem:[%s4 + $0x48] sm:$0xff]
      %v1628 = vld [vmem:[%s4 + $0x50] sm:$0xff]
      %v1629 = vld [vmem:[#allocation2] sm:$0xff]
      %v1630 = vld [vmem:[#allocation2 + $0x8] sm:$0xff]
      %v1631 = vld [vmem:[#allocation2 + $0x10] sm:$0xff]
      %v1632 = vld [vmem:[#allocation2 + $0x18] sm:$0xff]
      %v1633 = vld [vmem:[#allocation2 + $0x20] sm:$0xff]
      %v1634 = vld [vmem:[#allocation2 + $0x28] sm:$0xff]
      %v1635 = vld [vmem:[#allocation2 + $0x30] sm:$0xff]
      %v1636 = vld [vmem:[#allocation2 + $0x38] sm:$0xff]
      %v1637 = vld [vmem:[#allocation2 + $0x40] sm:$0xff]
      %v1638 = vld [vmem:[#allocation2 + $0x48] sm:$0xff]
      %v1639 = vld [vmem:[#allocation2 + $0x50] sm:$0xff]
      %v1640 = vld [vmem:[#allocation2 + $0x58] sm:$0xff]
      %v1641 = vld [vmem:[#allocation2 + $0x60] sm:$0xff]
      %v1642 = vld [vmem:[#allocation2 + $0x68] sm:$0xff]
      %v1643 = vld [vmem:[#allocation2 + $0x70] sm:$0xff]
      %v1644 = vld [vmem:[#allocation2 + $0x78] sm:$0xff]
      %v1645 = vld [vmem:[#allocation2 + $0x80] sm:$0xff]
      %v1646 = vld [vmem:[#allocation2 + $0x88] sm:$0xff]
      %v1647 = vld [vmem:[#allocation2 + $0x90] sm:$0xff]
      %v1648 = vld [vmem:[#allocation2 + $0x98] sm:$0xff]
      %v1649 = vld [vmem:[#allocation2 + $0xa0] sm:$0xff]
      %v1650 = vld [vmem:[#allocation2 + $0xa8] sm:$0xff]
      %v1651 = vld [vmem:[#allocation2 + $0xb0] sm:$0xff]
      %v1652 = vld [vmem:[#allocation2 + $0xb8] sm:$0xff]
      %1661 = vrot.lane.b32.xlu0 %v1621, 32
      %v1662 = vpop.permute.xlu0 %1661
      %1663 = vrot.lane.b32.xlu0 %v1622, 32
      %v1664 = vpop.permute.xlu0 %1663
      %1665 = vrot.lane.b32.xlu0 %v1623, 32
      %v1666 = vpop.permute.xlu0 %1665
      %1667 = vrot.lane.b32.xlu0 %v1624, 32
      %v1668 = vpop.permute.xlu0 %1667
      %1669 = vrot.lane.b32.xlu0 %v1625, 32
      %v1670 = vpop.permute.xlu0 %1669
      %1671 = vrot.lane.b32.xlu0 %v1626, 32
      %v1672 = vpop.permute.xlu0 %1671
      %1673 = vrot.lane.b32.xlu0 %v1627, 32
      %v1674 = vpop.permute.xlu0 %1673
      %1675 = vrot.lane.b32.xlu0 %v1628, 32
      %v1676 = vpop.permute.xlu0 %1675
      %v1677 = vsel %vm966, %v1662, %v1664
      %v1678 = vsel %vm966, %v1666, %v1668
      %v1679 = vsel %vm966, %v1670, %v1672
      %v1680 = vsel %vm966, %v1674, %v1676
      %vm1681 = vcmask 785408
      %v1682 = vsel %vm1681, %v1677, 0
      %v1684 = vsel %vm1681, %v1678, 0
      %v1686 = vsel %vm1681, %v1679, 0
      %v1688 = vsel %vm1681, %v1680, 0
      %1690 = vmatprep.subr.mxu0 %v1630
      %1691 = vmatpush1.msra.mxu0 %v1629
      %1692 = vmatprep.subr.mxu0 %v1632
      %1693 = vmatpush1.msra.mxu0 %v1631
      %1694 = vmatprep.subr.mxu0 %v1634
      %1695 = vmatpush1.msra.mxu0 %v1633
      %1696 = vmatprep.subr.mxu0 %v1636
      %1697 = vmatpush1.msra.mxu0 %v1635
      %1698 = vmatprep.subr.mxu0 %v1638
      %1699 = vmatpush1.msra.mxu0 %v1637
      %1700 = vmatprep.subr.mxu0 %v1640
      %1701 = vmatpush1.msra.mxu0 %v1639
      %1702 = vmatprep.subr.mxu0 %v1642
      %1703 = vmatpush1.msra.mxu0 %v1641
      %1704 = vmatprep.subr.mxu0 %v1644
      %1705 = vmatpush1.msra.mxu0 %v1643
      %1706 = vmatprep.subr.mxu0 %v1646
      %1707 = vmatpush1.msra.mxu0 %v1645
      %1708 = vmatprep.subr.mxu0 %v1648
      %1709 = vmatpush1.msra.mxu0 %v1647
      %1710 = vmatprep.subr.mxu0 %v1650
      %1711 = vmatpush1.msra.mxu0 %v1649
      %1712 = vmatprep.subr.mxu0 %v1652
      %1713 = vmatpush1.msra.mxu0 %v1651
      %1714 = vmatprep.subr.mxu0 0.0
      %1715 = vmatpush1.msra.mxu0 0.0
      %1716 = vmatprep.subr.mxu0 0.0
      %1717 = vmatpush1.msra.mxu0 0.0
      %1718 = vmatprep.subr.mxu0 0.0
      %1719 = vmatpush1.msra.mxu0 0.0
      %1720 = vmatprep.subr.mxu0 0.0
      %1721 = vmatpush1.msra.mxu0 0.0
      %1722 = vmatprep.subr.mxu0 0.0
      %1723 = vmatpush1.msra.mxu0 0.0
      %1724 = vmatprep.subr.mxu0 0.0
      %1725 = vmatpush1.msra.mxu0 0.0
      %1726 = vmatprep.subr.mxu0 0.0
      %1727 = vmatpush1.msra.mxu0 0.0
      %1728 = vmatprep.subr.mxu0 0.0
      %1729 = vmatpush1.msra.mxu0 0.0
      %1730 = vmatprep.subr.mxu0 0.0
      %1731 = vmatpush1.msra.mxu0 0.0
      %1732 = vmatprep.subr.mxu0 0.0
      %1733 = vmatpush1.msra.mxu0 0.0
      %1734 = vmatprep.subr.mxu0 0.0
      %1735 = vmatpush1.msra.mxu0 0.0
      %1736 = vmatprep.subr.mxu0 0.0
      %1737 = vmatpush1.msra.mxu0 0.0
      %1738 = vmatprep.subr.mxu0 0.0
      %1739 = vmatpush1.msra.mxu0 0.0
      %1740 = vmatprep.subr.mxu0 0.0
      %1741 = vmatpush1.msra.mxu0 0.0
      %1742 = vmatprep.subr.mxu0 0.0
      %1743 = vmatpush1.msra.mxu0 0.0
      %1744 = vmatprep.subr.mxu0 0.0
      %1745 = vmatpush1.msra.mxu0 0.0
      %1746 = vmatprep.subr.mxu0 0.0
      %1747 = vmatpush1.msra.mxu0 0.0
      %1748 = vmatprep.subr.mxu0 0.0
      %1749 = vmatpush1.msra.mxu0 0.0
      %1750 = vmatprep.subr.mxu0 0.0
      %1751 = vmatpush1.msra.mxu0 0.0
      %1752 = vmatprep.subr.mxu0 0.0
      %1753 = vmatpush1.msra.mxu0 0.0
      %1754 = vmatprep.mubr.f32.mxu0 0.0
      %1755 = vmatmul.mubr.f32.gmra.mrb[0].mxu0 %v1682
      %v1756 = vpop.f32.mrb[0].mxu0
      %v1757 = vadd.f32 0.0, %v1756
      %v1758 = vpop.f32.mrb[0].mxu0
      %v1759 = vadd.f32 0.0, %v1758
      %1760 = vmatprep.mubr.f32.mxu0 0.0
      %1761 = vmatmul.mubr.f32.gmra.mrb[0].mxu0 %v1684
      %v1762 = vpop.f32.mrb[0].mxu0
      %v1763 = vadd.f32 0.0, %v1762
      %v1764 = vpop.f32.mrb[0].mxu0
      %v1765 = vadd.f32 0.0, %v1764
      %1766 = vmatprep.mubr.f32.mxu0 0.0
      %1767 = vmatmul.mubr.f32.gmra.mrb[0].mxu0 %v1686
      %v1768 = vpop.f32.mrb[0].mxu0
      %v1769 = vadd.f32 0.0, %v1768
      %v1770 = vpop.f32.mrb[0].mxu0
      %v1771 = vadd.f32 0.0, %v1770
      %1772 = vmatprep.mubr.f32.mxu0 0.0
      %1773 = vmatmul.mubr.f32.gmra.mrb[0].mxu0 %v1688
      %v1774 = vpop.f32.mrb[0].mxu0
      %v1775 = vadd.f32 0.0, %v1774
      %v1776 = vpop.f32.mrb[0].mxu0
      %v1777 = vadd.f32 0.0, %v1776
      %1778 = vdwg.mxu0
      %v1780 = vsel %vm1681, %v1479, 0
      %v1783 = vsel %vm1681, %v1480, 0
      %v1786 = vsel %vm1681, %v1481, 0
      %v1789 = vsel %vm1681, %v1482, 0
      %1791 = vmatprep.subr.mxu0 %v1484
      %1792 = vmatpush1.msra.mxu0 %v1483
      %1793 = vmatprep.subr.mxu0 %v1486
      %1794 = vmatpush1.msra.mxu0 %v1485
      %1795 = vmatprep.subr.mxu0 %v1488
      %1796 = vmatpush1.msra.mxu0 %v1487
      %1797 = vmatprep.subr.mxu0 %v1490
      %1798 = vmatpush1.msra.mxu0 %v1489
      %1799 = vmatprep.subr.mxu0 %v1492
      %1800 = vmatpush1.msra.mxu0 %v1491
      %1801 = vmatprep.subr.mxu0 %v1494
      %1802 = vmatpush1.msra.mxu0 %v1493
      %1803 = vmatprep.subr.mxu0 %v1496
      %1804 = vmatpush1.msra.mxu0 %v1495
      %1805 = vmatprep.subr.mxu0 %v1498
      %1806 = vmatpush1.msra.mxu0 %v1497
      %1807 = vmatprep.subr.mxu0 %v1500
      %1808 = vmatpush1.msra.mxu0 %v1499
      %1809 = vmatprep.subr.mxu0 %v1502
      %1810 = vmatpush1.msra.mxu0 %v1501
      %1811 = vmatprep.subr.mxu0 %v1504
      %1812 = vmatpush1.msra.mxu0 %v1503
      %1813 = vmatprep.subr.mxu0 %v1506
      %1814 = vmatpush1.msra.mxu0 %v1505
      %1815 = vmatprep.subr.mxu0 0.0
      %1816 = vmatpush1.msra.mxu0 0.0
      %1817 = vmatprep.subr.mxu0 0.0
      %1818 = vmatpush1.msra.mxu0 0.0
      %1819 = vmatprep.subr.mxu0 0.0
      %1820 = vmatpush1.msra.mxu0 0.0
      %1821 = vmatprep.subr.mxu0 0.0
      %1822 = vmatpush1.msra.mxu0 0.0
      %1823 = vmatprep.subr.mxu0 0.0
      %1824 = vmatpush1.msra.mxu0 0.0
      %1825 = vmatprep.subr.mxu0 0.0
      %1826 = vmatpush1.msra.mxu0 0.0
      %1827 = vmatprep.subr.mxu0 0.0
      %1828 = vmatpush1.msra.mxu0 0.0
      %1829 = vmatprep.subr.mxu0 0.0
      %1830 = vmatpush1.msra.mxu0 0.0
      %1831 = vmatprep.subr.mxu0 0.0
      %1832 = vmatpush1.msra.mxu0 0.0
      %1833 = vmatprep.subr.mxu0 0.0
      %1834 = vmatpush1.msra.mxu0 0.0
      %1835 = vmatprep.subr.mxu0 0.0
      %1836 = vmatpush1.msra.mxu0 0.0
      %1837 = vmatprep.subr.mxu0 0.0
      %1838 = vmatpush1.msra.mxu0 0.0
      %1839 = vmatprep.subr.mxu0 0.0
      %1840 = vmatpush1.msra.mxu0 0.0
      %1841 = vmatprep.subr.mxu0 0.0
      %1842 = vmatpush1.msra.mxu0 0.0
      %1843 = vmatprep.subr.mxu0 0.0
      %1844 = vmatpush1.msra.mxu0 0.0
      %1845 = vmatprep.subr.mxu0 0.0
      %1846 = vmatpush1.msra.mxu0 0.0
      %1847 = vmatprep.subr.mxu0 0.0
      %1848 = vmatpush1.msra.mxu0 0.0
      %1849 = vmatprep.subr.mxu0 0.0
      %1850 = vmatpush1.msra.mxu0 0.0
      %1851 = vmatprep.subr.mxu0 0.0
      %1852 = vmatpush1.msra.mxu0 0.0
      %1853 = vmatprep.subr.mxu0 0.0
      %1854 = vmatpush1.msra.mxu0 0.0
      %1855 = vmatprep.mubr.f32.mxu0 0.0
      %1856 = vmatmul.mubr.f32.gmra.mrb[0].mxu0 %v1780
      %v1857 = vpop.f32.mrb[0].mxu0
      %v1858 = vadd.f32 %v1757, %v1857
      %v1859 = vpop.f32.mrb[0].mxu0
      %v1860 = vadd.f32 %v1759, %v1859
      %1861 = vmatprep.mubr.f32.mxu0 0.0
      %1862 = vmatmul.mubr.f32.gmra.mrb[0].mxu0 %v1783
      %v1863 = vpop.f32.mrb[0].mxu0
      %v1864 = vadd.f32 %v1763, %v1863
      %v1865 = vpop.f32.mrb[0].mxu0
      %v1866 = vadd.f32 %v1765, %v1865
      %1867 = vmatprep.mubr.f32.mxu0 0.0
      %1868 = vmatmul.mubr.f32.gmra.mrb[0].mxu0 %v1786
      %v1869 = vpop.f32.mrb[0].mxu0
      %v1870 = vadd.f32 %v1769, %v1869
      %v1871 = vpop.f32.mrb[0].mxu0
      %v1872 = vadd.f32 %v1771, %v1871
      %1873 = vmatprep.mubr.f32.mxu0 0.0
      %1874 = vmatmul.mubr.f32.gmra.mrb[0].mxu0 %v1789
      %v1875 = vpop.f32.mrb[0].mxu0
      %v1876 = vadd.f32 %v1775, %v1875
      %v1877 = vpop.f32.mrb[0].mxu0
      %v1878 = vadd.f32 %v1777, %v1877
      %1879 = vdwg.mxu0
      %1880 = vrot.lane.b32.xlu0 %v1312, 113
      %v1881 = vpop.permute.xlu0 %1880
      %1882 = vrot.lane.b32.xlu0 %v1314, 113
      %v1883 = vpop.permute.xlu0 %1882
      %1884 = vrot.lane.b32.xlu0 %v1316, 113
      %v1885 = vpop.permute.xlu0 %1884
      %1886 = vrot.lane.b32.xlu0 %v1318, 113
      %v1887 = vpop.permute.xlu0 %1886
      %1888 = vrot.lane.b32.xlu0 %v1313, 113
      %v1889 = vpop.permute.xlu0 %1888
      %1890 = vrot.lane.b32.xlu0 %v1315, 113
      %v1891 = vpop.permute.xlu0 %1890
      %1892 = vrot.lane.b32.xlu0 %v1317, 113
      %v1893 = vpop.permute.xlu0 %1892
      %1894 = vrot.lane.b32.xlu0 %v1319, 113
      %v1895 = vpop.permute.xlu0 %1894
      %v1896 = vsel %vm699, %v1881, %v1889
      %v1897 = vsel %vm699, %v1883, %v1891
      %v1898 = vsel %vm699, %v1885, %v1893
      %v1899 = vsel %vm699, %v1887, %v1895
      %v1900 = vsel %vm699, %v1889, %v1881
      %v1901 = vsel %vm699, %v1891, %v1883
      %v1902 = vsel %vm699, %v1893, %v1885
      %v1903 = vsel %vm699, %v1895, %v1887
      %v1904 = vld [vmem:[%s702] ss:$8 sm:$0x3]
      %vm1905 = vcmp.ne.f32.partialorder %v1904, 0.0
      %v1906 = vsel %vm1905, 1, 0
      %v1907 = vlaneseq
      %v1908 = vshrl.u32 %v1907, 7
      %v1909 = vsub.s32 0, %v1908
      %v1910 = vrot.slane %v1906, %v1909
      %v1911 = vlaneseq
      %v1912 = vshrl.u32 %v1911, 7
      %v1913 = vsub.s32 1, %v1912
      %v1914 = vrot.slane %v1906, %v1913
      %vm1915 = vcmp.eq.s32.totalorder %v1910, 1
      %vm1916 = vcmp.eq.s32.totalorder %v1914, 1
      %v1917 = vsel %vm1915, %v1896, 0.0
      %v1918 = vsel %vm1916, %v1900, 0.0
      %v1919 = vsel %vm1915, %v1897, 0.0
      %v1920 = vsel %vm1916, %v1901, 0.0
      %v1921 = vsel %vm1915, %v1898, 0.0
      %v1922 = vsel %vm1916, %v1902, 0.0
      %v1923 = vsel %vm1915, %v1899, 0.0
      %v1924 = vsel %vm1916, %v1903, 0.0
      %1925 = vst [vmem:[#allocation2] sm:$0xff] %v1917
      %1926 = vst [vmem:[#allocation2 + $0x8] sm:$0xff] %v1918
      %1927 = vst [vmem:[#allocation2 + $0x10] sm:$0xff] %v1919
      %1928 = vst [vmem:[#allocation2 + $0x18] sm:$0xff] %v1920
      %1929 = vst [vmem:[#allocation2 + $0x20] sm:$0xff] %v1921
      %1930 = vst [vmem:[#allocation2 + $0x28] sm:$0xff] %v1922
      %1931 = vst [vmem:[#allocation2 + $0x30] sm:$0xff] %v1923
      %1932 = vst [vmem:[#allocation2 + $0x38] sm:$0xff] %v1924
      %1933 = vrot.lane.b32.xlu0 %v1312, 112
      %v1934 = vpop.permute.xlu0 %1933
      %1935 = vrot.lane.b32.xlu0 %v1314, 112
      %v1936 = vpop.permute.xlu0 %1935
      %1937 = vrot.lane.b32.xlu0 %v1316, 112
      %v1938 = vpop.permute.xlu0 %1937
      %1939 = vrot.lane.b32.xlu0 %v1318, 112
      %v1940 = vpop.permute.xlu0 %1939
      %1941 = vrot.lane.b32.xlu0 %v1313, 112
      %v1942 = vpop.permute.xlu0 %1941
      %1943 = vrot.lane.b32.xlu0 %v1315, 112
      %v1944 = vpop.permute.xlu0 %1943
      %1945 = vrot.lane.b32.xlu0 %v1317, 112
      %v1946 = vpop.permute.xlu0 %1945
      %1947 = vrot.lane.b32.xlu0 %v1319, 112
      %v1948 = vpop.permute.xlu0 %1947
      %v1949 = vsel %vm724, %v1934, %v1942
      %v1950 = vsel %vm724, %v1936, %v1944
      %v1951 = vsel %vm724, %v1938, %v1946
      %v1952 = vsel %vm724, %v1940, %v1948
      %v1953 = vsel %vm724, %v1942, %v1934
      %v1954 = vsel %vm724, %v1944, %v1936
      %v1955 = vsel %vm724, %v1946, %v1938
      %v1956 = vsel %vm724, %v1948, %v1940
      %v1957 = vld [vmem:[%s727] ss:$8 sm:$0x3]
      %vm1958 = vcmp.ne.f32.partialorder %v1957, 0.0
      %v1959 = vsel %vm1958, 1, 0
      %v1960 = vlaneseq
      %v1961 = vshrl.u32 %v1960, 7
      %v1962 = vsub.s32 0, %v1961
      %v1963 = vrot.slane %v1959, %v1962
      %v1964 = vlaneseq
      %v1965 = vshrl.u32 %v1964, 7
      %v1966 = vsub.s32 1, %v1965
      %v1967 = vrot.slane %v1959, %v1966
      %vm1968 = vcmp.eq.s32.totalorder %v1963, 1
      %vm1969 = vcmp.eq.s32.totalorder %v1967, 1
      %v1970 = vsel %vm1968, %v1949, 0.0
      %v1971 = vsel %vm1969, %v1953, 0.0
      %v1972 = vsel %vm1968, %v1950, 0.0
      %v1973 = vsel %vm1969, %v1954, 0.0
      %v1974 = vsel %vm1968, %v1951, 0.0
      %v1975 = vsel %vm1969, %v1955, 0.0
      %v1976 = vsel %vm1968, %v1952, 0.0
      %v1977 = vsel %vm1969, %v1956, 0.0
      %1978 = vst [vmem:[#allocation2 + $0x40] sm:$0xff] %v1970
      %1979 = vst [vmem:[#allocation2 + $0x48] sm:$0xff] %v1971
      %1980 = vst [vmem:[#allocation2 + $0x50] sm:$0xff] %v1972
      %1981 = vst [vmem:[#allocation2 + $0x58] sm:$0xff] %v1973
      %1982 = vst [vmem:[#allocation2 + $0x60] sm:$0xff] %v1974
      %1983 = vst [vmem:[#allocation2 + $0x68] sm:$0xff] %v1975
      %1984 = vst [vmem:[#allocation2 + $0x70] sm:$0xff] %v1976
      %1985 = vst [vmem:[#allocation2 + $0x78] sm:$0xff] %v1977
      %1986 = vrot.lane.b32.xlu0 %v1312, 111
      %v1987 = vpop.permute.xlu0 %1986
      %1988 = vrot.lane.b32.xlu0 %v1314, 111
      %v1989 = vpop.permute.xlu0 %1988
      %1990 = vrot.lane.b32.xlu0 %v1316, 111
      %v1991 = vpop.permute.xlu0 %1990
      %1992 = vrot.lane.b32.xlu0 %v1318, 111
      %v1993 = vpop.permute.xlu0 %1992
      %1994 = vrot.lane.b32.xlu0 %v1313, 111
      %v1995 = vpop.permute.xlu0 %1994
      %1996 = vrot.lane.b32.xlu0 %v1315, 111
      %v1997 = vpop.permute.xlu0 %1996
      %1998 = vrot.lane.b32.xlu0 %v1317, 111
      %v1999 = vpop.permute.xlu0 %1998
      %2000 = vrot.lane.b32.xlu0 %v1319, 111
      %v2001 = vpop.permute.xlu0 %2000
      %v2002 = vsel %vm749, %v1987, %v1995
      %v2003 = vsel %vm749, %v1989, %v1997
      %v2004 = vsel %vm749, %v1991, %v1999
      %v2005 = vsel %vm749, %v1993, %v2001
      %v2006 = vsel %vm749, %v1995, %v1987
      %v2007 = vsel %vm749, %v1997, %v1989
      %v2008 = vsel %vm749, %v1999, %v1991
      %v2009 = vsel %vm749, %v2001, %v1993
      %v2010 = vld [vmem:[%s752] ss:$8 sm:$0x3]
      %vm2011 = vcmp.ne.f32.partialorder %v2010, 0.0
      %v2012 = vsel %vm2011, 1, 0
      %v2013 = vlaneseq
      %v2014 = vshrl.u32 %v2013, 7
      %v2015 = vsub.s32 0, %v2014
      %v2016 = vrot.slane %v2012, %v2015
      %v2017 = vlaneseq
      %v2018 = vshrl.u32 %v2017, 7
      %v2019 = vsub.s32 1, %v2018
      %v2020 = vrot.slane %v2012, %v2019
      %vm2021 = vcmp.eq.s32.totalorder %v2016, 1
      %vm2022 = vcmp.eq.s32.totalorder %v2020, 1
      %v2023 = vsel %vm2021, %v2002, 0.0
      %v2024 = vsel %vm2022, %v2006, 0.0
      %v2025 = vsel %vm2021, %v2003, 0.0
      %v2026 = vsel %vm2022, %v2007, 0.0
      %v2027 = vsel %vm2021, %v2004, 0.0
      %v2028 = vsel %vm2022, %v2008, 0.0
      %v2029 = vsel %vm2021, %v2005, 0.0
      %v2030 = vsel %vm2022, %v2009, 0.0
      %2031 = vst [vmem:[#allocation2 + $0x80] sm:$0xff] %v2023
      %2032 = vst [vmem:[#allocation2 + $0x88] sm:$0xff] %v2024
      %2033 = vst [vmem:[#allocation2 + $0x90] sm:$0xff] %v2025
      %2034 = vst [vmem:[#allocation2 + $0x98] sm:$0xff] %v2026
      %2035 = vst [vmem:[#allocation2 + $0xa0] sm:$0xff] %v2027
      %2036 = vst [vmem:[#allocation2 + $0xa8] sm:$0xff] %v2028
      %2037 = vst [vmem:[#allocation2 + $0xb0] sm:$0xff] %v2029
      %2038 = vst [vmem:[#allocation2 + $0xb8] sm:$0xff] %v2030
      %v2039 = vld [vmem:[%s4 + $0x8] sm:$0xff]
      %v2040 = vld [vmem:[%s4 + $0x10] sm:$0xff]
      %v2041 = vld [vmem:[%s4 + $0x20] sm:$0xff]
      %v2042 = vld [vmem:[%s4 + $0x28] sm:$0xff]
      %v2043 = vld [vmem:[%s4 + $0x38] sm:$0xff]
      %v2044 = vld [vmem:[%s4 + $0x40] sm:$0xff]
      %v2045 = vld [vmem:[%s4 + $0x50] sm:$0xff]
      %v2046 = vld [vmem:[%s4 + $0x58] sm:$0xff]
      %v2047 = vld [vmem:[#allocation2] sm:$0xff]
      %v2048 = vld [vmem:[#allocation2 + $0x8] sm:$0xff]
      %v2049 = vld [vmem:[#allocation2 + $0x10] sm:$0xff]
      %v2050 = vld [vmem:[#allocation2 + $0x18] sm:$0xff]
      %v2051 = vld [vmem:[#allocation2 + $0x20] sm:$0xff]
      %v2052 = vld [vmem:[#allocation2 + $0x28] sm:$0xff]
      %v2053 = vld [vmem:[#allocation2 + $0x30] sm:$0xff]
      %v2054 = vld [vmem:[#allocation2 + $0x38] sm:$0xff]
      %v2055 = vld [vmem:[#allocation2 + $0x40] sm:$0xff]
      %v2056 = vld [vmem:[#allocation2 + $0x48] sm:$0xff]
      %v2057 = vld [vmem:[#allocation2 + $0x50] sm:$0xff]
      %v2058 = vld [vmem:[#allocation2 + $0x58] sm:$0xff]
      %v2059 = vld [vmem:[#allocation2 + $0x60] sm:$0xff]
      %v2060 = vld [vmem:[#allocation2 + $0x68] sm:$0xff]
      %v2061 = vld [vmem:[#allocation2 + $0x70] sm:$0xff]
      %v2062 = vld [vmem:[#allocation2 + $0x78] sm:$0xff]
      %v2063 = vld [vmem:[#allocation2 + $0x80] sm:$0xff]
      %v2064 = vld [vmem:[#allocation2 + $0x88] sm:$0xff]
      %v2065 = vld [vmem:[#allocation2 + $0x90] sm:$0xff]
      %v2066 = vld [vmem:[#allocation2 + $0x98] sm:$0xff]
      %v2067 = vld [vmem:[#allocation2 + $0xa0] sm:$0xff]
      %v2068 = vld [vmem:[#allocation2 + $0xa8] sm:$0xff]
      %v2069 = vld [vmem:[#allocation2 + $0xb0] sm:$0xff]
      %v2070 = vld [vmem:[#allocation2 + $0xb8] sm:$0xff]
      %2079 = vrot.lane.b32.xlu0 %v2039, 64
      %v2080 = vpop.permute.xlu0 %2079
      %2081 = vrot.lane.b32.xlu0 %v2040, 64
      %v2082 = vpop.permute.xlu0 %2081
      %2083 = vrot.lane.b32.xlu0 %v2041, 64
      %v2084 = vpop.permute.xlu0 %2083
      %2085 = vrot.lane.b32.xlu0 %v2042, 64
      %v2086 = vpop.permute.xlu0 %2085
      %2087 = vrot.lane.b32.xlu0 %v2043, 64
      %v2088 = vpop.permute.xlu0 %2087
      %2089 = vrot.lane.b32.xlu0 %v2044, 64
      %v2090 = vpop.permute.xlu0 %2089
      %2091 = vrot.lane.b32.xlu0 %v2045, 64
      %v2092 = vpop.permute.xlu0 %2091
      %2093 = vrot.lane.b32.xlu0 %v2046, 64
      %v2094 = vpop.permute.xlu0 %2093
      %vm2095 = vcmask 523264
      %v2096 = vsel %vm2095, %v2080, %v2082
      %v2097 = vsel %vm2095, %v2084, %v2086
      %v2098 = vsel %vm2095, %v2088, %v2090
      %v2099 = vsel %vm2095, %v2092, %v2094
      %v2100 = vsel %vm1681, %v2096, 0
      %v2102 = vsel %vm1681, %v2097, 0
      %v2104 = vsel %vm1681, %v2098, 0
      %v2106 = vsel %vm1681, %v2099, 0
      %2108 = vmatprep.subr.mxu0 %v2048
      %2109 = vmatpush1.msra.mxu0 %v2047
      %2110 = vmatprep.subr.mxu0 %v2050
      %2111 = vmatpush1.msra.mxu0 %v2049
      %2112 = vmatprep.subr.mxu0 %v2052
      %2113 = vmatpush1.msra.mxu0 %v2051
      %2114 = vmatprep.subr.mxu0 %v2054
      %2115 = vmatpush1.msra.mxu0 %v2053
      %2116 = vmatprep.subr.mxu0 %v2056
      %2117 = vmatpush1.msra.mxu0 %v2055
      %2118 = vmatprep.subr.mxu0 %v2058
      %2119 = vmatpush1.msra.mxu0 %v2057
      %2120 = vmatprep.subr.mxu0 %v2060
      %2121 = vmatpush1.msra.mxu0 %v2059
      %2122 = vmatprep.subr.mxu0 %v2062
      %2123 = vmatpush1.msra.mxu0 %v2061
      %2124 = vmatprep.subr.mxu0 %v2064
      %2125 = vmatpush1.msra.mxu0 %v2063
      %2126 = vmatprep.subr.mxu0 %v2066
      %2127 = vmatpush1.msra.mxu0 %v2065
      %2128 = vmatprep.subr.mxu0 %v2068
      %2129 = vmatpush1.msra.mxu0 %v2067
      %2130 = vmatprep.subr.mxu0 %v2070
      %2131 = vmatpush1.msra.mxu0 %v2069
      %2132 = vmatprep.subr.mxu0 0.0
      %2133 = vmatpush1.msra.mxu0 0.0
      %2134 = vmatprep.subr.mxu0 0.0
      %2135 = vmatpush1.msra.mxu0 0.0
      %2136 = vmatprep.subr.mxu0 0.0
      %2137 = vmatpush1.msra.mxu0 0.0
      %2138 = vmatprep.subr.mxu0 0.0
      %2139 = vmatpush1.msra.mxu0 0.0
      %2140 = vmatprep.subr.mxu0 0.0
      %2141 = vmatpush1.msra.mxu0 0.0
      %2142 = vmatprep.subr.mxu0 0.0
      %2143 = vmatpush1.msra.mxu0 0.0
      %2144 = vmatprep.subr.mxu0 0.0
      %2145 = vmatpush1.msra.mxu0 0.0
      %2146 = vmatprep.subr.mxu0 0.0
      %2147 = vmatpush1.msra.mxu0 0.0
      %2148 = vmatprep.subr.mxu0 0.0
      %2149 = vmatpush1.msra.mxu0 0.0
      %2150 = vmatprep.subr.mxu0 0.0
      %2151 = vmatpush1.msra.mxu0 0.0
      %2152 = vmatprep.subr.mxu0 0.0
      %2153 = vmatpush1.msra.mxu0 0.0
      %2154 = vmatprep.subr.mxu0 0.0
      %2155 = vmatpush1.msra.mxu0 0.0
      %2156 = vmatprep.subr.mxu0 0.0
      %2157 = vmatpush1.msra.mxu0 0.0
      %2158 = vmatprep.subr.mxu0 0.0
      %2159 = vmatpush1.msra.mxu0 0.0
      %2160 = vmatprep.subr.mxu0 0.0
      %2161 = vmatpush1.msra.mxu0 0.0
      %2162 = vmatprep.subr.mxu0 0.0
      %2163 = vmatpush1.msra.mxu0 0.0
      %2164 = vmatprep.subr.mxu0 0.0
      %2165 = vmatpush1.msra.mxu0 0.0
      %2166 = vmatprep.subr.mxu0 0.0
      %2167 = vmatpush1.msra.mxu0 0.0
      %2168 = vmatprep.subr.mxu0 0.0
      %2169 = vmatpush1.msra.mxu0 0.0
      %2170 = vmatprep.subr.mxu0 0.0
      %2171 = vmatpush1.msra.mxu0 0.0
      %2172 = vmatprep.mubr.f32.mxu0 0.0
      %2173 = vmatmul.mubr.f32.gmra.mrb[0].mxu0 %v2100
      %v2174 = vpop.f32.mrb[0].mxu0
      %v2175 = vadd.f32 0.0, %v2174
      %v2176 = vpop.f32.mrb[0].mxu0
      %v2177 = vadd.f32 0.0, %v2176
      %2178 = vmatprep.mubr.f32.mxu0 0.0
      %2179 = vmatmul.mubr.f32.gmra.mrb[0].mxu0 %v2102
      %v2180 = vpop.f32.mrb[0].mxu0
      %v2181 = vadd.f32 0.0, %v2180
      %v2182 = vpop.f32.mrb[0].mxu0
      %v2183 = vadd.f32 0.0, %v2182
      %2184 = vmatprep.mubr.f32.mxu0 0.0
      %2185 = vmatmul.mubr.f32.gmra.mrb[0].mxu0 %v2104
      %v2186 = vpop.f32.mrb[0].mxu0
      %v2187 = vadd.f32 0.0, %v2186
      %v2188 = vpop.f32.mrb[0].mxu0
      %v2189 = vadd.f32 0.0, %v2188
      %2190 = vmatprep.mubr.f32.mxu0 0.0
      %2191 = vmatmul.mubr.f32.gmra.mrb[0].mxu0 %v2106
      %v2192 = vpop.f32.mrb[0].mxu0
      %v2193 = vadd.f32 0.0, %v2192
      %v2194 = vpop.f32.mrb[0].mxu0
      %v2195 = vadd.f32 0.0, %v2194
      %2196 = vdwg.mxu0
      %v2197 = vadd.f32 %v1858, %v2175
      %v2198 = vadd.f32 %v1860, %v2177
      %v2199 = vadd.f32 %v1864, %v2181
      %v2200 = vadd.f32 %v1866, %v2183
      %v2201 = vadd.f32 %v1870, %v2187
      %v2202 = vadd.f32 %v1872, %v2189
      %v2203 = vadd.f32 %v1876, %v2193
      %v2204 = vadd.f32 %v1878, %v2195
      %2205 = vset.pattern.permute.xlu0 3
      %2206 = vperm.xlu0 %2205, %v925
      %v2207 = vpop.permute.xlu0 %2206
      %2209 = vset.pattern.permute.xlu0 3
      %2210 = vperm.xlu0 %2209, %v926
      %v2211 = vpop.permute.xlu0 %2210
      %2213 = vset.pattern.permute.xlu0 3
      %2214 = vperm.xlu0 %2213, %v927
      %v2215 = vpop.permute.xlu0 %2214
      %2217 = vset.pattern.permute.xlu0 3
      %2218 = vperm.xlu0 %2217, %v928
      %v2219 = vpop.permute.xlu0 %2218
      %v2221 = vadd.f32 %v2197, %v2207
      %v2222 = vadd.f32 %v2198, %v2207
      %v2223 = vadd.f32 %v2199, %v2211
      %v2224 = vadd.f32 %v2200, %v2211
      %v2225 = vadd.f32 %v2201, %v2215
      %v2226 = vadd.f32 %v2202, %v2215
      %v2227 = vadd.f32 %v2203, %v2219
      %v2228 = vadd.f32 %v2204, %v2219
      %v2229 = vld [vmem:[%s5] sm:$0xff]
      %v2230 = vld [vmem:[%s5 + $0x8] sm:$0xff]
      %v2231 = vld [vmem:[%s5 + $0x10] sm:$0xff]
      %v2232 = vld [vmem:[%s5 + $0x18] sm:$0xff]
      %v2233 = vadd.f32 %v2221, %v2222
      %2234 = vadd.xlane.f32.xlu0 %v2233
      %v2235 = vpop.xlane.xlu0 %2234
      %v2236 = vadd.f32 %v2223, %v2224
      %2237 = vadd.xlane.f32.xlu0 %v2236
      %v2238 = vpop.xlane.xlu0 %2237
      %v2239 = vadd.f32 %v2225, %v2226
      %2240 = vadd.xlane.f32.xlu0 %v2239
      %v2241 = vpop.xlane.xlu0 %2240
      %v2242 = vadd.f32 %v2227, %v2228
      %2243 = vadd.xlane.f32.xlu0 %v2242
      %v2244 = vpop.xlane.xlu0 %2243
      %v2245 = vmul.f32 %v2221, %v2221
      %v2246 = vmul.f32 %v2222, %v2222
      %v2247 = vmul.f32 %v2223, %v2223
      %v2248 = vmul.f32 %v2224, %v2224
      %v2249 = vmul.f32 %v2225, %v2225
      %v2250 = vmul.f32 %v2226, %v2226
      %v2251 = vmul.f32 %v2227, %v2227
      %v2252 = vmul.f32 %v2228, %v2228
      %v2253 = vadd.f32 %v2245, %v2246
      %2254 = vadd.xlane.f32.xlu0 %v2253
      %v2255 = vpop.xlane.xlu0 %2254
      %v2256 = vadd.f32 %v2247, %v2248
      %2257 = vadd.xlane.f32.xlu0 %v2256
      %v2258 = vpop.xlane.xlu0 %2257
      %v2259 = vadd.f32 %v2249, %v2250
      %2260 = vadd.xlane.f32.xlu0 %v2259
      %v2261 = vpop.xlane.xlu0 %2260
      %v2262 = vadd.f32 %v2251, %v2252
      %2263 = vadd.xlane.f32.xlu0 %v2262
      %v2264 = vpop.xlane.xlu0 %2263
      %v2265 = vsel %vm961, %v2235, %v2255
      %v2266 = vsel %vm961, %v2238, %v2258
      %v2267 = vsel %vm961, %v2241, %v2261
      %v2268 = vsel %vm961, %v2244, %v2264
      %2269 = vmatprep.subr.mxu0 0.0
      %2270 = vmatpush1.msra.mxu0 %v2265
      %2271 = vmatprep.subr.mxu0 0.0
      %2272 = vmatpush1.msra.mxu0 %v2266
      %2273 = vmatprep.subr.mxu0 0.0
      %2274 = vmatpush1.msra.mxu0 %v2267
      %2275 = vmatprep.subr.mxu0 0.0
      %2276 = vmatpush1.msra.mxu0 %v2268
      %2277 = vmatprep.subr.mxu0 0.0
      %2278 = vmatpush1.msra.mxu0 0.0
      %2279 = vmatprep.subr.mxu0 0.0
      %2280 = vmatpush1.msra.mxu0 0.0
      %2281 = vmatprep.subr.mxu0 0.0
      %2282 = vmatpush1.msra.mxu0 0.0
      %2283 = vmatprep.subr.mxu0 0.0
      %2284 = vmatpush1.msra.mxu0 0.0
      %2285 = vmatprep.subr.mxu0 0.0
      %2286 = vmatpush1.msra.mxu0 0.0
      %2287 = vmatprep.subr.mxu0 0.0
      %2288 = vmatpush1.msra.mxu0 0.0
      %2289 = vmatprep.subr.mxu0 0.0
      %2290 = vmatpush1.msra.mxu0 0.0
      %2291 = vmatprep.subr.mxu0 0.0
      %2292 = vmatpush1.msra.mxu0 0.0
      %2293 = vmatprep.subr.mxu0 0.0
      %2294 = vmatpush1.msra.mxu0 0.0
      %2295 = vmatprep.subr.mxu0 0.0
      %2296 = vmatpush1.msra.mxu0 0.0
      %2297 = vmatprep.subr.mxu0 0.0
      %2298 = vmatpush1.msra.mxu0 0.0
      %2299 = vmatprep.subr.mxu0 0.0
      %2300 = vmatpush1.msra.mxu0 0.0
      %2301 = vmatprep.subr.mxu0 0.0
      %2302 = vmatpush1.msra.mxu0 0.0
      %2303 = vmatprep.subr.mxu0 0.0
      %2304 = vmatpush1.msra.mxu0 0.0
      %2305 = vmatprep.subr.mxu0 0.0
      %2306 = vmatpush1.msra.mxu0 0.0
      %2307 = vmatprep.subr.mxu0 0.0
      %2308 = vmatpush1.msra.mxu0 0.0
      %2309 = vmatprep.subr.mxu0 0.0
      %2310 = vmatpush1.msra.mxu0 0.0
      %2311 = vmatprep.subr.mxu0 0.0
      %2312 = vmatpush1.msra.mxu0 0.0
      %2313 = vmatprep.subr.mxu0 0.0
      %2314 = vmatpush1.msra.mxu0 0.0
      %2315 = vmatprep.subr.mxu0 0.0
      %2316 = vmatpush1.msra.mxu0 0.0
      %2317 = vmatprep.subr.mxu0 0.0
      %2318 = vmatpush1.msra.mxu0 0.0
      %2319 = vmatprep.subr.mxu0 0.0
      %2320 = vmatpush1.msra.mxu0 0.0
      %2321 = vmatprep.subr.mxu0 0.0
      %2322 = vmatpush1.msra.mxu0 0.0
      %2323 = vmatprep.subr.mxu0 0.0
      %2324 = vmatpush1.msra.mxu0 0.0
      %2325 = vmatprep.subr.mxu0 0.0
      %2326 = vmatpush1.msra.mxu0 0.0
      %2327 = vmatprep.subr.mxu0 0.0
      %2328 = vmatpush1.msra.mxu0 0.0
      %2329 = vmatprep.subr.mxu0 0.0
      %2330 = vmatpush1.msra.mxu0 0.0
      %2331 = vmatprep.subr.mxu0 0.0
      %2332 = vmatpush1.msra.mxu0 0.0
      %2333 = vmatprep.mubr.f32.mxu0 0.0
      %2334 = vmatmul.mubr.f32.gmra.mrb[0].mxu0 %v968
      %v2335 = vpop.f32.mrb[0].mxu0
      %v2336 = vadd.f32 0.0, %v2335
      %v2337 = vpop.f32.mrb[0].mxu0
      %2338 = vmatprep.mubr.f32.mxu0 0.0
      %2339 = vmatmul.mubr.f32.gmra.mrb[0].mxu0 %v971
      %v2340 = vpop.f32.mrb[0].mxu0
      %v2341 = vadd.f32 0.0, %v2340
      %v2342 = vpop.f32.mrb[0].mxu0
      %2343 = vmatprep.mubr.f32.mxu0 0.0
      %2344 = vmatmul.mubr.f32.gmra.mrb[0].mxu0 %v974
      %v2345 = vpop.f32.mrb[0].mxu0
      %v2346 = vadd.f32 0.0, %v2345
      %v2347 = vpop.f32.mrb[0].mxu0
      %2348 = vmatprep.mubr.f32.mxu0 0.0
      %2349 = vmatmul.mubr.f32.gmra.mrb[0].mxu0 %v977
      %v2350 = vpop.f32.mrb[0].mxu0
      %v2351 = vadd.f32 0.0, %v2350
      %v2352 = vpop.f32.mrb[0].mxu0
      %2353 = vdwg.mxu0
      %v2354 = vmul.f32 %v2336, 0.0009765625
      %v2355 = vmul.f32 %v2341, 0.0009765625
      %v2356 = vmul.f32 %v2346, 0.0009765625
      %v2357 = vmul.f32 %v2351, 0.0009765625
      %v2358 = vmul.f32 %v2354, %v2354
      %v2359 = vmul.f32 %v2355, %v2355
      %v2360 = vmul.f32 %v2356, %v2356
      %v2361 = vmul.f32 %v2357, %v2357
      %2366 = vrot.lane.b32.xlu0 %v2358, 1
      %v2367 = vpop.permute.xlu0 %2366
      %2368 = vrot.lane.b32.xlu0 %v2359, 1
      %v2369 = vpop.permute.xlu0 %2368
      %2370 = vrot.lane.b32.xlu0 %v2360, 1
      %v2371 = vpop.permute.xlu0 %2370
      %2372 = vrot.lane.b32.xlu0 %v2361, 1
      %v2373 = vpop.permute.xlu0 %2372
      %v2378 = vsub.f32 %v2354, %v2367
      %v2379 = vsub.f32 %v2355, %v2369
      %v2380 = vsub.f32 %v2356, %v2371
      %v2381 = vsub.f32 %v2357, %v2373
      %2383 = vset.pattern.permute.xlu0 0
      %2384 = vperm.xlu0 %2383, %v2354
      %v2385 = vpop.permute.xlu0 %2384
      %2388 = vset.pattern.permute.xlu0 0
      %2389 = vperm.xlu0 %2388, %v2355
      %v2390 = vpop.permute.xlu0 %2389
      %2393 = vset.pattern.permute.xlu0 0
      %2394 = vperm.xlu0 %2393, %v2356
      %v2395 = vpop.permute.xlu0 %2394
      %2398 = vset.pattern.permute.xlu0 0
      %2399 = vperm.xlu0 %2398, %v2357
      %v2400 = vpop.permute.xlu0 %2399
      %v2402 = vsub.f32 %v2221, %v2385
      %v2403 = vsub.f32 %v2222, %v2385
      %v2404 = vsub.f32 %v2223, %v2390
      %v2405 = vsub.f32 %v2224, %v2390
      %v2406 = vsub.f32 %v2225, %v2395
      %v2407 = vsub.f32 %v2226, %v2395
      %v2408 = vsub.f32 %v2227, %v2400
      %v2409 = vsub.f32 %v2228, %v2400
      %v2410 = vadd.f32 %v2378, 1e-05
      %v2411 = vadd.f32 %v2379, 1e-05
      %v2412 = vadd.f32 %v2380, 1e-05
      %v2413 = vadd.f32 %v2381, 1e-05
      %v2414 = vrsqrt.pop %v2410
      %v2415 = vrsqrt.pop %v2411
      %v2416 = vrsqrt.pop %v2412
      %v2417 = vrsqrt.pop %v2413
      %2419 = vset.pattern.permute.xlu0 1
      %2420 = vperm.xlu0 %2419, %v2414
      %v2421 = vpop.permute.xlu0 %2420
      %2424 = vset.pattern.permute.xlu0 1
      %2425 = vperm.xlu0 %2424, %v2415
      %v2426 = vpop.permute.xlu0 %2425
      %2429 = vset.pattern.permute.xlu0 1
      %2430 = vperm.xlu0 %2429, %v2416
      %v2431 = vpop.permute.xlu0 %2430
      %2434 = vset.pattern.permute.xlu0 1
      %2435 = vperm.xlu0 %2434, %v2417
      %v2436 = vpop.permute.xlu0 %2435
      %v2438 = vmul.f32 %v2402, %v2421
      %v2439 = vmul.f32 %v2403, %v2421
      %v2440 = vmul.f32 %v2404, %v2426
      %v2441 = vmul.f32 %v2405, %v2426
      %v2442 = vmul.f32 %v2406, %v2431
      %v2443 = vmul.f32 %v2407, %v2431
      %v2444 = vmul.f32 %v2408, %v2436
      %v2445 = vmul.f32 %v2409, %v2436
      %2447 = vset.pattern.permute.xlu0 4
      %2448 = vperm.xlu0 %2447, %v2229
      %v2449 = vpop.permute.xlu0 %2448
      %2452 = vset.pattern.permute.xlu0 4
      %2453 = vperm.xlu0 %2452, %v2230
      %v2454 = vpop.permute.xlu0 %2453
      %2457 = vset.pattern.permute.xlu0 4
      %2458 = vperm.xlu0 %2457, %v2231
      %v2459 = vpop.permute.xlu0 %2458
      %2462 = vset.pattern.permute.xlu0 4
      %2463 = vperm.xlu0 %2462, %v2232
      %v2464 = vpop.permute.xlu0 %2463
      %v2466 = vmul.f32 %v2438, %v2449
      %v2467 = vmul.f32 %v2439, %v2449
      %v2468 = vmul.f32 %v2440, %v2454
      %v2469 = vmul.f32 %v2441, %v2454
      %v2470 = vmul.f32 %v2442, %v2459
      %v2471 = vmul.f32 %v2443, %v2459
      %v2472 = vmul.f32 %v2444, %v2464
      %v2473 = vmul.f32 %v2445, %v2464
      %2474 = vset.pattern.permute.xlu0 5
      %2475 = vperm.xlu0 %2474, %v2229
      %v2476 = vpop.permute.xlu0 %2475
      %2478 = vset.pattern.permute.xlu0 5
      %2479 = vperm.xlu0 %2478, %v2230
      %v2480 = vpop.permute.xlu0 %2479
      %2482 = vset.pattern.permute.xlu0 5
      %2483 = vperm.xlu0 %2482, %v2231
      %v2484 = vpop.permute.xlu0 %2483
      %2486 = vset.pattern.permute.xlu0 5
      %2487 = vperm.xlu0 %2486, %v2232
      %v2488 = vpop.permute.xlu0 %2487
      %v2490 = vadd.f32 %v2466, %v2476
      %v2491 = vadd.f32 %v2467, %v2476
      %v2492 = vadd.f32 %v2468, %v2480
      %v2493 = vadd.f32 %v2469, %v2480
      %v2494 = vadd.f32 %v2470, %v2484
      %v2495 = vadd.f32 %v2471, %v2484
      %v2496 = vadd.f32 %v2472, %v2488
      %v2497 = vadd.f32 %v2473, %v2488
      %v2498 = vxor.u32 %v2490, 2147483648
      %v2499 = vxor.u32 %v2491, 2147483648
      %v2500 = vxor.u32 %v2492, 2147483648
      %v2501 = vxor.u32 %v2493, 2147483648
      %v2502 = vxor.u32 %v2494, 2147483648
      %v2503 = vxor.u32 %v2495, 2147483648
      %v2504 = vxor.u32 %v2496, 2147483648
      %v2505 = vxor.u32 %v2497, 2147483648
      %v2506 = vmul.f32 %v2498, 1.442695
      %v2507 = vpow.pop %v2506
      %v2508 = vmul.f32 %v2499, 1.442695
      %v2509 = vpow.pop %v2508
      %v2510 = vmul.f32 %v2500, 1.442695
      %v2511 = vpow.pop %v2510
      %v2512 = vmul.f32 %v2501, 1.442695
      %v2513 = vpow.pop %v2512
      %v2514 = vmul.f32 %v2502, 1.442695
      %v2515 = vpow.pop %v2514
      %v2516 = vmul.f32 %v2503, 1.442695
      %v2517 = vpow.pop %v2516
      %v2518 = vmul.f32 %v2504, 1.442695
      %v2519 = vpow.pop %v2518
      %v2520 = vmul.f32 %v2505, 1.442695
      %v2521 = vpow.pop %v2520
      %v2522 = vadd.f32 %v2507, 1.0
      %v2523 = vadd.f32 %v2509, 1.0
      %v2524 = vadd.f32 %v2511, 1.0
      %v2525 = vadd.f32 %v2513, 1.0
      %v2526 = vadd.f32 %v2515, 1.0
      %v2527 = vadd.f32 %v2517, 1.0
      %v2528 = vadd.f32 %v2519, 1.0
      %v2529 = vadd.f32 %v2521, 1.0
      %v2530 = vrcp.pop %v2522
      %v2531 = vmul.f32 1.0, %v2530
      %v2532 = vrcp.pop %v2523
      %v2533 = vmul.f32 1.0, %v2532
      %v2534 = vrcp.pop %v2524
      %v2535 = vmul.f32 1.0, %v2534
      %v2536 = vrcp.pop %v2525
      %v2537 = vmul.f32 1.0, %v2536
      %v2538 = vrcp.pop %v2526
      %v2539 = vmul.f32 1.0, %v2538
      %v2540 = vrcp.pop %v2527
      %v2541 = vmul.f32 1.0, %v2540
      %v2542 = vrcp.pop %v2528
      %v2543 = vmul.f32 1.0, %v2542
      %v2544 = vrcp.pop %v2529
      %v2545 = vmul.f32 1.0, %v2544
      %v2546 = vmul.f32 %v2490, %v2531
      %v2547 = vmul.f32 %v2491, %v2533
      %v2548 = vmul.f32 %v2492, %v2535
      %v2549 = vmul.f32 %v2493, %v2537
      %v2550 = vmul.f32 %v2494, %v2539
      %v2551 = vmul.f32 %v2495, %v2541
      %v2552 = vmul.f32 %v2496, %v2543
      %v2553 = vmul.f32 %v2497, %v2545
      %v2554 = vld [vmem:[%s7] sm:$0xff]
      %v2555 = vld [vmem:[%s7 + $0x8] sm:$0xff]
      %v2556 = vld [vmem:[%s7 + $0x10] sm:$0xff]
      %v2557 = vld [vmem:[%s7 + $0x18] sm:$0xff]
      %2558 = vset.pattern.permute.xlu0 6
      %2559 = vperm.xlu0 %2558, %v2229
      %v2560 = vpop.permute.xlu0 %2559
      %2562 = vset.pattern.permute.xlu0 6
      %2563 = vperm.xlu0 %2562, %v2230
      %v2564 = vpop.permute.xlu0 %2563
      %2566 = vset.pattern.permute.xlu0 6
      %2567 = vperm.xlu0 %2566, %v2231
      %v2568 = vpop.permute.xlu0 %2567
      %2570 = vset.pattern.permute.xlu0 6
      %2571 = vperm.xlu0 %2570, %v2232
      %v2572 = vpop.permute.xlu0 %2571
      %vm2574 = vcmask 64512
      %v2576 = vsel %vm2574, %v2554, 0
      %v2579 = vsel %vm2574, %v2555, 0
      %v2582 = vsel %vm2574, %v2556, 0
      %v2585 = vsel %vm2574, %v2557, 0
      %2587 = vmatprep.subr.mxu0 %v327
      %2588 = vmatpush1.msra.mxu0 %v326
      %2589 = vmatprep.subr.mxu0 0.0
      %2590 = vmatpush1.msra.mxu0 0.0
      %2591 = vmatprep.subr.mxu0 0.0
      %2592 = vmatpush1.msra.mxu0 0.0
      %2593 = vmatprep.subr.mxu0 0.0
      %2594 = vmatpush1.msra.mxu0 0.0
      %2595 = vmatprep.subr.mxu0 0.0
      %2596 = vmatpush1.msra.mxu0 0.0
      %2597 = vmatprep.subr.mxu0 0.0
      %2598 = vmatpush1.msra.mxu0 0.0
      %2599 = vmatprep.subr.mxu0 0.0
      %2600 = vmatpush1.msra.mxu0 0.0
      %2601 = vmatprep.subr.mxu0 0.0
      %2602 = vmatpush1.msra.mxu0 0.0
      %2603 = vmatprep.subr.mxu0 0.0
      %2604 = vmatpush1.msra.mxu0 0.0
      %2605 = vmatprep.subr.mxu0 0.0
      %2606 = vmatpush1.msra.mxu0 0.0
      %2607 = vmatprep.subr.mxu0 0.0
      %2608 = vmatpush1.msra.mxu0 0.0
      %2609 = vmatprep.subr.mxu0 0.0
      %2610 = vmatpush1.msra.mxu0 0.0
      %2611 = vmatprep.subr.mxu0 0.0
      %2612 = vmatpush1.msra.mxu0 0.0
      %2613 = vmatprep.subr.mxu0 0.0
      %2614 = vmatpush1.msra.mxu0 0.0
      %2615 = vmatprep.subr.mxu0 0.0
      %2616 = vmatpush1.msra.mxu0 0.0
      %2617 = vmatprep.subr.mxu0 0.0
      %2618 = vmatpush1.msra.mxu0 0.0
      %2619 = vmatprep.subr.mxu0 0.0
      %2620 = vmatpush1.msra.mxu0 0.0
      %2621 = vmatprep.subr.mxu0 0.0
      %2622 = vmatpush1.msra.mxu0 0.0
      %2623 = vmatprep.subr.mxu0 0.0
      %2624 = vmatpush1.msra.mxu0 0.0
      %2625 = vmatprep.subr.mxu0 0.0
      %2626 = vmatpush1.msra.mxu0 0.0
      %2627 = vmatprep.subr.mxu0 0.0
      %2628 = vmatpush1.msra.mxu0 0.0
      %2629 = vmatprep.subr.mxu0 0.0
      %2630 = vmatpush1.msra.mxu0 0.0
      %2631 = vmatprep.subr.mxu0 0.0
      %2632 = vmatpush1.msra.mxu0 0.0
      %2633 = vmatprep.subr.mxu0 0.0
      %2634 = vmatpush1.msra.mxu0 0.0
      %2635 = vmatprep.subr.mxu0 0.0
      %2636 = vmatpush1.msra.mxu0 0.0
      %2637 = vmatprep.subr.mxu0 0.0
      %2638 = vmatpush1.msra.mxu0 0.0
      %2639 = vmatprep.subr.mxu0 0.0
      %2640 = vmatpush1.msra.mxu0 0.0
      %2641 = vmatprep.subr.mxu0 0.0
      %2642 = vmatpush1.msra.mxu0 0.0
      %2643 = vmatprep.subr.mxu0 0.0
      %2644 = vmatpush1.msra.mxu0 0.0
      %2645 = vmatprep.subr.mxu0 0.0
      %2646 = vmatpush1.msra.mxu0 0.0
      %2647 = vmatprep.subr.mxu0 0.0
      %2648 = vmatpush1.msra.mxu0 0.0
      %2649 = vmatprep.subr.mxu0 0.0
      %2650 = vmatpush1.msra.mxu0 0.0
      %2651 = vmatprep.mubr.f32.mxu0 0.0
      %2652 = vmatmul.mubr.f32.gmra.mrb[0].mxu0 %v2576
      %v2653 = vpop.f32.mrb[0].mxu0
      %v2654 = vadd.f32 %v2560, %v2653
      %v2655 = vpop.f32.mrb[0].mxu0
      %v2656 = vadd.f32 %v2560, %v2655
      %2657 = vmatprep.mubr.f32.mxu0 0.0
      %2658 = vmatmul.mubr.f32.gmra.mrb[0].mxu0 %v2579
      %v2659 = vpop.f32.mrb[0].mxu0
      %v2660 = vadd.f32 %v2564, %v2659
      %v2661 = vpop.f32.mrb[0].mxu0
      %v2662 = vadd.f32 %v2564, %v2661
      %2663 = vmatprep.mubr.f32.mxu0 0.0
      %2664 = vmatmul.mubr.f32.gmra.mrb[0].mxu0 %v2582
      %v2665 = vpop.f32.mrb[0].mxu0
      %v2666 = vadd.f32 %v2568, %v2665
      %v2667 = vpop.f32.mrb[0].mxu0
      %v2668 = vadd.f32 %v2568, %v2667
      %2669 = vmatprep.mubr.f32.mxu0 0.0
      %2670 = vmatmul.mubr.f32.gmra.mrb[0].mxu0 %v2585
      %v2671 = vpop.f32.mrb[0].mxu0
      %v2672 = vadd.f32 %v2572, %v2671
      %v2673 = vpop.f32.mrb[0].mxu0
      %v2674 = vadd.f32 %v2572, %v2673
      %2675 = vdwg.mxu0
      %v2676 = vadd.f32 %v2546, %v2654
      %v2677 = vadd.f32 %v2547, %v2656
      %v2678 = vadd.f32 %v2548, %v2660
      %v2679 = vadd.f32 %v2549, %v2662
      %v2680 = vadd.f32 %v2550, %v2666
      %v2681 = vadd.f32 %v2551, %v2668
      %v2682 = vadd.f32 %v2552, %v2672
      %v2683 = vadd.f32 %v2553, %v2674
      %2684 = vst [vmem:[%s325] sm:$0xff] %v2676
      %2685 = vst [vmem:[%s325 + $0x8] sm:$0xff] %v2677
      %2686 = vst [vmem:[%s325 + $0x10] sm:$0xff] %v2678
      %2687 = vst [vmem:[%s325 + $0x18] sm:$0xff] %v2679
      %2688 = vst [vmem:[%s325 + $0x20] sm:$0xff] %v2680
      %2689 = vst [vmem:[%s325 + $0x28] sm:$0xff] %v2681
      %2690 = vst [vmem:[%s325 + $0x30] sm:$0xff] %v2682
      %2691 = vst [vmem:[%s325 + $0x38] sm:$0xff] %v2683
      %p2692 = scmp.lt.s32.totalorder %s19, 1
      %s2693 = scalar_select %p2692, %s19, 1
      %s2694 = smul.addr %s2693, 8
      %s2695 = smul.addr %s2694, 8
      %s2696 = scalar_lea.vmem %s8, %s2695
      // Predicated region
      $region53: #{resnet_block_forward.1} parent=51 // pred_check
        %p2697 = pneg %p215
      $region54: #{resnet_block_forward.1} parent=51 // pred_check_branch
        %2699 = sbr.rel (%p2697) target = $region56
      $region55: #{resnet_block_forward.1} parent=51 // pred_region
        _
      $region56: #{resnet_block_forward.1} parent=51 // pred_fallthru
        _
    $region52: #{resnet_block_forward.1} parent=5 // pred_fallthru
      _
    %p2700 = scmp.le.s32.totalorder 2, %s14
    // Predicated region
    $region57: #{resnet_block_forward.1} parent=5 // pred_check
      %p2701 = pneg %p2700
    $region58: #{resnet_block_forward.1} parent=5 // pred_check_branch
      %2703 = sbr.rel (%p2701) target = $region60
    $region59: #{resnet_block_forward.1} parent=5 // pred_region
      %s2704 = ssub.s32 %s14, 2
      // Predicated region
      $region61: #{resnet_block_forward.1} parent=59 // pred_check
        %p2705 = pneg %p221
      $region62: #{resnet_block_forward.1} parent=59 // pred_check_branch
        %2707 = sbr.rel (%p2705) target = $region64
      $region63: #{resnet_block_forward.1} parent=59 // pred_region
        %p2708 = scmp.lt.s32.totalorder %s20, 1
        %s2709 = scalar_select %p2708, %s20, 1
        %s2710 = smul.addr %s2709, 8
        %s2711 = smul.addr %s2710, 8
        %s2712 = scalar_lea.vmem %s8, %s2711
      $region64: #{resnet_block_forward.1} parent=59 // pred_fallthru
        _
    $region60: #{resnet_block_forward.1} parent=5 // pred_fallthru
      _
  $region6: #{resnet_block_forward.1} parent=0 // loop_footer
    %s18 = sadd.s32 1, %s14
  $region7: #{resnet_block_forward.1} parent=0 // loop_footer_branch
    %13 = sbr.rel target = $region3
  $region8: #{resnet_block_forward.1} parent=0 // loop_exit
    _

</llo_original>
